<compile_context>
chip_gen: v7x
topology: tpu7x:2x2x1
jax: 0.10.0
libtpu: 0.0.40
codegen_flags: <defaults>
</compile_context>

<pallas_src>
import functools
import math
import types

import jax
import jax.numpy as jnp
from jax import lax
from jax.experimental import pallas as pl
from jax.experimental.pallas import tpu as pltpu

_VMEM_LIMIT = 32 * 1024 * 1024  # explicit scoped-VMEM budget (fits every TPU gen)


def _compiler_params():
    return pltpu.CompilerParams(
        dimension_semantics=("parallel",),
        vmem_limit_bytes=_VMEM_LIMIT,
    )


def _layernorm_f32(x, gamma, beta, eps):
    """Row-wise LayerNorm in f32 on in-kernel values."""
    mean = jnp.mean(x, axis=-1, keepdims=True)
    cen = x - mean
    var = jnp.mean(cen * cen, axis=-1, keepdims=True)
    return cen * lax.rsqrt(var + eps) * gamma + beta


# --------------------- Kernel 1: patch embed + pos add ---------------------- #

def _patch_embed_kernel(p_ref, w_ref, b_ref, pos_ref, o_ref):
    # p_ref: (1, NP, CPP) patches of one image; w: (CPP, D); pos: (1, NP, D).
    patches = p_ref[0].astype(w_ref.dtype)
    acc = jnp.dot(patches, w_ref[...], preferred_element_type=jnp.float32)
    # positional-embedding add fused into the matmul epilogue (free VPU filler).
    o_ref[0] = (acc + b_ref[...] + pos_ref[0]).astype(o_ref.dtype)


def patch_embedding(patches, w, b, pos_patch):
    B, NP, CPP = patches.shape
    D = w.shape[1]
    return pl.pallas_call(
        _patch_embed_kernel,
        grid=(B,),
        in_specs=[
            pl.BlockSpec((1, NP, CPP), lambda i: (i, 0, 0)),
            pl.BlockSpec((CPP, D), lambda i: (0, 0)),
            pl.BlockSpec((1, D), lambda i: (0, 0)),
            pl.BlockSpec((1, NP, D), lambda i: (0, 0, 0)),
        ],
        out_specs=pl.BlockSpec((1, NP, D), lambda i: (i, 0, 0)),
        out_shape=jax.ShapeDtypeStruct((B, NP, D), jnp.float32),
        compiler_params=_compiler_params(),
    )(patches, w, b, pos_patch)


# --------- Kernel 2: fused LN1 + QKV + attention + out_proj + residual ------- #

def _attn_block_kernel(x_ref, g_ref, bln_ref, wqkv_ref, bqkv_ref, wout_ref,
                       bout_ref, o_ref, *, num_heads, head_dim, eps):
    x = x_ref[0].astype(jnp.float32)                               # (S, D) f32
    xn = _layernorm_f32(x, g_ref[...], bln_ref[...], eps)

    cdt = wqkv_ref.dtype                                           # bf16 operands
    xn_c = xn.astype(cdt)
    scale = 1.0 / math.sqrt(head_dim)

    acc = jnp.zeros_like(x)                                        # (S, D) f32
    # Static unroll over heads; weights are pre-split per head so the kernel
    # never slices values along the lane dim.  (With D=32, Dh=8 the MXU tiles
    # are tiny regardless; at realistic widths a single fused QKV dot is used.)
    for h in range(num_heads):
        qh = jnp.dot(xn_c, wqkv_ref[0, h],
                     preferred_element_type=jnp.float32) + bqkv_ref[0, h]
        kh = jnp.dot(xn_c, wqkv_ref[1, h],
                     preferred_element_type=jnp.float32) + bqkv_ref[1, h]
        vh = jnp.dot(xn_c, wqkv_ref[2, h],
                     preferred_element_type=jnp.float32) + bqkv_ref[2, h]

        qh = (qh * scale).astype(cdt)
        kh = kh.astype(cdt)
        # Contract the last dims directly — no materialized k transpose.
        s = lax.dot_general(qh, kh, (((1,), (1,)), ((), ())),
                            preferred_element_type=jnp.float32)     # (S, S) f32
        s = s - jnp.max(s, axis=-1, keepdims=True)
        p = jnp.exp(s)
        p = p * pl.reciprocal(jnp.sum(p, axis=-1, keepdims=True), approx=True)
        oh = jnp.dot(p.astype(cdt), vh.astype(cdt),
                     preferred_element_type=jnp.float32)             # (S, Dh)
        # Fold this head's slice of out_proj: equivalent to concat(heads) @ Wout.
        acc = acc + jnp.dot(oh.astype(cdt), wout_ref[h],
                            preferred_element_type=jnp.float32)      # (S, D)

    # residual add in f32, fused into the epilogue.
    o_ref[0] = (x + acc + bout_ref[...]).astype(o_ref.dtype)


def attention_block(x, ln_g, ln_b, wqkv_heads, bqkv_heads, wout_heads, bout,
                    *, num_heads, eps=1e-5):
    B, S, D = x.shape
    head_dim = D // num_heads
    kernel = functools.partial(_attn_block_kernel, num_heads=num_heads,
                               head_dim=head_dim, eps=eps)
    return pl.pallas_call(
        kernel,
        grid=(B,),
        in_specs=[
            pl.BlockSpec((1, S, D), lambda i: (i, 0, 0)),
            pl.BlockSpec((1, D), lambda i: (0, 0)),
            pl.BlockSpec((1, D), lambda i: (0, 0)),
            pl.BlockSpec((3, num_heads, D, head_dim), lambda i: (0, 0, 0, 0)),
            pl.BlockSpec((3, num_heads, 1, head_dim), lambda i: (0, 0, 0, 0)),
            pl.BlockSpec((num_heads, head_dim, D), lambda i: (0, 0, 0)),
            pl.BlockSpec((1, D), lambda i: (0, 0)),
        ],
        out_specs=pl.BlockSpec((1, S, D), lambda i: (i, 0, 0)),
        out_shape=jax.ShapeDtypeStruct((B, S, D), jnp.float32),
        compiler_params=_compiler_params(),
    )(x, ln_g, ln_b, wqkv_heads, bqkv_heads, wout_heads, bout)


# ------------- Kernel 3: fused LN2 + ff1 + act + ff2 + residual -------------- #

def _ffn_block_kernel(x_ref, g_ref, bln_ref, w1_ref, b1_ref, w2_ref, b2_ref,
                      o_ref, *, eps, activation):
    x = x_ref[0].astype(jnp.float32)                               # (S, D) f32
    xn = _layernorm_f32(x, g_ref[...], bln_ref[...], eps)
    cdt = w1_ref.dtype
    # Hidden (S, dim_feedforward) stays resident in VMEM/vregs — no HBM trip.
    h = jnp.dot(xn.astype(cdt), w1_ref[...],
                preferred_element_type=jnp.float32) + b1_ref[...]
    if activation == "relu":
        h = jnp.maximum(h, 0.0)
    elif activation == "gelu":
        h = 0.5 * h * (1.0 + lax.erf(h * (1.0 / math.sqrt(2.0))))
    y = jnp.dot(h.astype(cdt), w2_ref[...],
                preferred_element_type=jnp.float32) + b2_ref[...]
    o_ref[0] = (x + y).astype(o_ref.dtype)                         # residual in f32


def ffn_block(x, ln_g, ln_b, w1, b1, w2, b2, *, activation, eps=1e-5):
    B, S, D = x.shape
    F = w1.shape[1]
    kernel = functools.partial(_ffn_block_kernel, eps=eps, activation=activation)
    return pl.pallas_call(
        kernel,
        grid=(B,),
        in_specs=[
            pl.BlockSpec((1, S, D), lambda i: (i, 0, 0)),
            pl.BlockSpec((1, D), lambda i: (0, 0)),
            pl.BlockSpec((1, D), lambda i: (0, 0)),
            pl.BlockSpec((D, F), lambda i: (0, 0)),
            pl.BlockSpec((1, F), lambda i: (0, 0)),
            pl.BlockSpec((F, D), lambda i: (0, 0)),
            pl.BlockSpec((1, D), lambda i: (0, 0)),
        ],
        out_specs=pl.BlockSpec((1, S, D), lambda i: (i, 0, 0)),
        out_shape=jax.ShapeDtypeStruct((B, S, D), jnp.float32),
        compiler_params=_compiler_params(),
    )(x, ln_g, ln_b, w1, b1, w2, b2)


# ------------------------------ ViT forward --------------------------------- #

def vit_forward(fp, x, *, patch_size, num_heads, activation, eps=1e-5):
    B, C, H, W = x.shape
    P = patch_size
    D = fp["patch_w"].shape[1]
    nH, nW = H // P, W // P
    NP = nH * nW

    # Conv2d(k=P, stride=P) == unfold-into-patches + matmul (layout glue in XLA).
    patches = (x.reshape(B, C, nH, P, nW, P)
                 .transpose(0, 2, 4, 1, 3, 5)
                 .reshape(B, NP, C * P * P))
    emb = patch_embedding(patches, fp["patch_w"], fp["patch_b"], fp["pos_patch"])

    # CLS token (+ its positional embedding).
    # TODO(synk): nn.Dropout is identity here (inference-mode / p=0).
    cls = jnp.broadcast_to(fp["cls_token"] + fp["pos_cls"], (B, 1, D))
    xcur = jnp.concatenate([cls, emb], axis=1)                      # (B, S, D) f32

    # TransformerEncoder (norm_first=True, batch_first=True): two fused
    # pallas_calls per layer, residuals folded into the kernel epilogues.
    for layer in fp["layers"]:
        xcur = attention_block(xcur, layer["ln1_g"], layer["ln1_b"],
                               layer["wqkv"], layer["bqkv"],
                               layer["wout"], layer["bout"],
                               num_heads=num_heads, eps=eps)
        xcur = ffn_block(xcur, layer["ln2_g"], layer["ln2_b"],
                         layer["w1"], layer["b1"], layer["w2"], layer["b2"],
                         activation=activation, eps=eps)

    # Tiny MLP head on the CLS token: kept in plain JAX/XLA (lane width << 128).
    cls_out = xcur[:, 0, :].astype(jnp.float32)
    mean = jnp.mean(cls_out, axis=-1, keepdims=True)
    cen = cls_out - mean
    var = jnp.mean(cen * cen, axis=-1, keepdims=True)
    normed = cen * lax.rsqrt(var + eps) * fp["head_ln_g"] + fp["head_ln_b"]
    return normed @ fp["head_w"].T + fp["head_b"]


def face_encoder_forward(fp, x, *, patch_size, num_heads, activation, idx):
    # TODO(synk): the reference accesses `outputs.last_hidden_state`, which does
    # not exist on the tensor returned by this ViT; we slice the ViT output
    # feature vector directly (the intended parameter split).
    feat = vit_forward(fp, x, patch_size=patch_size, num_heads=num_heads,
                       activation=activation)
    shape_idx, exp_idx, color_idx, camera_idx, light_idx = idx
    return (feat[:, :shape_idx],
            feat[:, shape_idx:exp_idx],
            feat[:, exp_idx:color_idx],
            feat[:, color_idx:camera_idx],
            feat[:, camera_idx:light_idx])


# ------------------------------ Param handling ------------------------------ #

def _dense_init(key, shape, scale=0.05):
    return scale * jax.random.normal(key, shape, dtype=jnp.float32)


def init_params(key, *, in_channels, patch_size, embed_dim, num_patches,
                num_heads, num_encoders, num_classes, dim_feedforward):
    """PyTorch-layout parameters (same shapes as the nn.Module)."""
    C, P, D = in_channels, patch_size, embed_dim
    ks = iter(jax.random.split(key, 6 + 4 * num_encoders))
    params = {
        "patch_w": _dense_init(next(ks), (D, C, P, P)),            # Conv2d weight
        "patch_b": _dense_init(next(ks), (D,)),
        "cls_token": jax.random.normal(next(ks), (1, 1, D), jnp.float32),
        "pos_embed": jax.random.normal(next(ks), (1, num_patches + 1, D), jnp.float32),
        "head_ln_g": jnp.ones((D,), jnp.float32),
        "head_ln_b": jnp.zeros((D,), jnp.float32),
        "head_w": _dense_init(next(ks), (num_classes, D)),
        "head_b": jnp.zeros((num_classes,), jnp.float32),
        "layers": [],
    }
    for _ in range(num_encoders):
        params["layers"].append({
            "ln1_g": jnp.ones((D,), jnp.float32), "ln1_b": jnp.zeros((D,), jnp.float32),
            "in_proj_w": _dense_init(next(ks), (3 * D, D)),
            "in_proj_b": jnp.zeros((3 * D,), jnp.float32),
            "out_proj_w": _dense_init(next(ks), (D, D)),
            "out_proj_b": jnp.zeros((D,), jnp.float32),
            "ln2_g": jnp.ones((D,), jnp.float32), "ln2_b": jnp.zeros((D,), jnp.float32),
            "ff1_w": _dense_init(next(ks), (dim_feedforward, D)),
            "ff1_b": jnp.zeros((dim_feedforward,), jnp.float32),
            "ff2_w": _dense_init(next(ks), (D, dim_feedforward)),
            "ff2_b": jnp.zeros((D,), jnp.float32),
        })
    return params


def prepare_params(params, *, num_heads, compute_dtype=jnp.bfloat16):
    """One-time re-layout: pre-transpose weights, pre-split QKV/out-proj per head,
    cast MXU operands to compute_dtype (bf16); biases / LN params stay f32."""
    D = params["patch_w"].shape[0]
    CPP = params["patch_w"].size // D
    Dh = D // num_heads
    fp = {
        "patch_w": params["patch_w"].reshape(D, CPP).T.astype(compute_dtype),
        "patch_b": params["patch_b"].reshape(1, D).astype(jnp.float32),
        "cls_token": params["cls_token"].astype(jnp.float32),           # (1,1,D)
        "pos_cls": params["pos_embed"][:, :1, :].astype(jnp.float32),   # (1,1,D)
        "pos_patch": params["pos_embed"][:, 1:, :].astype(jnp.float32), # (1,NP,D)
        "head_ln_g": params["head_ln_g"], "head_ln_b": params["head_ln_b"],
        "head_w": params["head_w"], "head_b": params["head_b"],
        "layers": [],
    }
    for layer in params["layers"]:
        wqkv = layer["in_proj_w"].T                                  # (D, 3D)
        wqkv_heads = (wqkv.reshape(D, 3, num_heads, Dh)
                          .transpose(1, 2, 0, 3)                     # (3, H, D, Dh)
                          .astype(compute_dtype))
        bqkv_heads = layer["in_proj_b"].reshape(3, num_heads, 1, Dh).astype(jnp.float32)
        wout_heads = (layer["out_proj_w"].T.reshape(num_heads, Dh, D)
                                            .astype(compute_dtype))  # (H, Dh, D)
        fp["layers"].append({
            "ln1_g": layer["ln1_g"].reshape(1, D), "ln1_b": layer["ln1_b"].reshape(1, D),
            "wqkv": wqkv_heads, "bqkv": bqkv_heads,
            "wout": wout_heads,
            "bout": layer["out_proj_b"].reshape(1, D).astype(jnp.float32),
            "ln2_g": layer["ln2_g"].reshape(1, D), "ln2_b": layer["ln2_b"].reshape(1, D),
            "w1": layer["ff1_w"].T.astype(compute_dtype),            # (D, F)
            "b1": layer["ff1_b"].reshape(1, -1).astype(jnp.float32),
            "w2": layer["ff2_w"].T.astype(compute_dtype),            # (F, D)
            "b2": layer["ff2_b"].reshape(1, D).astype(jnp.float32),
        })
    return fp


# --------------------------------- main -------------------------------------- #

if __name__ == "__main__":
    # Small configuration consistent with the module.
    B, C, HW = 2, 3, 16
    patch_size = 4
    embed_dim = 32
    num_patches = (HW // patch_size) ** 2       # 16 -> seq len 17 with CLS token
    num_heads = 4
    num_encoders = 2
    dim_feedforward = 2048                      # nn.TransformerEncoderLayer default
    dropout = 0.0                               # inference: dropout == identity
    activation = "relu"                         # PyTorch default

    # FaceEncoder `obj` split dims.
    obj = types.SimpleNamespace(shape_dim=10, exp_dim=10, color_dim=10)
    shape_idx = obj.shape_dim
    exp_idx = shape_idx + obj.exp_dim
    color_idx = exp_idx + obj.color_dim
    camera_idx = color_idx + 6
    light_idx = camera_idx + 27
    num_classes = light_idx                     # 63 output features

    key = jax.random.PRNGKey(0)
    k_params, k_x = jax.random.split(key)
    params = init_params(
        k_params,
        in_channels=C, patch_size=patch_size, embed_dim=embed_dim,
        num_patches=num_patches, num_heads=num_heads,
        num_encoders=num_encoders, num_classes=num_classes,
        dim_feedforward=dim_feedforward,
    )
    fwd_params = prepare_params(params, num_heads=num_heads,
                                compute_dtype=jnp.bfloat16)
    x = jax.random.normal(k_x, (B, C, HW, HW), jnp.float32)

    fwd = jax.jit(functools.partial(
        face_encoder_forward, patch_size=patch_size, num_heads=num_heads,
        activation=activation,
        idx=(shape_idx, exp_idx, color_idx, camera_idx, light_idx)))
    outs = fwd(fwd_params, x)
    outs = jax.block_until_ready(outs)

    shape_p, exp_p, color_p, camera_p, sh_p = outs
    assert shape_p.shape == (B, obj.shape_dim)
    assert exp_p.shape == (B, obj.exp_dim)
    assert color_p.shape == (B, obj.color_dim)
    assert camera_p.shape == (B, 6)
    assert sh_p.shape == (B, 27)
    assert all(bool(jnp.all(jnp.isfinite(o))) for o in outs)
    print("KERNEL_OK")
</pallas_src>

<mosaic_0001>
module attributes {stable_mosaic.version = 11 : i64} {
  func.func @_patch_embed_kernel(%arg0: i32, %arg1: memref<1x16x48xf32, #tpu.memory_space<vmem>>, %arg2: memref<48x32xbf16, #tpu.memory_space<vmem>>, %arg3: memref<1x32xf32, #tpu.memory_space<vmem>>, %arg4: memref<1x16x32xf32, #tpu.memory_space<vmem>>, %arg5: memref<1x16x32xf32, #tpu.memory_space<vmem>>) attributes {dimension_semantics = [#tpu.dimension_semantics<parallel>], iteration_bounds = array<i64: 2>, scalar_prefetch = 0 : i64, scratch_operands = 0 : i64, tpu.core_type = #tpu.core_type<tc>, window_params = [{transform_indices = @transform_0, window_bounds = array<i64: 1, 16, 48>}, {pipeline_mode = #tpu.pipeline_mode<synchronous>, transform_indices = @transform_1, window_bounds = array<i64: 48, 32>}, {pipeline_mode = #tpu.pipeline_mode<synchronous>, transform_indices = @transform_2, window_bounds = array<i64: 1, 32>}, {pipeline_mode = #tpu.pipeline_mode<synchronous>, transform_indices = @transform_3, window_bounds = array<i64: 1, 16, 32>}, {transform_indices = @transform_4, window_bounds = array<i64: 1, 16, 32>}]} {
    %c0 = arith.constant 0 : index
    %c0_0 = arith.constant 0 : index
    %c0_1 = arith.constant 0 : index
    %0 = vector.load %arg1[%c0, %c0_0, %c0_1] : memref<1x16x48xf32, #tpu.memory_space<vmem>>, vector<1x16x48xf32>
    %1 = vector.shape_cast %0 : vector<1x16x48xf32> to vector<16x48xf32>
    %2 = arith.truncf %1 : vector<16x48xf32> to vector<16x48xbf16>
    %c0_2 = arith.constant 0 : index
    %c0_3 = arith.constant 0 : index
    %3 = vector.load %arg2[%c0_2, %c0_3] : memref<48x32xbf16, #tpu.memory_space<vmem>>, vector<48x32xbf16>
    %cst = arith.constant dense<0.000000e+00> : vector<16x32xf32>
    %4 = tpu.matmul %2, %3, %cst {dimension_numbers = #tpu.dot_dimension_numbers<[1], [0], [0], [1], [0, 0, 1, 1], [], []>} : vector<16x48xbf16>, vector<48x32xbf16>, vector<16x32xf32> -> vector<16x32xf32>
    %c0_4 = arith.constant 0 : index
    %c0_5 = arith.constant 0 : index
    %5 = vector.load %arg3[%c0_4, %c0_5] : memref<1x32xf32, #tpu.memory_space<vmem>>, vector<1x32xf32>
    %6 = vector.broadcast %5 : vector<1x32xf32> to vector<16x32xf32>
    %7 = arith.addf %4, %6 : vector<16x32xf32>
    %c0_6 = arith.constant 0 : index
    %c0_7 = arith.constant 0 : index
    %c0_8 = arith.constant 0 : index
    %8 = vector.load %arg4[%c0_6, %c0_7, %c0_8] : memref<1x16x32xf32, #tpu.memory_space<vmem>>, vector<1x16x32xf32>
    %9 = vector.shape_cast %8 : vector<1x16x32xf32> to vector<16x32xf32>
    %10 = arith.addf %7, %9 : vector<16x32xf32>
    %c0_9 = arith.constant 0 : index
    %c0_10 = arith.constant 0 : index
    %c0_11 = arith.constant 0 : index
    %11 = vector.load %arg5[%c0_9, %c0_10, %c0_11] : memref<1x16x32xf32, #tpu.memory_space<vmem>>, vector<1x16x32xf32>
    %12 = vector.shape_cast %11 : vector<1x16x32xf32> to vector<16x32xf32>
    %13 = vector.shape_cast %10 : vector<16x32xf32> to vector<1x16x32xf32>
    tpu.vector_store %arg5[%c0_9, %c0_10, %c0_11], %13 {strides = array<i32>} : memref<1x16x32xf32, #tpu.memory_space<vmem>>, vector<1x16x32xf32>,
    return
  }
  func.func @transform_0(%arg0: i32) -> (i32, i32, i32) {
    %c0_i32 = arith.constant 0 : i32
    %c0_i32_0 = arith.constant 0 : i32
    %c0_i32_1 = arith.constant 0 : i32
    return %arg0, %c0_i32, %c0_i32_0 : i32, i32, i32
  }
  func.func @transform_1(%arg0: i32) -> (i32, i32) {
    %c0_i32 = arith.constant 0 : i32
    %c0_i32_0 = arith.constant 0 : i32
    %c0_i32_1 = arith.constant 0 : i32
    return %c0_i32, %c0_i32_0 : i32, i32
  }
  func.func @transform_2(%arg0: i32) -> (i32, i32) {
    %c0_i32 = arith.constant 0 : i32
    %c0_i32_0 = arith.constant 0 : i32
    %c0_i32_1 = arith.constant 0 : i32
    return %c0_i32, %c0_i32_0 : i32, i32
  }
  func.func @transform_3(%arg0: i32) -> (i32, i32, i32) {
    %c0_i32 = arith.constant 0 : i32
    %c0_i32_0 = arith.constant 0 : i32
    %c0_i32_1 = arith.constant 0 : i32
    %c0_i32_2 = arith.constant 0 : i32
    return %c0_i32, %c0_i32_0, %c0_i32_1 : i32, i32, i32
  }
  func.func @transform_4(%arg0: i32) -> (i32, i32, i32) {
    %c0_i32 = arith.constant 0 : i32
    %c0_i32_0 = arith.constant 0 : i32
    %c0_i32_1 = arith.constant 0 : i32
    return %arg0, %c0_i32, %c0_i32_0 : i32, i32, i32
  }
}

module attributes {stable_mosaic.version = 11 : i64} {
  func.func @_ffn_block_kernel(%arg0: i32, %arg1: memref<1x17x32xf32, #tpu.memory_space<vmem>>, %arg2: memref<1x32xf32, #tpu.memory_space<vmem>>, %arg3: memref<1x32xf32, #tpu.memory_space<vmem>>, %arg4: memref<32x2048xbf16, #tpu.memory_space<vmem>>, %arg5: memref<1x2048xf32, #tpu.memory_space<vmem>>, %arg6: memref<2048x32xbf16, #tpu.memory_space<vmem>>, %arg7: memref<1x32xf32, #tpu.memory_space<vmem>>, %arg8: memref<1x17x32xf32, #tpu.memory_space<vmem>>) attributes {dimension_semantics = [#tpu.dimension_semantics<parallel>], iteration_bounds = array<i64: 2>, scalar_prefetch = 0 : i64, scratch_operands = 0 : i64, tpu.core_type = #tpu.core_type<tc>, window_params = [{transform_indices = @transform_0, window_bounds = array<i64: 1, 17, 32>}, {pipeline_mode = #tpu.pipeline_mode<synchronous>, transform_indices = @transform_1, window_bounds = array<i64: 1, 32>}, {pipeline_mode = #tpu.pipeline_mode<synchronous>, transform_indices = @transform_2, window_bounds = array<i64: 1, 32>}, {pipeline_mode = #tpu.pipeline_mode<synchronous>, transform_indices = @transform_3, window_bounds = array<i64: 32, 2048>}, {pipeline_mode = #tpu.pipeline_mode<synchronous>, transform_indices = @transform_4, window_bounds = array<i64: 1, 2048>}, {pipeline_mode = #tpu.pipeline_mode<synchronous>, transform_indices = @transform_5, window_bounds = array<i64: 2048, 32>}, {pipeline_mode = #tpu.pipeline_mode<synchronous>, transform_indices = @transform_6, window_bounds = array<i64: 1, 32>}, {transform_indices = @transform_7, window_bounds = array<i64: 1, 17, 32>}]} {
    %c0 = arith.constant 0 : index
    %c0_0 = arith.constant 0 : index
    %c0_1 = arith.constant 0 : index
    %0 = vector.load %arg1[%c0, %c0_0, %c0_1] : memref<1x17x32xf32, #tpu.memory_space<vmem>>, vector<1x17x32xf32>
    %1 = vector.shape_cast %0 : vector<1x17x32xf32> to vector<17x32xf32>
    %c0_2 = arith.constant 0 : index
    %c0_3 = arith.constant 0 : index
    %2 = vector.load %arg2[%c0_2, %c0_3] : memref<1x32xf32, #tpu.memory_space<vmem>>, vector<1x32xf32>
    %c0_4 = arith.constant 0 : index
    %c0_5 = arith.constant 0 : index
    %3 = vector.load %arg3[%c0_4, %c0_5] : memref<1x32xf32, #tpu.memory_space<vmem>>, vector<1x32xf32>
    %cst = arith.constant dense<0.000000e+00> : vector<17xf32>
    %4 = vector.multi_reduction <add>, %1, %cst [1] : vector<17x32xf32> to vector<17xf32>
    %5 = vector.shape_cast %4 : vector<17xf32> to vector<17x1xf32>
    %cst_6 = arith.constant 3.200000e+01 : f32
    %6 = vector.broadcast %cst_6 : f32 to vector<17x1xf32>
    %7 = arith.divf %5, %6 : vector<17x1xf32>
    %8 = vector.broadcast %7 : vector<17x1xf32> to vector<17x32xf32>
    %9 = arith.subf %1, %8 : vector<17x32xf32>
    %10 = arith.mulf %9, %9 : vector<17x32xf32>
    %cst_7 = arith.constant dense<0.000000e+00> : vector<17xf32>
    %11 = vector.multi_reduction <add>, %10, %cst_7 [1] : vector<17x32xf32> to vector<17xf32>
    %12 = vector.shape_cast %11 : vector<17xf32> to vector<17x1xf32>
    %cst_8 = arith.constant 3.200000e+01 : f32
    %13 = vector.broadcast %cst_8 : f32 to vector<17x1xf32>
    %14 = arith.divf %12, %13 : vector<17x1xf32>
    %cst_9 = arith.constant 9.99999974E-6 : f32
    %15 = vector.broadcast %cst_9 : f32 to vector<17x1xf32>
    %16 = arith.addf %14, %15 : vector<17x1xf32>
    %17 = math.rsqrt %16 : vector<17x1xf32>
    %18 = vector.broadcast %17 : vector<17x1xf32> to vector<17x32xf32>
    %19 = arith.mulf %9, %18 : vector<17x32xf32>
    %20 = vector.broadcast %2 : vector<1x32xf32> to vector<17x32xf32>
    %21 = arith.mulf %19, %20 : vector<17x32xf32>
    %22 = vector.broadcast %3 : vector<1x32xf32> to vector<17x32xf32>
    %23 = arith.addf %21, %22 : vector<17x32xf32>
    %24 = arith.truncf %23 : vector<17x32xf32> to vector<17x32xbf16>
    %c0_10 = arith.constant 0 : index
    %c0_11 = arith.constant 0 : index
    %25 = vector.load %arg4[%c0_10, %c0_11] : memref<32x2048xbf16, #tpu.memory_space<vmem>>, vector<32x2048xbf16>
    %cst_12 = arith.constant dense<0.000000e+00> : vector<17x2048xf32>
    %26 = tpu.matmul %24, %25, %cst_12 {dimension_numbers = #tpu.dot_dimension_numbers<[1], [0], [0], [1], [0, 0, 1, 1], [], []>} : vector<17x32xbf16>, vector<32x2048xbf16>, vector<17x2048xf32> -> vector<17x2048xf32>
    %c0_13 = arith.constant 0 : index
    %c0_14 = arith.constant 0 : index
    %27 = vector.load %arg5[%c0_13, %c0_14] : memref<1x2048xf32, #tpu.memory_space<vmem>>, vector<1x2048xf32>
    %28 = vector.broadcast %27 : vector<1x2048xf32> to vector<17x2048xf32>
    %29 = arith.addf %26, %28 : vector<17x2048xf32>
    %cst_15 = arith.constant 0.000000e+00 : f32
    %30 = vector.broadcast %cst_15 : f32 to vector<17x2048xf32>
    %31 = arith.maximumf %29, %30 : vector<17x2048xf32>
    %32 = arith.truncf %31 : vector<17x2048xf32> to vector<17x2048xbf16>
    %c0_16 = arith.constant 0 : index
    %c0_17 = arith.constant 0 : index
    %33 = vector.load %arg6[%c0_16, %c0_17] : memref<2048x32xbf16, #tpu.memory_space<vmem>>, vector<2048x32xbf16>
    %cst_18 = arith.constant dense<0.000000e+00> : vector<17x32xf32>
    %34 = tpu.matmul %32, %33, %cst_18 {dimension_numbers = #tpu.dot_dimension_numbers<[1], [0], [0], [1], [0, 0, 1, 1], [], []>} : vector<17x2048xbf16>, vector<2048x32xbf16>, vector<17x32xf32> -> vector<17x32xf32>
    %c0_19 = arith.constant 0 : index
    %c0_20 = arith.constant 0 : index
    %35 = vector.load %arg7[%c0_19, %c0_20] : memref<1x32xf32, #tpu.memory_space<vmem>>, vector<1x32xf32>
    %36 = vector.broadcast %35 : vector<1x32xf32> to vector<17x32xf32>
    %37 = arith.addf %34, %36 : vector<17x32xf32>
    %38 = arith.addf %1, %37 : vector<17x32xf32>
    %c0_21 = arith.constant 0 : index
    %c0_22 = arith.constant 0 : index
    %c0_23 = arith.constant 0 : index
    %39 = vector.load %arg8[%c0_21, %c0_22, %c0_23] : memref<1x17x32xf32, #tpu.memory_space<vmem>>, vector<1x17x32xf32>
    %40 = vector.shape_cast %39 : vector<1x17x32xf32> to vector<17x32xf32>
    %41 = vector.shape_cast %38 : vector<17x32xf32> to vector<1x17x32xf32>
    tpu.vector_store %arg8[%c0_21, %c0_22, %c0_23], %41 {strides = array<i32>} : memref<1x17x32xf32, #tpu.memory_space<vmem>>, vector<1x17x32xf32>,
    return
  }
  func.func @transform_0(%arg0: i32) -> (i32, i32, i32) {
    %c0_i32 = arith.constant 0 : i32
    %c0_i32_0 = arith.constant 0 : i32
    %c0_i32_1 = arith.constant 0 : i32
    return %arg0, %c0_i32, %c0_i32_0 : i32, i32, i32
  }
  func.func @transform_1(%arg0: i32) -> (i32, i32) {
    %c0_i32 = arith.constant 0 : i32
    %c0_i32_0 = arith.constant 0 : i32
    %c0_i32_1 = arith.constant 0 : i32
    return %c0_i32, %c0_i32_0 : i32, i32
  }
  func.func @transform_2(%arg0: i32) -> (i32, i32) {
    %c0_i32 = arith.constant 0 : i32
    %c0_i32_0 = arith.constant 0 : i32
    %c0_i32_1 = arith.constant 0 : i32
    return %c0_i32, %c0_i32_0 : i32, i32
  }
  func.func @transform_3(%arg0: i32) -> (i32, i32) {
    %c0_i32 = arith.constant 0 : i32
    %c0_i32_0 = arith.constant 0 : i32
    %c0_i32_1 = arith.constant 0 : i32
    return %c0_i32, %c0_i32_0 : i32, i32
  }
  func.func @transform_4(%arg0: i32) -> (i32, i32) {
    %c0_i32 = arith.constant 0 : i32
    %c0_i32_0 = arith.constant 0 : i32
    %c0_i32_1 = arith.constant 0 : i32
    return %c0_i32, %c0_i32_0 : i32, i32
  }
  func.func @transform_5(%arg0: i32) -> (i32, i32) {
    %c0_i32 = arith.constant 0 : i32
    %c0_i32_0 = arith.constant 0 : i32
    %c0_i32_1 = arith.constant 0 : i32
    return %c0_i32, %c0_i32_0 : i32, i32
  }
  func.func @transform_6(%arg0: i32) -> (i32, i32) {
    %c0_i32 = arith.constant 0 : i32
    %c0_i32_0 = arith.constant 0 : i32
    %c0_i32_1 = arith.constant 0 : i32
    return %c0_i32, %c0_i32_0 : i32, i32
  }
  func.func @transform_7(%arg0: i32) -> (i32, i32, i32) {
    %c0_i32 = arith.constant 0 : i32
    %c0_i32_0 = arith.constant 0 : i32
    %c0_i32_1 = arith.constant 0 : i32
    return %arg0, %c0_i32, %c0_i32_0 : i32, i32, i32
  }
}

module attributes {stable_mosaic.version = 11 : i64} {
  func.func @_attn_block_kernel(%arg0: i32, %arg1: memref<1x17x32xf32, #tpu.memory_space<vmem>>, %arg2: memref<1x32xf32, #tpu.memory_space<vmem>>, %arg3: memref<1x32xf32, #tpu.memory_space<vmem>>, %arg4: memref<3x4x32x8xbf16, #tpu.memory_space<vmem>>, %arg5: memref<3x4x1x8xf32, #tpu.memory_space<vmem>>, %arg6: memref<4x8x32xbf16, #tpu.memory_space<vmem>>, %arg7: memref<1x32xf32, #tpu.memory_space<vmem>>, %arg8: memref<1x17x32xf32, #tpu.memory_space<vmem>>) attributes {dimension_semantics = [#tpu.dimension_semantics<parallel>], iteration_bounds = array<i64: 2>, scalar_prefetch = 0 : i64, scratch_operands = 0 : i64, tpu.core_type = #tpu.core_type<tc>, window_params = [{transform_indices = @transform_0, window_bounds = array<i64: 1, 17, 32>}, {pipeline_mode = #tpu.pipeline_mode<synchronous>, transform_indices = @transform_1, window_bounds = array<i64: 1, 32>}, {pipeline_mode = #tpu.pipeline_mode<synchronous>, transform_indices = @transform_2, window_bounds = array<i64: 1, 32>}, {pipeline_mode = #tpu.pipeline_mode<synchronous>, transform_indices = @transform_3, window_bounds = array<i64: 3, 4, 32, 8>}, {pipeline_mode = #tpu.pipeline_mode<synchronous>, transform_indices = @transform_4, window_bounds = array<i64: 3, 4, 1, 8>}, {pipeline_mode = #tpu.pipeline_mode<synchronous>, transform_indices = @transform_5, window_bounds = array<i64: 4, 8, 32>}, {pipeline_mode = #tpu.pipeline_mode<synchronous>, transform_indices = @transform_6, window_bounds = array<i64: 1, 32>}, {transform_indices = @transform_7, window_bounds = array<i64: 1, 17, 32>}]} {
    %c0 = arith.constant 0 : index
    %c0_0 = arith.constant 0 : index
    %c0_1 = arith.constant 0 : index
    %0 = vector.load %arg1[%c0, %c0_0, %c0_1] : memref<1x17x32xf32, #tpu.memory_space<vmem>>, vector<1x17x32xf32>
    %1 = vector.shape_cast %0 : vector<1x17x32xf32> to vector<17x32xf32>
    %c0_2 = arith.constant 0 : index
    %c0_3 = arith.constant 0 : index
    %2 = vector.load %arg2[%c0_2, %c0_3] : memref<1x32xf32, #tpu.memory_space<vmem>>, vector<1x32xf32>
    %c0_4 = arith.constant 0 : index
    %c0_5 = arith.constant 0 : index
    %3 = vector.load %arg3[%c0_4, %c0_5] : memref<1x32xf32, #tpu.memory_space<vmem>>, vector<1x32xf32>
    %cst = arith.constant dense<0.000000e+00> : vector<17xf32>
    %4 = vector.multi_reduction <add>, %1, %cst [1] : vector<17x32xf32> to vector<17xf32>
    %5 = vector.shape_cast %4 : vector<17xf32> to vector<17x1xf32>
    %cst_6 = arith.constant 3.200000e+01 : f32
    %6 = vector.broadcast %cst_6 : f32 to vector<17x1xf32>
    %7 = arith.divf %5, %6 : vector<17x1xf32>
    %8 = vector.broadcast %7 : vector<17x1xf32> to vector<17x32xf32>
    %9 = arith.subf %1, %8 : vector<17x32xf32>
    %10 = arith.mulf %9, %9 : vector<17x32xf32>
    %cst_7 = arith.constant dense<0.000000e+00> : vector<17xf32>
    %11 = vector.multi_reduction <add>, %10, %cst_7 [1] : vector<17x32xf32> to vector<17xf32>
    %12 = vector.shape_cast %11 : vector<17xf32> to vector<17x1xf32>
    %cst_8 = arith.constant 3.200000e+01 : f32
    %13 = vector.broadcast %cst_8 : f32 to vector<17x1xf32>
    %14 = arith.divf %12, %13 : vector<17x1xf32>
    %cst_9 = arith.constant 9.99999974E-6 : f32
    %15 = vector.broadcast %cst_9 : f32 to vector<17x1xf32>
    %16 = arith.addf %14, %15 : vector<17x1xf32>
    %17 = math.rsqrt %16 : vector<17x1xf32>
    %18 = vector.broadcast %17 : vector<17x1xf32> to vector<17x32xf32>
    %19 = arith.mulf %9, %18 : vector<17x32xf32>
    %20 = vector.broadcast %2 : vector<1x32xf32> to vector<17x32xf32>
    %21 = arith.mulf %19, %20 : vector<17x32xf32>
    %22 = vector.broadcast %3 : vector<1x32xf32> to vector<17x32xf32>
    %23 = arith.addf %21, %22 : vector<17x32xf32>
    %24 = arith.truncf %23 : vector<17x32xf32> to vector<17x32xbf16>
    %cst_10 = arith.constant 0.000000e+00 : f32
    %25 = vector.broadcast %cst_10 : f32 to vector<17x32xf32>
    %c0_11 = arith.constant 0 : index
    %c0_12 = arith.constant 0 : index
    %c0_13 = arith.constant 0 : index
    %c0_14 = arith.constant 0 : index
    %26 = vector.load %arg4[%c0_11, %c0_12, %c0_13, %c0_14] : memref<3x4x32x8xbf16, #tpu.memory_space<vmem>>, vector<1x1x32x8xbf16>
    %27 = vector.shape_cast %26 : vector<1x1x32x8xbf16> to vector<32x8xbf16>
    %cst_15 = arith.constant dense<0.000000e+00> : vector<17x8xf32>
    %28 = tpu.matmul %24, %27, %cst_15 {dimension_numbers = #tpu.dot_dimension_numbers<[1], [0], [0], [1], [0, 0, 1, 1], [], []>} : vector<17x32xbf16>, vector<32x8xbf16>, vector<17x8xf32> -> vector<17x8xf32>
    %c0_16 = arith.constant 0 : index
    %c0_17 = arith.constant 0 : index
    %c0_18 = arith.constant 0 : index
    %c0_19 = arith.constant 0 : index
    %29 = vector.load %arg5[%c0_16, %c0_17, %c0_18, %c0_19] : memref<3x4x1x8xf32, #tpu.memory_space<vmem>>, vector<1x1x1x8xf32>
    %30 = vector.shape_cast %29 : vector<1x1x1x8xf32> to vector<1x8xf32>
    %31 = vector.broadcast %30 : vector<1x8xf32> to vector<17x8xf32>
    %32 = arith.addf %28, %31 : vector<17x8xf32>
    %c1 = arith.constant 1 : index
    %c0_20 = arith.constant 0 : index
    %c0_21 = arith.constant 0 : index
    %c0_22 = arith.constant 0 : index
    %33 = vector.load %arg4[%c1, %c0_20, %c0_21, %c0_22] : memref<3x4x32x8xbf16, #tpu.memory_space<vmem>>, vector<1x1x32x8xbf16>
    %34 = vector.shape_cast %33 : vector<1x1x32x8xbf16> to vector<32x8xbf16>
    %cst_23 = arith.constant dense<0.000000e+00> : vector<17x8xf32>
    %35 = tpu.matmul %24, %34, %cst_23 {dimension_numbers = #tpu.dot_dimension_numbers<[1], [0], [0], [1], [0, 0, 1, 1], [], []>} : vector<17x32xbf16>, vector<32x8xbf16>, vector<17x8xf32> -> vector<17x8xf32>
    %c1_24 = arith.constant 1 : index
    %c0_25 = arith.constant 0 : index
    %c0_26 = arith.constant 0 : index
    %c0_27 = arith.constant 0 : index
    %36 = vector.load %arg5[%c1_24, %c0_25, %c0_26, %c0_27] : memref<3x4x1x8xf32, #tpu.memory_space<vmem>>, vector<1x1x1x8xf32>
    %37 = vector.shape_cast %36 : vector<1x1x1x8xf32> to vector<1x8xf32>
    %38 = vector.broadcast %37 : vector<1x8xf32> to vector<17x8xf32>
    %39 = arith.addf %35, %38 : vector<17x8xf32>
    %c2 = arith.constant 2 : index
    %c0_28 = arith.constant 0 : index
    %c0_29 = arith.constant 0 : index
    %c0_30 = arith.constant 0 : index
    %40 = vector.load %arg4[%c2, %c0_28, %c0_29, %c0_30] : memref<3x4x32x8xbf16, #tpu.memory_space<vmem>>, vector<1x1x32x8xbf16>
    %41 = vector.shape_cast %40 : vector<1x1x32x8xbf16> to vector<32x8xbf16>
    %cst_31 = arith.constant dense<0.000000e+00> : vector<17x8xf32>
    %42 = tpu.matmul %24, %41, %cst_31 {dimension_numbers = #tpu.dot_dimension_numbers<[1], [0], [0], [1], [0, 0, 1, 1], [], []>} : vector<17x32xbf16>, vector<32x8xbf16>, vector<17x8xf32> -> vector<17x8xf32>
    %c2_32 = arith.constant 2 : index
    %c0_33 = arith.constant 0 : index
    %c0_34 = arith.constant 0 : index
    %c0_35 = arith.constant 0 : index
    %43 = vector.load %arg5[%c2_32, %c0_33, %c0_34, %c0_35] : memref<3x4x1x8xf32, #tpu.memory_space<vmem>>, vector<1x1x1x8xf32>
    %44 = vector.shape_cast %43 : vector<1x1x1x8xf32> to vector<1x8xf32>
    %45 = vector.broadcast %44 : vector<1x8xf32> to vector<17x8xf32>
    %46 = arith.addf %42, %45 : vector<17x8xf32>
    %cst_36 = arith.constant 0.353553385 : f32
    %47 = vector.broadcast %cst_36 : f32 to vector<17x8xf32>
    %48 = arith.mulf %32, %47 : vector<17x8xf32>
    %49 = arith.truncf %48 : vector<17x8xf32> to vector<17x8xbf16>
    %50 = arith.truncf %39 : vector<17x8xf32> to vector<17x8xbf16>
    %cst_37 = arith.constant dense<0.000000e+00> : vector<17x17xf32>
    %51 = tpu.matmul %49, %50, %cst_37 {dimension_numbers = #tpu.dot_dimension_numbers<[1], [1], [0], [0], [0, 0, 1, 0], [], []>} : vector<17x8xbf16>, vector<17x8xbf16>, vector<17x17xf32> -> vector<17x17xf32>
    %cst_38 = arith.constant dense<0xFF800000> : vector<17xf32>
    %52 = vector.multi_reduction <maximumf>, %51, %cst_38 [1] : vector<17x17xf32> to vector<17xf32>
    %53 = vector.shape_cast %52 : vector<17xf32> to vector<17x1xf32>
    %54 = vector.broadcast %53 : vector<17x1xf32> to vector<17x17xf32>
    %55 = arith.subf %51, %54 : vector<17x17xf32>
    %56 = math.exp %55 : vector<17x17xf32>
    %cst_39 = arith.constant dense<0.000000e+00> : vector<17xf32>
    %57 = vector.multi_reduction <add>, %56, %cst_39 [1] : vector<17x17xf32> to vector<17xf32>
    %58 = vector.shape_cast %57 : vector<17xf32> to vector<17x1xf32>
    %59 = tpu.reciprocal %58 {approx = true} : vector<17x1xf32> -> vector<17x1xf32>
    %60 = vector.broadcast %59 : vector<17x1xf32> to vector<17x17xf32>
    %61 = arith.mulf %56, %60 : vector<17x17xf32>
    %62 = arith.truncf %61 : vector<17x17xf32> to vector<17x17xbf16>
    %63 = arith.truncf %46 : vector<17x8xf32> to vector<17x8xbf16>
    %cst_40 = arith.constant dense<0.000000e+00> : vector<17x8xf32>
    %64 = tpu.matmul %62, %63, %cst_40 {dimension_numbers = #tpu.dot_dimension_numbers<[1], [0], [0], [1], [0, 0, 1, 1], [], []>} : vector<17x17xbf16>, vector<17x8xbf16>, vector<17x8xf32> -> vector<17x8xf32>
    %65 = arith.truncf %64 : vector<17x8xf32> to vector<17x8xbf16>
    %c0_41 = arith.constant 0 : index
    %c0_42 = arith.constant 0 : index
    %c0_43 = arith.constant 0 : index
    %66 = vector.load %arg6[%c0_41, %c0_42, %c0_43] : memref<4x8x32xbf16, #tpu.memory_space<vmem>>, vector<1x8x32xbf16>
    %67 = vector.shape_cast %66 : vector<1x8x32xbf16> to vector<8x32xbf16>
    %cst_44 = arith.constant dense<0.000000e+00> : vector<17x32xf32>
    %68 = tpu.matmul %65, %67, %cst_44 {dimension_numbers = #tpu.dot_dimension_numbers<[1], [0], [0], [1], [0, 0, 1, 1], [], []>} : vector<17x8xbf16>, vector<8x32xbf16>, vector<17x32xf32> -> vector<17x32xf32>
    %69 = arith.addf %25, %68 : vector<17x32xf32>
    %c0_45 = arith.constant 0 : index
    %c1_46 = arith.constant 1 : index
    %c0_47 = arith.constant 0 : index
    %c0_48 = arith.constant 0 : index
    %70 = vector.load %arg4[%c0_45, %c1_46, %c0_47, %c0_48] : memref<3x4x32x8xbf16, #tpu.memory_space<vmem>>, vector<1x1x32x8xbf16>
    %71 = vector.shape_cast %70 : vector<1x1x32x8xbf16> to vector<32x8xbf16>
    %cst_49 = arith.constant dense<0.000000e+00> : vector<17x8xf32>
    %72 = tpu.matmul %24, %71, %cst_49 {dimension_numbers = #tpu.dot_dimension_numbers<[1], [0], [0], [1], [0, 0, 1, 1], [], []>} : vector<17x32xbf16>, vector<32x8xbf16>, vector<17x8xf32> -> vector<17x8xf32>
    %c0_50 = arith.constant 0 : index
    %c1_51 = arith.constant 1 : index
    %c0_52 = arith.constant 0 : index
    %c0_53 = arith.constant 0 : index
    %73 = vector.load %arg5[%c0_50, %c1_51, %c0_52, %c0_53] : memref<3x4x1x8xf32, #tpu.memory_space<vmem>>, vector<1x1x1x8xf32>
    %74 = vector.shape_cast %73 : vector<1x1x1x8xf32> to vector<1x8xf32>
    %75 = vector.broadcast %74 : vector<1x8xf32> to vector<17x8xf32>
    %76 = arith.addf %72, %75 : vector<17x8xf32>
    %c1_54 = arith.constant 1 : index
    %c1_55 = arith.constant 1 : index
    %c0_56 = arith.constant 0 : index
    %c0_57 = arith.constant 0 : index
    %77 = vector.load %arg4[%c1_54, %c1_55, %c0_56, %c0_57] : memref<3x4x32x8xbf16, #tpu.memory_space<vmem>>, vector<1x1x32x8xbf16>
    %78 = vector.shape_cast %77 : vector<1x1x32x8xbf16> to vector<32x8xbf16>
    %cst_58 = arith.constant dense<0.000000e+00> : vector<17x8xf32>
    %79 = tpu.matmul %24, %78, %cst_58 {dimension_numbers = #tpu.dot_dimension_numbers<[1], [0], [0], [1], [0, 0, 1, 1], [], []>} : vector<17x32xbf16>, vector<32x8xbf16>, vector<17x8xf32> -> vector<17x8xf32>
    %c1_59 = arith.constant 1 : index
    %c1_60 = arith.constant 1 : index
    %c0_61 = arith.constant 0 : index
    %c0_62 = arith.constant 0 : index
    %80 = vector.load %arg5[%c1_59, %c1_60, %c0_61, %c0_62] : memref<3x4x1x8xf32, #tpu.memory_space<vmem>>, vector<1x1x1x8xf32>
    %81 = vector.shape_cast %80 : vector<1x1x1x8xf32> to vector<1x8xf32>
    %82 = vector.broadcast %81 : vector<1x8xf32> to vector<17x8xf32>
    %83 = arith.addf %79, %82 : vector<17x8xf32>
    %c2_63 = arith.constant 2 : index
    %c1_64 = arith.constant 1 : index
    %c0_65 = arith.constant 0 : index
    %c0_66 = arith.constant 0 : index
    %84 = vector.load %arg4[%c2_63, %c1_64, %c0_65, %c0_66] : memref<3x4x32x8xbf16, #tpu.memory_space<vmem>>, vector<1x1x32x8xbf16>
    %85 = vector.shape_cast %84 : vector<1x1x32x8xbf16> to vector<32x8xbf16>
    %cst_67 = arith.constant dense<0.000000e+00> : vector<17x8xf32>
    %86 = tpu.matmul %24, %85, %cst_67 {dimension_numbers = #tpu.dot_dimension_numbers<[1], [0], [0], [1], [0, 0, 1, 1], [], []>} : vector<17x32xbf16>, vector<32x8xbf16>, vector<17x8xf32> -> vector<17x8xf32>
    %c2_68 = arith.constant 2 : index
    %c1_69 = arith.constant 1 : index
    %c0_70 = arith.constant 0 : index
    %c0_71 = arith.constant 0 : index
    %87 = vector.load %arg5[%c2_68, %c1_69, %c0_70, %c0_71] : memref<3x4x1x8xf32, #tpu.memory_space<vmem>>, vector<1x1x1x8xf32>
    %88 = vector.shape_cast %87 : vector<1x1x1x8xf32> to vector<1x8xf32>
    %89 = vector.broadcast %88 : vector<1x8xf32> to vector<17x8xf32>
    %90 = arith.addf %86, %89 : vector<17x8xf32>
    %cst_72 = arith.constant 0.353553385 : f32
    %91 = vector.broadcast %cst_72 : f32 to vector<17x8xf32>
    %92 = arith.mulf %76, %91 : vector<17x8xf32>
    %93 = arith.truncf %92 : vector<17x8xf32> to vector<17x8xbf16>
    %94 = arith.truncf %83 : vector<17x8xf32> to vector<17x8xbf16>
    %cst_73 = arith.constant dense<0.000000e+00> : vector<17x17xf32>
    %95 = tpu.matmul %93, %94, %cst_73 {dimension_numbers = #tpu.dot_dimension_numbers<[1], [1], [0], [0], [0, 0, 1, 0], [], []>} : vector<17x8xbf16>, vector<17x8xbf16>, vector<17x17xf32> -> vector<17x17xf32>
    %cst_74 = arith.constant dense<0xFF800000> : vector<17xf32>
    %96 = vector.multi_reduction <maximumf>, %95, %cst_74 [1] : vector<17x17xf32> to vector<17xf32>
    %97 = vector.shape_cast %96 : vector<17xf32> to vector<17x1xf32>
    %98 = vector.broadcast %97 : vector<17x1xf32> to vector<17x17xf32>
    %99 = arith.subf %95, %98 : vector<17x17xf32>
    %100 = math.exp %99 : vector<17x17xf32>
    %cst_75 = arith.constant dense<0.000000e+00> : vector<17xf32>
    %101 = vector.multi_reduction <add>, %100, %cst_75 [1] : vector<17x17xf32> to vector<17xf32>
    %102 = vector.shape_cast %101 : vector<17xf32> to vector<17x1xf32>
    %103 = tpu.reciprocal %102 {approx = true} : vector<17x1xf32> -> vector<17x1xf32>
    %104 = vector.broadcast %103 : vector<17x1xf32> to vector<17x17xf32>
    %105 = arith.mulf %100, %104 : vector<17x17xf32>
    %106 = arith.truncf %105 : vector<17x17xf32> to vector<17x17xbf16>
    %107 = arith.truncf %90 : vector<17x8xf32> to vector<17x8xbf16>
    %cst_76 = arith.constant dense<0.000000e+00> : vector<17x8xf32>
    %108 = tpu.matmul %106, %107, %cst_76 {dimension_numbers = #tpu.dot_dimension_numbers<[1], [0], [0], [1], [0, 0, 1, 1], [], []>} : vector<17x17xbf16>, vector<17x8xbf16>, vector<17x8xf32> -> vector<17x8xf32>
    %109 = arith.truncf %108 : vector<17x8xf32> to vector<17x8xbf16>
    %c1_77 = arith.constant 1 : index
    %c0_78 = arith.constant 0 : index
    %c0_79 = arith.constant 0 : index
    %110 = vector.load %arg6[%c1_77, %c0_78, %c0_79] : memref<4x8x32xbf16, #tpu.memory_space<vmem>>, vector<1x8x32xbf16>
    %111 = vector.shape_cast %110 : vector<1x8x32xbf16> to vector<8x32xbf16>
    %cst_80 = arith.constant dense<0.000000e+00> : vector<17x32xf32>
    %112 = tpu.matmul %109, %111, %cst_80 {dimension_numbers = #tpu.dot_dimension_numbers<[1], [0], [0], [1], [0, 0, 1, 1], [], []>} : vector<17x8xbf16>, vector<8x32xbf16>, vector<17x32xf32> -> vector<17x32xf32>
    %113 = arith.addf %69, %112 : vector<17x32xf32>
    %c0_81 = arith.constant 0 : index
    %c2_82 = arith.constant 2 : index
    %c0_83 = arith.constant 0 : index
    %c0_84 = arith.constant 0 : index
    %114 = vector.load %arg4[%c0_81, %c2_82, %c0_83, %c0_84] : memref<3x4x32x8xbf16, #tpu.memory_space<vmem>>, vector<1x1x32x8xbf16>
    %115 = vector.shape_cast %114 : vector<1x1x32x8xbf16> to vector<32x8xbf16>
    %cst_85 = arith.constant dense<0.000000e+00> : vector<17x8xf32>
    %116 = tpu.matmul %24, %115, %cst_85 {dimension_numbers = #tpu.dot_dimension_numbers<[1], [0], [0], [1], [0, 0, 1, 1], [], []>} : vector<17x32xbf16>, vector<32x8xbf16>, vector<17x8xf32> -> vector<17x8xf32>
    %c0_86 = arith.constant 0 : index
    %c2_87 = arith.constant 2 : index
    %c0_88 = arith.constant 0 : index
    %c0_89 = arith.constant 0 : index
    %117 = vector.load %arg5[%c0_86, %c2_87, %c0_88, %c0_89] : memref<3x4x1x8xf32, #tpu.memory_space<vmem>>, vector<1x1x1x8xf32>
    %118 = vector.shape_cast %117 : vector<1x1x1x8xf32> to vector<1x8xf32>
    %119 = vector.broadcast %118 : vector<1x8xf32> to vector<17x8xf32>
    %120 = arith.addf %116, %119 : vector<17x8xf32>
    %c1_90 = arith.constant 1 : index
    %c2_91 = arith.constant 2 : index
    %c0_92 = arith.constant 0 : index
    %c0_93 = arith.constant 0 : index
    %121 = vector.load %arg4[%c1_90, %c2_91, %c0_92, %c0_93] : memref<3x4x32x8xbf16, #tpu.memory_space<vmem>>, vector<1x1x32x8xbf16>
    %122 = vector.shape_cast %121 : vector<1x1x32x8xbf16> to vector<32x8xbf16>
    %cst_94 = arith.constant dense<0.000000e+00> : vector<17x8xf32>
    %123 = tpu.matmul %24, %122, %cst_94 {dimension_numbers = #tpu.dot_dimension_numbers<[1], [0], [0], [1], [0, 0, 1, 1], [], []>} : vector<17x32xbf16>, vector<32x8xbf16>, vector<17x8xf32> -> vector<17x8xf32>
    %c1_95 = arith.constant 1 : index
    %c2_96 = arith.constant 2 : index
    %c0_97 = arith.constant 0 : index
    %c0_98 = arith.constant 0 : index
    %124 = vector.load %arg5[%c1_95, %c2_96, %c0_97, %c0_98] : memref<3x4x1x8xf32, #tpu.memory_space<vmem>>, vector<1x1x1x8xf32>
    %125 = vector.shape_cast %124 : vector<1x1x1x8xf32> to vector<1x8xf32>
    %126 = vector.broadcast %125 : vector<1x8xf32> to vector<17x8xf32>
    %127 = arith.addf %123, %126 : vector<17x8xf32>
    %c2_99 = arith.constant 2 : index
    %c2_100 = arith.constant 2 : index
    %c0_101 = arith.constant 0 : index
    %c0_102 = arith.constant 0 : index
    %128 = vector.load %arg4[%c2_99, %c2_100, %c0_101, %c0_102] : memref<3x4x32x8xbf16, #tpu.memory_space<vmem>>, vector<1x1x32x8xbf16>
    %129 = vector.shape_cast %128 : vector<1x1x32x8xbf16> to vector<32x8xbf16>
    %cst_103 = arith.constant dense<0.000000e+00> : vector<17x8xf32>
    %130 = tpu.matmul %24, %129, %cst_103 {dimension_numbers = #tpu.dot_dimension_numbers<[1], [0], [0], [1], [0, 0, 1, 1], [], []>} : vector<17x32xbf16>, vector<32x8xbf16>, vector<17x8xf32> -> vector<17x8xf32>
    %c2_104 = arith.constant 2 : index
    %c2_105 = arith.constant 2 : index
    %c0_106 = arith.constant 0 : index
    %c0_107 = arith.constant 0 : index
    %131 = vector.load %arg5[%c2_104, %c2_105, %c0_106, %c0_107] : memref<3x4x1x8xf32, #tpu.memory_space<vmem>>, vector<1x1x1x8xf32>
    %132 = vector.shape_cast %131 : vector<1x1x1x8xf32> to vector<1x8xf32>
    %133 = vector.broadcast %132 : vector<1x8xf32> to vector<17x8xf32>
    %134 = arith.addf %130, %133 : vector<17x8xf32>
    %cst_108 = arith.constant 0.353553385 : f32
    %135 = vector.broadcast %cst_108 : f32 to vector<17x8xf32>
    %136 = arith.mulf %120, %135 : vector<17x8xf32>
    %137 = arith.truncf %136 : vector<17x8xf32> to vector<17x8xbf16>
    %138 = arith.truncf %127 : vector<17x8xf32> to vector<17x8xbf16>
    %cst_109 = arith.constant dense<0.000000e+00> : vector<17x17xf32>
    %139 = tpu.matmul %137, %138, %cst_109 {dimension_numbers = #tpu.dot_dimension_numbers<[1], [1], [0], [0], [0, 0, 1, 0], [], []>} : vector<17x8xbf16>, vector<17x8xbf16>, vector<17x17xf32> -> vector<17x17xf32>
    %cst_110 = arith.constant dense<0xFF800000> : vector<17xf32>
    %140 = vector.multi_reduction <maximumf>, %139, %cst_110 [1] : vector<17x17xf32> to vector<17xf32>
    %141 = vector.shape_cast %140 : vector<17xf32> to vector<17x1xf32>
    %142 = vector.broadcast %141 : vector<17x1xf32> to vector<17x17xf32>
    %143 = arith.subf %139, %142 : vector<17x17xf32>
    %144 = math.exp %143 : vector<17x17xf32>
    %cst_111 = arith.constant dense<0.000000e+00> : vector<17xf32>
    %145 = vector.multi_reduction <add>, %144, %cst_111 [1] : vector<17x17xf32> to vector<17xf32>
    %146 = vector.shape_cast %145 : vector<17xf32> to vector<17x1xf32>
    %147 = tpu.reciprocal %146 {approx = true} : vector<17x1xf32> -> vector<17x1xf32>
    %148 = vector.broadcast %147 : vector<17x1xf32> to vector<17x17xf32>
    %149 = arith.mulf %144, %148 : vector<17x17xf32>
    %150 = arith.truncf %149 : vector<17x17xf32> to vector<17x17xbf16>
    %151 = arith.truncf %134 : vector<17x8xf32> to vector<17x8xbf16>
    %cst_112 = arith.constant dense<0.000000e+00> : vector<17x8xf32>
    %152 = tpu.matmul %150, %151, %cst_112 {dimension_numbers = #tpu.dot_dimension_numbers<[1], [0], [0], [1], [0, 0, 1, 1], [], []>} : vector<17x17xbf16>, vector<17x8xbf16>, vector<17x8xf32> -> vector<17x8xf32>
    %153 = arith.truncf %152 : vector<17x8xf32> to vector<17x8xbf16>
    %c2_113 = arith.constant 2 : index
    %c0_114 = arith.constant 0 : index
    %c0_115 = arith.constant 0 : index
    %154 = vector.load %arg6[%c2_113, %c0_114, %c0_115] : memref<4x8x32xbf16, #tpu.memory_space<vmem>>, vector<1x8x32xbf16>
    %155 = vector.shape_cast %154 : vector<1x8x32xbf16> to vector<8x32xbf16>
    %cst_116 = arith.constant dense<0.000000e+00> : vector<17x32xf32>
    %156 = tpu.matmul %153, %155, %cst_116 {dimension_numbers = #tpu.dot_dimension_numbers<[1], [0], [0], [1], [0, 0, 1, 1], [], []>} : vector<17x8xbf16>, vector<8x32xbf16>, vector<17x32xf32> -> vector<17x32xf32>
    %157 = arith.addf %113, %156 : vector<17x32xf32>
    %c0_117 = arith.constant 0 : index
    %c3 = arith.constant 3 : index
    %c0_118 = arith.constant 0 : index
    %c0_119 = arith.constant 0 : index
    %158 = vector.load %arg4[%c0_117, %c3, %c0_118, %c0_119] : memref<3x4x32x8xbf16, #tpu.memory_space<vmem>>, vector<1x1x32x8xbf16>
    %159 = vector.shape_cast %158 : vector<1x1x32x8xbf16> to vector<32x8xbf16>
    %cst_120 = arith.constant dense<0.000000e+00> : vector<17x8xf32>
    %160 = tpu.matmul %24, %159, %cst_120 {dimension_numbers = #tpu.dot_dimension_numbers<[1], [0], [0], [1], [0, 0, 1, 1], [], []>} : vector<17x32xbf16>, vector<32x8xbf16>, vector<17x8xf32> -> vector<17x8xf32>
    %c0_121 = arith.constant 0 : index
    %c3_122 = arith.constant 3 : index
    %c0_123 = arith.constant 0 : index
    %c0_124 = arith.constant 0 : index
    %161 = vector.load %arg5[%c0_121, %c3_122, %c0_123, %c0_124] : memref<3x4x1x8xf32, #tpu.memory_space<vmem>>, vector<1x1x1x8xf32>
    %162 = vector.shape_cast %161 : vector<1x1x1x8xf32> to vector<1x8xf32>
    %163 = vector.broadcast %162 : vector<1x8xf32> to vector<17x8xf32>
    %164 = arith.addf %160, %163 : vector<17x8xf32>
    %c1_125 = arith.constant 1 : index
    %c3_126 = arith.constant 3 : index
    %c0_127 = arith.constant 0 : index
    %c0_128 = arith.constant 0 : index
    %165 = vector.load %arg4[%c1_125, %c3_126, %c0_127, %c0_128] : memref<3x4x32x8xbf16, #tpu.memory_space<vmem>>, vector<1x1x32x8xbf16>
    %166 = vector.shape_cast %165 : vector<1x1x32x8xbf16> to vector<32x8xbf16>
    %cst_129 = arith.constant dense<0.000000e+00> : vector<17x8xf32>
    %167 = tpu.matmul %24, %166, %cst_129 {dimension_numbers = #tpu.dot_dimension_numbers<[1], [0], [0], [1], [0, 0, 1, 1], [], []>} : vector<17x32xbf16>, vector<32x8xbf16>, vector<17x8xf32> -> vector<17x8xf32>
    %c1_130 = arith.constant 1 : index
    %c3_131 = arith.constant 3 : index
    %c0_132 = arith.constant 0 : index
    %c0_133 = arith.constant 0 : index
    %168 = vector.load %arg5[%c1_130, %c3_131, %c0_132, %c0_133] : memref<3x4x1x8xf32, #tpu.memory_space<vmem>>, vector<1x1x1x8xf32>
    %169 = vector.shape_cast %168 : vector<1x1x1x8xf32> to vector<1x8xf32>
    %170 = vector.broadcast %169 : vector<1x8xf32> to vector<17x8xf32>
    %171 = arith.addf %167, %170 : vector<17x8xf32>
    %c2_134 = arith.constant 2 : index
    %c3_135 = arith.constant 3 : index
    %c0_136 = arith.constant 0 : index
    %c0_137 = arith.constant 0 : index
    %172 = vector.load %arg4[%c2_134, %c3_135, %c0_136, %c0_137] : memref<3x4x32x8xbf16, #tpu.memory_space<vmem>>, vector<1x1x32x8xbf16>
    %173 = vector.shape_cast %172 : vector<1x1x32x8xbf16> to vector<32x8xbf16>
    %cst_138 = arith.constant dense<0.000000e+00> : vector<17x8xf32>
    %174 = tpu.matmul %24, %173, %cst_138 {dimension_numbers = #tpu.dot_dimension_numbers<[1], [0], [0], [1], [0, 0, 1, 1], [], []>} : vector<17x32xbf16>, vector<32x8xbf16>, vector<17x8xf32> -> vector<17x8xf32>
    %c2_139 = arith.constant 2 : index
    %c3_140 = arith.constant 3 : index
    %c0_141 = arith.constant 0 : index
    %c0_142 = arith.constant 0 : index
    %175 = vector.load %arg5[%c2_139, %c3_140, %c0_141, %c0_142] : memref<3x4x1x8xf32, #tpu.memory_space<vmem>>, vector<1x1x1x8xf32>
    %176 = vector.shape_cast %175 : vector<1x1x1x8xf32> to vector<1x8xf32>
    %177 = vector.broadcast %176 : vector<1x8xf32> to vector<17x8xf32>
    %178 = arith.addf %174, %177 : vector<17x8xf32>
    %cst_143 = arith.constant 0.353553385 : f32
    %179 = vector.broadcast %cst_143 : f32 to vector<17x8xf32>
    %180 = arith.mulf %164, %179 : vector<17x8xf32>
    %181 = arith.truncf %180 : vector<17x8xf32> to vector<17x8xbf16>
    %182 = arith.truncf %171 : vector<17x8xf32> to vector<17x8xbf16>
    %cst_144 = arith.constant dense<0.000000e+00> : vector<17x17xf32>
    %183 = tpu.matmul %181, %182, %cst_144 {dimension_numbers = #tpu.dot_dimension_numbers<[1], [1], [0], [0], [0, 0, 1, 0], [], []>} : vector<17x8xbf16>, vector<17x8xbf16>, vector<17x17xf32> -> vector<17x17xf32>
    %cst_145 = arith.constant dense<0xFF800000> : vector<17xf32>
    %184 = vector.multi_reduction <maximumf>, %183, %cst_145 [1] : vector<17x17xf32> to vector<17xf32>
    %185 = vector.shape_cast %184 : vector<17xf32> to vector<17x1xf32>
    %186 = vector.broadcast %185 : vector<17x1xf32> to vector<17x17xf32>
    %187 = arith.subf %183, %186 : vector<17x17xf32>
    %188 = math.exp %187 : vector<17x17xf32>
    %cst_146 = arith.constant dense<0.000000e+00> : vector<17xf32>
    %189 = vector.multi_reduction <add>, %188, %cst_146 [1] : vector<17x17xf32> to vector<17xf32>
    %190 = vector.shape_cast %189 : vector<17xf32> to vector<17x1xf32>
    %191 = tpu.reciprocal %190 {approx = true} : vector<17x1xf32> -> vector<17x1xf32>
    %192 = vector.broadcast %191 : vector<17x1xf32> to vector<17x17xf32>
    %193 = arith.mulf %188, %192 : vector<17x17xf32>
    %194 = arith.truncf %193 : vector<17x17xf32> to vector<17x17xbf16>
    %195 = arith.truncf %178 : vector<17x8xf32> to vector<17x8xbf16>
    %cst_147 = arith.constant dense<0.000000e+00> : vector<17x8xf32>
    %196 = tpu.matmul %194, %195, %cst_147 {dimension_numbers = #tpu.dot_dimension_numbers<[1], [0], [0], [1], [0, 0, 1, 1], [], []>} : vector<17x17xbf16>, vector<17x8xbf16>, vector<17x8xf32> -> vector<17x8xf32>
    %197 = arith.truncf %196 : vector<17x8xf32> to vector<17x8xbf16>
    %c3_148 = arith.constant 3 : index
    %c0_149 = arith.constant 0 : index
    %c0_150 = arith.constant 0 : index
    %198 = vector.load %arg6[%c3_148, %c0_149, %c0_150] : memref<4x8x32xbf16, #tpu.memory_space<vmem>>, vector<1x8x32xbf16>
    %199 = vector.shape_cast %198 : vector<1x8x32xbf16> to vector<8x32xbf16>
    %cst_151 = arith.constant dense<0.000000e+00> : vector<17x32xf32>
    %200 = tpu.matmul %197, %199, %cst_151 {dimension_numbers = #tpu.dot_dimension_numbers<[1], [0], [0], [1], [0, 0, 1, 1], [], []>} : vector<17x8xbf16>, vector<8x32xbf16>, vector<17x32xf32> -> vector<17x32xf32>
    %201 = arith.addf %157, %200 : vector<17x32xf32>
    %202 = arith.addf %1, %201 : vector<17x32xf32>
    %c0_152 = arith.constant 0 : index
    %c0_153 = arith.constant 0 : index
    %203 = vector.load %arg7[%c0_152, %c0_153] : memref<1x32xf32, #tpu.memory_space<vmem>>, vector<1x32xf32>
    %204 = vector.broadcast %203 : vector<1x32xf32> to vector<17x32xf32>
    %205 = arith.addf %202, %204 : vector<17x32xf32>
    %c0_154 = arith.constant 0 : index
    %c0_155 = arith.constant 0 : index
    %c0_156 = arith.constant 0 : index
    %206 = vector.load %arg8[%c0_154, %c0_155, %c0_156] : memref<1x17x32xf32, #tpu.memory_space<vmem>>, vector<1x17x32xf32>
    %207 = vector.shape_cast %206 : vector<1x17x32xf32> to vector<17x32xf32>
    %208 = vector.shape_cast %205 : vector<17x32xf32> to vector<1x17x32xf32>
    tpu.vector_store %arg8[%c0_154, %c0_155, %c0_156], %208 {strides = array<i32>} : memref<1x17x32xf32, #tpu.memory_space<vmem>>, vector<1x17x32xf32>,
    return
  }
  func.func @transform_0(%arg0: i32) -> (i32, i32, i32) {
    %c0_i32 = arith.constant 0 : i32
    %c0_i32_0 = arith.constant 0 : i32
    %c0_i32_1 = arith.constant 0 : i32
    return %arg0, %c0_i32, %c0_i32_0 : i32, i32, i32
  }
  func.func @transform_1(%arg0: i32) -> (i32, i32) {
    %c0_i32 = arith.constant 0 : i32
    %c0_i32_0 = arith.constant 0 : i32
    %c0_i32_1 = arith.constant 0 : i32
    return %c0_i32, %c0_i32_0 : i32, i32
  }
  func.func @transform_2(%arg0: i32) -> (i32, i32) {
    %c0_i32 = arith.constant 0 : i32
    %c0_i32_0 = arith.constant 0 : i32
    %c0_i32_1 = arith.constant 0 : i32
    return %c0_i32, %c0_i32_0 : i32, i32
  }
  func.func @transform_3(%arg0: i32) -> (i32, i32, i32, i32) {
    %c0_i32 = arith.constant 0 : i32
    %c0_i32_0 = arith.constant 0 : i32
    %c0_i32_1 = arith.constant 0 : i32
    %c0_i32_2 = arith.constant 0 : i32
    %c0_i32_3 = arith.constant 0 : i32
    return %c0_i32, %c0_i32_0, %c0_i32_1, %c0_i32_2 : i32, i32, i32, i32
  }
  func.func @transform_4(%arg0: i32) -> (i32, i32, i32, i32) {
    %c0_i32 = arith.constant 0 : i32
    %c0_i32_0 = arith.constant 0 : i32
    %c0_i32_1 = arith.constant 0 : i32
    %c0_i32_2 = arith.constant 0 : i32
    %c0_i32_3 = arith.constant 0 : i32
    return %c0_i32, %c0_i32_0, %c0_i32_1, %c0_i32_2 : i32, i32, i32, i32
  }
  func.func @transform_5(%arg0: i32) -> (i32, i32, i32) {
    %c0_i32 = arith.constant 0 : i32
    %c0_i32_0 = arith.constant 0 : i32
    %c0_i32_1 = arith.constant 0 : i32
    %c0_i32_2 = arith.constant 0 : i32
    return %c0_i32, %c0_i32_0, %c0_i32_1 : i32, i32, i32
  }
  func.func @transform_6(%arg0: i32) -> (i32, i32) {
    %c0_i32 = arith.constant 0 : i32
    %c0_i32_0 = arith.constant 0 : i32
    %c0_i32_1 = arith.constant 0 : i32
    return %c0_i32, %c0_i32_0 : i32, i32
  }
  func.func @transform_7(%arg0: i32) -> (i32, i32, i32) {
    %c0_i32 = arith.constant 0 : i32
    %c0_i32_0 = arith.constant 0 : i32
    %c0_i32_1 = arith.constant 0 : i32
    return %arg0, %c0_i32, %c0_i32_0 : i32, i32, i32
  }
}

</mosaic_0001>

<llo_original>
// kernel: face_encoder_forward.5
$region0: #{face_encoder_forward.5}
  #allocation0 [shape = 'u32[]', space=smem, size = 0x4, offset = 0x4, fixed_abs, tag = 'smem constant byte address 0x4 - core index']
  #allocation1 [shape = 'u32[144,128]{1,0:T(1,128)}', space=vmem, size = 0x12000, scoped, tag = 'internal scratch']
  %s0 = inlined_call_operand.vmem [shape: f32[2,16,48], index: 0, kind: input, shape index: {}]
  %s1 = inlined_call_operand.vmem [shape: bf16[48,32], index: 1, kind: input, shape index: {}]
  %s2 = inlined_call_operand.vmem [shape: f32[1,32], index: 2, kind: input, shape index: {}]
  %s3 = inlined_call_operand.vmem [shape: f32[1,16,32], index: 3, kind: input, shape index: {}]
  %s4 = inlined_call_operand.vmem [shape: f32[2,16,32], index: 4, kind: output, shape index: {}]
  %s5 = sld [smem:[#allocation0]]
  $region49: #{face_encoder_forward.5} parent=0
    _
  %s7 = ssub.s32 1, %s5
  %s8 = scalar_select 0, %s7, %s5
  loop: start=0, step=1, limit=4
  $region2: #{face_encoder_forward.5} parent=0 // loop_pre_header
    _
  $region3: #{face_encoder_forward.5} parent=0 // loop_header
    %s10 = sphi 0, %s14
    %p11 = scmp.ge.s32.totalorder %s10, 4
    %s20 = sphi 0, %s22
    %s23 = sphi 0, %s20
    %s24 = sphi 0, %s23
    %s40 = sphi 0, %s24
    %s44 = sphi 0, %s44
    %s46 = sphi 0, %s44
    %s47 = sphi 0, %s46
    %s61 = sphi 0, %s47
    %s65 = sphi 0, %s65
    %s67 = sphi 0, %s65
    %s68 = sphi 0, %s67
    %s82 = sphi 0, %s68
    %s86 = sphi 0, %s86
    %s88 = sphi 0, %s86
    %s89 = sphi 0, %s88
    %s103 = sphi 0, %s89
    %s109 = sphi 0, %s111
    %s112 = sphi 0, %s109
    %s113 = sphi 0, %s112
    %s129 = sphi 0, %s113
  $region4: #{face_encoder_forward.5} parent=0 // loop_header_branch
    %13 = sbr.rel (%p11) target = $region8
  $region5: #{face_encoder_forward.5} parent=0 // loop_body
    %s15 = ssub.s32 %s10, 1
    %s16 = ssub.s32 %s10, 2
    %s17 = sadd.s32 %s10, 1
    %s18 = ssub.s32 %s10, %s17
    %p19 = scmp.eq.s32.totalorder %s18, 0
    %s21 = sadd.s32 %s20, 1
    %s22 = scalar_select %p19, %s20, %s21
    %p25 = pneg %p19
    %p26 = scmp.eq.s32.totalorder %s10, 1
    %p27 = por %p25, %p26
    %p28 = scmp.ne.s32.totalorder %s20, %s23
    %p29 = scmp.eq.s32.totalorder %s10, 0
    %p30 = por %p28, %p29
    %p31 = scmp.ne.s32.totalorder %s20, %s23
    %p32 = scmp.eq.s32.totalorder %s15, 1
    %p33 = por %p31, %p32
    %p34 = scmp.ne.s32.totalorder %s23, %s24
    %p35 = scmp.eq.s32.totalorder %s15, 0
    %p36 = por %p34, %p35
    %p37 = scmp.ne.s32.totalorder %s23, %s24
    %p38 = scmp.eq.s32.totalorder %s16, 1
    %p39 = por %p37, %p38
    %p41 = scmp.ne.s32.totalorder %s24, %s40
    %p42 = scmp.eq.s32.totalorder %s16, 0
    %p43 = por %p41, %p42
    %s45 = sadd.s32 %s44, 1
    %p48 = scmp.eq.s32.totalorder %s10, 1
    %p49 = scmp.ne.s32.totalorder %s44, %s46
    %p50 = scmp.eq.s32.totalorder %s10, 0
    %p51 = por %p49, %p50
    %p52 = scmp.ne.s32.totalorder %s44, %s46
    %p53 = scmp.eq.s32.totalorder %s15, 1
    %p54 = por %p52, %p53
    %p55 = scmp.ne.s32.totalorder %s46, %s47
    %p56 = scmp.eq.s32.totalorder %s15, 0
    %p57 = por %p55, %p56
    %p58 = scmp.ne.s32.totalorder %s46, %s47
    %p59 = scmp.eq.s32.totalorder %s16, 1
    %p60 = por %p58, %p59
    %p62 = scmp.ne.s32.totalorder %s47, %s61
    %p63 = scmp.eq.s32.totalorder %s16, 0
    %p64 = por %p62, %p63
    %s66 = sadd.s32 %s65, 1
    %p69 = scmp.eq.s32.totalorder %s10, 1
    %p70 = scmp.ne.s32.totalorder %s65, %s67
    %p71 = scmp.eq.s32.totalorder %s10, 0
    %p72 = por %p70, %p71
    %p73 = scmp.ne.s32.totalorder %s65, %s67
    %p74 = scmp.eq.s32.totalorder %s15, 1
    %p75 = por %p73, %p74
    %p76 = scmp.ne.s32.totalorder %s67, %s68
    %p77 = scmp.eq.s32.totalorder %s15, 0
    %p78 = por %p76, %p77
    %p79 = scmp.ne.s32.totalorder %s67, %s68
    %p80 = scmp.eq.s32.totalorder %s16, 1
    %p81 = por %p79, %p80
    %p83 = scmp.ne.s32.totalorder %s68, %s82
    %p84 = scmp.eq.s32.totalorder %s16, 0
    %p85 = por %p83, %p84
    %s87 = sadd.s32 %s86, 1
    %p90 = scmp.eq.s32.totalorder %s10, 1
    %p91 = scmp.ne.s32.totalorder %s86, %s88
    %p92 = scmp.eq.s32.totalorder %s10, 0
    %p93 = por %p91, %p92
    %p94 = scmp.ne.s32.totalorder %s86, %s88
    %p95 = scmp.eq.s32.totalorder %s15, 1
    %p96 = por %p94, %p95
    %p97 = scmp.ne.s32.totalorder %s88, %s89
    %p98 = scmp.eq.s32.totalorder %s15, 0
    %p99 = por %p97, %p98
    %p100 = scmp.ne.s32.totalorder %s88, %s89
    %p101 = scmp.eq.s32.totalorder %s16, 1
    %p102 = por %p100, %p101
    %p104 = scmp.ne.s32.totalorder %s89, %s103
    %p105 = scmp.eq.s32.totalorder %s16, 0
    %p106 = por %p104, %p105
    %s107 = ssub.s32 %s10, %s17
    %p108 = scmp.eq.s32.totalorder %s107, 0
    %s110 = sadd.s32 %s109, 1
    %s111 = scalar_select %p108, %s109, %s110
    %p114 = pneg %p108
    %p115 = scmp.eq.s32.totalorder %s10, 1
    %p116 = por %p114, %p115
    %p117 = scmp.ne.s32.totalorder %s109, %s112
    %p118 = scmp.eq.s32.totalorder %s10, 0
    %p119 = por %p117, %p118
    %p120 = scmp.ne.s32.totalorder %s109, %s112
    %p121 = scmp.eq.s32.totalorder %s15, 1
    %p122 = por %p120, %p121
    %p123 = scmp.ne.s32.totalorder %s112, %s113
    %p124 = scmp.eq.s32.totalorder %s15, 0
    %p125 = por %p123, %p124
    %p126 = scmp.ne.s32.totalorder %s112, %s113
    %p127 = scmp.eq.s32.totalorder %s16, 1
    %p128 = por %p126, %p127
    %p130 = scmp.ne.s32.totalorder %s113, %s129
    %p131 = scmp.eq.s32.totalorder %s16, 0
    %p132 = por %p130, %p131
    %p133 = scmp.le.s32.totalorder 1, %s10
    %p134 = scmp.lt.s32.totalorder %s10, 3
    %p135 = pnand %p133, %p134
    %p136 = pneg %p135
    // Predicated region
    $region9: #{face_encoder_forward.5} parent=5 // pred_check
      _
    $region10: #{face_encoder_forward.5} parent=5 // pred_check_branch
      %138 = sbr.rel (%p135) target = $region12
    $region11: #{face_encoder_forward.5} parent=5 // pred_region
      %s139 = ssub.s32 %s10, 1
      // Predicated region
      $region13: #{face_encoder_forward.5} parent=11 // pred_check
        %p140 = pneg %p57
      $region14: #{face_encoder_forward.5} parent=11 // pred_check_branch
        %142 = sbr.rel (%p140) target = $region16
      $region15: #{face_encoder_forward.5} parent=11 // pred_region
        _
      $region16: #{face_encoder_forward.5} parent=11 // pred_fallthru
        _
      // Predicated region
      $region17: #{face_encoder_forward.5} parent=11 // pred_check
        %p143 = pneg %p78
      $region18: #{face_encoder_forward.5} parent=11 // pred_check_branch
        %145 = sbr.rel (%p143) target = $region20
      $region19: #{face_encoder_forward.5} parent=11 // pred_region
        _
      $region20: #{face_encoder_forward.5} parent=11 // pred_fallthru
        _
      // Predicated region
      $region21: #{face_encoder_forward.5} parent=11 // pred_check
        %p146 = pneg %p99
      $region22: #{face_encoder_forward.5} parent=11 // pred_check_branch
        %148 = sbr.rel (%p146) target = $region24
      $region23: #{face_encoder_forward.5} parent=11 // pred_region
        _
      $region24: #{face_encoder_forward.5} parent=11 // pred_fallthru
        _
    $region12: #{face_encoder_forward.5} parent=5 // pred_fallthru
      _
    %p149 = scmp.lt.s32.totalorder %s10, 2
    // Predicated region
    $region25: #{face_encoder_forward.5} parent=5 // pred_check
      %p150 = pneg %p149
    $region26: #{face_encoder_forward.5} parent=5 // pred_check_branch
      %152 = sbr.rel (%p150) target = $region28
    $region27: #{face_encoder_forward.5} parent=5 // pred_region
      // Predicated region
      $region29: #{face_encoder_forward.5} parent=27 // pred_check
        %p153 = pneg %p30
      $region30: #{face_encoder_forward.5} parent=27 // pred_check_branch
        %155 = sbr.rel (%p153) target = $region32
      $region31: #{face_encoder_forward.5} parent=27 // pred_region
        %p156 = scmp.lt.s32.totalorder %s10, 1
        %s157 = scalar_select %p156, %s10, 1
        %s158 = smul.addr %s157, 2
        %s159 = smul.addr %s158, 8
        %s160 = scalar_lea.vmem %s0, %s159
      $region32: #{face_encoder_forward.5} parent=27 // pred_fallthru
        _
    $region28: #{face_encoder_forward.5} parent=5 // pred_fallthru
      _
    %p161 = scmp.le.s32.totalorder 1, %s10
    %p162 = scmp.lt.s32.totalorder %s10, 3
    %p163 = pnand %p161, %p162
    %p164 = pneg %p163
    // Predicated region
    $region33: #{face_encoder_forward.5} parent=5 // pred_check
      _
    $region34: #{face_encoder_forward.5} parent=5 // pred_check_branch
      %166 = sbr.rel (%p163) target = $region36
    $region35: #{face_encoder_forward.5} parent=5 // pred_region
      %s167 = ssub.s32 %s10, 1
      %p168 = scmp.lt.s32.totalorder %s15, 1
      %s169 = scalar_select %p168, %s15, 1
      %s170 = smul.addr %s169, 2
      %s171 = smul.addr %s170, 8
      %s172 = scalar_lea.vmem %s0, %s171
      %p173 = pneg %p36
      %p174 = pneg %p33
      %p175 = pneg %p57
      %p176 = pneg %p54
      %p177 = pneg %p78
      %p178 = pneg %p75
      %p179 = pneg %p99
      %p180 = pneg %p96
      %p181 = pneg %p125
      %p182 = pneg %p122
      %p183 = scmp.lt.s32.totalorder %s15, 1
      %s184 = scalar_select %p183, %s15, 1
      %s185 = smul.addr %s184, 2
      %s186 = smul.addr %s185, 8
      %s187 = scalar_lea.vmem %s4, %s186
      %p188 = scmp.lt.s32.totalorder %s15, 1
      %s189 = scalar_select %p188, %s15, 1
      %s190 = smul.addr %s189, 2
      %s191 = smul.addr %s190, 8
      %s192 = scalar_lea.vmem %s0, %s191
      %p193 = scmp.lt.s32.totalorder %s15, 1
      %s194 = scalar_select %p193, %s15, 1
      %s195 = smul.addr %s194, 2
      %s196 = smul.addr %s195, 8
      %s197 = scalar_lea.vmem %s4, %s196
      %v199 = vld [vmem:[%s192] sm:$0xff]
      %v200 = vld [vmem:[%s192 + $0x8] sm:$0xff]
      %v201 = vpack.c.bf16 %v200, %v199
      %v202 = vld [vmem:[%s1] sm:$0xf]
      %v203 = vld [vmem:[%s1 + $0x4] sm:$0xf]
      %v204 = vld [vmem:[%s1 + $0x8] sm:$0xf]
      %v205 = vld [vmem:[%s1 + $0xc] sm:$0xf]
      %v206 = vld [vmem:[%s1 + $0x10] sm:$0xf]
      %v207 = vld [vmem:[%s1 + $0x14] sm:$0xf]
      %v208 = vld [vmem:[%s2] sm:$0x1]
      %v210 = vlaneseq
      %v211 = vshrl.u32 %v210, 7
      %v212 = vsub.s32 0, %v211
      %v213 = vrot.slane %v208, %v212
      %v221 = vunpack.c.l.b16 %v202
      %v222 = vunpack.c.l.b16 %v203
      %v223 = vunpack.c.l.b16 %v204
      %v224 = vunpack.c.l.b16 %v205
      %v225 = vunpack.c.l.b16 %v206
      %v226 = vunpack.c.l.b16 %v207
      %v227 = vpack.c.b16 %v222, %v221
      %v228 = vpack.c.b16 %v224, %v223
      %v229 = vpack.c.b16 %v226, %v225
      %vm233 = vcmask 392192
      %v235 = vsel %vm233, %v201, 0
      %237 = vmatprep.subr.bf16.mxu0 0
      %238 = vmatpush1.bf16.msra.mxu0 %v227
      %239 = vmatprep.subr.bf16.mxu0 0
      %240 = vmatpush1.bf16.msra.mxu0 %v228
      %241 = vmatprep.subr.bf16.mxu0 0
      %242 = vmatpush1.bf16.msra.mxu0 %v229
      %243 = vmatprep.subr.bf16.mxu0 0
      %244 = vmatpush1.bf16.msra.mxu0 0
      %245 = vmatprep.subr.bf16.mxu0 0
      %246 = vmatpush1.bf16.msra.mxu0 0
      %247 = vmatprep.subr.bf16.mxu0 0
      %248 = vmatpush1.bf16.msra.mxu0 0
      %249 = vmatprep.subr.bf16.mxu0 0
      %250 = vmatpush1.bf16.msra.mxu0 0
      %251 = vmatprep.subr.bf16.mxu0 0
      %252 = vmatpush1.bf16.msra.mxu0 0
      %253 = vmatprep.subr.bf16.mxu0 0
      %254 = vmatpush1.bf16.msra.mxu0 0
      %255 = vmatprep.subr.bf16.mxu0 0
      %256 = vmatpush1.bf16.msra.mxu0 0
      %257 = vmatprep.subr.bf16.mxu0 0
      %258 = vmatpush1.bf16.msra.mxu0 0
      %259 = vmatprep.subr.bf16.mxu0 0
      %260 = vmatpush1.bf16.msra.mxu0 0
      %261 = vmatprep.subr.bf16.mxu0 0
      %262 = vmatpush1.bf16.msra.mxu0 0
      %263 = vmatprep.subr.bf16.mxu0 0
      %264 = vmatpush1.bf16.msra.mxu0 0
      %265 = vmatprep.subr.bf16.mxu0 0
      %266 = vmatpush1.bf16.msra.mxu0 0
      %267 = vmatprep.subr.bf16.mxu0 0
      %268 = vmatpush1.bf16.msra.mxu0 0
      %269 = vmatprep.mubr.bf16.mxu0 0
      %270 = vmatmul.mubr.bf16.gmra.mrb[0].mxu0 %v235
      %v271 = vpop.f32.mrb[0].mxu0
      %v272 = vadd.f32 %v213, %v271
      %v273 = vpop.f32.mrb[0].mxu0
      %v274 = vpop.f32.mrb[0].mxu0
      %v275 = vadd.f32 %v213, %v274
      %v276 = vpop.f32.mrb[0].mxu0
      %277 = vdwg.mxu0
      %v278 = vld [vmem:[%s3] sm:$0xff]
      %v279 = vld [vmem:[%s3 + $0x8] sm:$0xff]
      %v280 = vadd.f32 %v272, %v278
      %v281 = vadd.f32 %v275, %v279
      %vm282 = vcmask 261120
      %283 = vst.msk [vmem:[%s197] sm:$0xff] %vm282, %v280
      %284 = vst.msk [vmem:[%s197 + $0x8] sm:$0xff] %vm282, %v281
      %p285 = scmp.lt.s32.totalorder %s15, 1
      %s286 = scalar_select %p285, %s15, 1
      %s287 = smul.addr %s286, 2
      %s288 = smul.addr %s287, 8
      %s289 = scalar_lea.vmem %s4, %s288
      // Predicated region
      $region37: #{face_encoder_forward.5} parent=35 // pred_check
        %p290 = pneg %p122
      $region38: #{face_encoder_forward.5} parent=35 // pred_check_branch
        %292 = sbr.rel (%p290) target = $region40
      $region39: #{face_encoder_forward.5} parent=35 // pred_region
        _
      $region40: #{face_encoder_forward.5} parent=35 // pred_fallthru
        _
    $region36: #{face_encoder_forward.5} parent=5 // pred_fallthru
      _
    %p293 = scmp.le.s32.totalorder 2, %s10
    // Predicated region
    $region41: #{face_encoder_forward.5} parent=5 // pred_check
      %p294 = pneg %p293
    $region42: #{face_encoder_forward.5} parent=5 // pred_check_branch
      %296 = sbr.rel (%p294) target = $region44
    $region43: #{face_encoder_forward.5} parent=5 // pred_region
      %s297 = ssub.s32 %s10, 2
      // Predicated region
      $region45: #{face_encoder_forward.5} parent=43 // pred_check
        %p298 = pneg %p128
      $region46: #{face_encoder_forward.5} parent=43 // pred_check_branch
        %300 = sbr.rel (%p298) target = $region48
      $region47: #{face_encoder_forward.5} parent=43 // pred_region
        %p301 = scmp.lt.s32.totalorder %s16, 1
        %s302 = scalar_select %p301, %s16, 1
        %s303 = smul.addr %s302, 2
        %s304 = smul.addr %s303, 8
        %s305 = scalar_lea.vmem %s4, %s304
      $region48: #{face_encoder_forward.5} parent=43 // pred_fallthru
        _
    $region44: #{face_encoder_forward.5} parent=5 // pred_fallthru
      _
  $region6: #{face_encoder_forward.5} parent=0 // loop_footer
    %s14 = sadd.s32 1, %s10
  $region7: #{face_encoder_forward.5} parent=0 // loop_footer_branch
    %9 = sbr.rel target = $region3
  $region8: #{face_encoder_forward.5} parent=0 // loop_exit
    _

// kernel: face_encoder_forward.6
$region0: #{face_encoder_forward.6}
  #allocation0 [shape = 'u32[]', space=smem, size = 0x4, offset = 0x4, fixed_abs, tag = 'smem constant byte address 0x4 - core index']
  #allocation1 [shape = 'u32[144,128]{1,0:T(1,128)}', space=vmem, size = 0x12000, scoped, tag = 'internal scratch']
  %s0 = inlined_call_operand.vmem [shape: f32[2,17,32], index: 0, kind: input, shape index: {}]
  %s1 = inlined_call_operand.vmem [shape: f32[1,32], index: 1, kind: input, shape index: {}]
  %s2 = inlined_call_operand.vmem [shape: f32[1,32], index: 2, kind: input, shape index: {}]
  %s3 = inlined_call_operand.vmem [shape: bf16[3,4,32,8], index: 3, kind: input, shape index: {}]
  %s4 = inlined_call_operand.vmem [shape: f32[3,4,1,8], index: 4, kind: input, shape index: {}]
  %s5 = inlined_call_operand.vmem [shape: bf16[4,8,32], index: 5, kind: input, shape index: {}]
  %s6 = inlined_call_operand.vmem [shape: f32[1,32], index: 6, kind: input, shape index: {}]
  %s7 = inlined_call_operand.vmem [shape: f32[2,17,32], index: 7, kind: output, shape index: {}]
  %s8 = sld [smem:[#allocation0]]
  $region61: #{face_encoder_forward.6} parent=0
    _
  %s10 = ssub.s32 1, %s8
  %s11 = scalar_select 0, %s10, %s8
  loop: start=0, step=1, limit=4
  $region2: #{face_encoder_forward.6} parent=0 // loop_pre_header
    _
  $region3: #{face_encoder_forward.6} parent=0 // loop_header
    %s13 = sphi 0, %s17
    %p14 = scmp.ge.s32.totalorder %s13, 4
    %s23 = sphi 0, %s25
    %s26 = sphi 0, %s23
    %s27 = sphi 0, %s26
    %s43 = sphi 0, %s27
    %s47 = sphi 0, %s47
    %s49 = sphi 0, %s47
    %s50 = sphi 0, %s49
    %s64 = sphi 0, %s50
    %s68 = sphi 0, %s68
    %s70 = sphi 0, %s68
    %s71 = sphi 0, %s70
    %s85 = sphi 0, %s71
    %s89 = sphi 0, %s89
    %s91 = sphi 0, %s89
    %s92 = sphi 0, %s91
    %s106 = sphi 0, %s92
    %s110 = sphi 0, %s110
    %s112 = sphi 0, %s110
    %s113 = sphi 0, %s112
    %s127 = sphi 0, %s113
    %s131 = sphi 0, %s131
    %s133 = sphi 0, %s131
    %s134 = sphi 0, %s133
    %s148 = sphi 0, %s134
    %s152 = sphi 0, %s152
    %s154 = sphi 0, %s152
    %s155 = sphi 0, %s154
    %s169 = sphi 0, %s155
    %s175 = sphi 0, %s177
    %s178 = sphi 0, %s175
    %s179 = sphi 0, %s178
    %s195 = sphi 0, %s179
  $region4: #{face_encoder_forward.6} parent=0 // loop_header_branch
    %16 = sbr.rel (%p14) target = $region8
  $region5: #{face_encoder_forward.6} parent=0 // loop_body
    %s18 = ssub.s32 %s13, 1
    %s19 = ssub.s32 %s13, 2
    %s20 = sadd.s32 %s13, 1
    %s21 = ssub.s32 %s13, %s20
    %p22 = scmp.eq.s32.totalorder %s21, 0
    %s24 = sadd.s32 %s23, 1
    %s25 = scalar_select %p22, %s23, %s24
    %p28 = pneg %p22
    %p29 = scmp.eq.s32.totalorder %s13, 1
    %p30 = por %p28, %p29
    %p31 = scmp.ne.s32.totalorder %s23, %s26
    %p32 = scmp.eq.s32.totalorder %s13, 0
    %p33 = por %p31, %p32
    %p34 = scmp.ne.s32.totalorder %s23, %s26
    %p35 = scmp.eq.s32.totalorder %s18, 1
    %p36 = por %p34, %p35
    %p37 = scmp.ne.s32.totalorder %s26, %s27
    %p38 = scmp.eq.s32.totalorder %s18, 0
    %p39 = por %p37, %p38
    %p40 = scmp.ne.s32.totalorder %s26, %s27
    %p41 = scmp.eq.s32.totalorder %s19, 1
    %p42 = por %p40, %p41
    %p44 = scmp.ne.s32.totalorder %s27, %s43
    %p45 = scmp.eq.s32.totalorder %s19, 0
    %p46 = por %p44, %p45
    %s48 = sadd.s32 %s47, 1
    %p51 = scmp.eq.s32.totalorder %s13, 1
    %p52 = scmp.ne.s32.totalorder %s47, %s49
    %p53 = scmp.eq.s32.totalorder %s13, 0
    %p54 = por %p52, %p53
    %p55 = scmp.ne.s32.totalorder %s47, %s49
    %p56 = scmp.eq.s32.totalorder %s18, 1
    %p57 = por %p55, %p56
    %p58 = scmp.ne.s32.totalorder %s49, %s50
    %p59 = scmp.eq.s32.totalorder %s18, 0
    %p60 = por %p58, %p59
    %p61 = scmp.ne.s32.totalorder %s49, %s50
    %p62 = scmp.eq.s32.totalorder %s19, 1
    %p63 = por %p61, %p62
    %p65 = scmp.ne.s32.totalorder %s50, %s64
    %p66 = scmp.eq.s32.totalorder %s19, 0
    %p67 = por %p65, %p66
    %s69 = sadd.s32 %s68, 1
    %p72 = scmp.eq.s32.totalorder %s13, 1
    %p73 = scmp.ne.s32.totalorder %s68, %s70
    %p74 = scmp.eq.s32.totalorder %s13, 0
    %p75 = por %p73, %p74
    %p76 = scmp.ne.s32.totalorder %s68, %s70
    %p77 = scmp.eq.s32.totalorder %s18, 1
    %p78 = por %p76, %p77
    %p79 = scmp.ne.s32.totalorder %s70, %s71
    %p80 = scmp.eq.s32.totalorder %s18, 0
    %p81 = por %p79, %p80
    %p82 = scmp.ne.s32.totalorder %s70, %s71
    %p83 = scmp.eq.s32.totalorder %s19, 1
    %p84 = por %p82, %p83
    %p86 = scmp.ne.s32.totalorder %s71, %s85
    %p87 = scmp.eq.s32.totalorder %s19, 0
    %p88 = por %p86, %p87
    %s90 = sadd.s32 %s89, 1
    %p93 = scmp.eq.s32.totalorder %s13, 1
    %p94 = scmp.ne.s32.totalorder %s89, %s91
    %p95 = scmp.eq.s32.totalorder %s13, 0
    %p96 = por %p94, %p95
    %p97 = scmp.ne.s32.totalorder %s89, %s91
    %p98 = scmp.eq.s32.totalorder %s18, 1
    %p99 = por %p97, %p98
    %p100 = scmp.ne.s32.totalorder %s91, %s92
    %p101 = scmp.eq.s32.totalorder %s18, 0
    %p102 = por %p100, %p101
    %p103 = scmp.ne.s32.totalorder %s91, %s92
    %p104 = scmp.eq.s32.totalorder %s19, 1
    %p105 = por %p103, %p104
    %p107 = scmp.ne.s32.totalorder %s92, %s106
    %p108 = scmp.eq.s32.totalorder %s19, 0
    %p109 = por %p107, %p108
    %s111 = sadd.s32 %s110, 1
    %p114 = scmp.eq.s32.totalorder %s13, 1
    %p115 = scmp.ne.s32.totalorder %s110, %s112
    %p116 = scmp.eq.s32.totalorder %s13, 0
    %p117 = por %p115, %p116
    %p118 = scmp.ne.s32.totalorder %s110, %s112
    %p119 = scmp.eq.s32.totalorder %s18, 1
    %p120 = por %p118, %p119
    %p121 = scmp.ne.s32.totalorder %s112, %s113
    %p122 = scmp.eq.s32.totalorder %s18, 0
    %p123 = por %p121, %p122
    %p124 = scmp.ne.s32.totalorder %s112, %s113
    %p125 = scmp.eq.s32.totalorder %s19, 1
    %p126 = por %p124, %p125
    %p128 = scmp.ne.s32.totalorder %s113, %s127
    %p129 = scmp.eq.s32.totalorder %s19, 0
    %p130 = por %p128, %p129
    %s132 = sadd.s32 %s131, 1
    %p135 = scmp.eq.s32.totalorder %s13, 1
    %p136 = scmp.ne.s32.totalorder %s131, %s133
    %p137 = scmp.eq.s32.totalorder %s13, 0
    %p138 = por %p136, %p137
    %p139 = scmp.ne.s32.totalorder %s131, %s133
    %p140 = scmp.eq.s32.totalorder %s18, 1
    %p141 = por %p139, %p140
    %p142 = scmp.ne.s32.totalorder %s133, %s134
    %p143 = scmp.eq.s32.totalorder %s18, 0
    %p144 = por %p142, %p143
    %p145 = scmp.ne.s32.totalorder %s133, %s134
    %p146 = scmp.eq.s32.totalorder %s19, 1
    %p147 = por %p145, %p146
    %p149 = scmp.ne.s32.totalorder %s134, %s148
    %p150 = scmp.eq.s32.totalorder %s19, 0
    %p151 = por %p149, %p150
    %s153 = sadd.s32 %s152, 1
    %p156 = scmp.eq.s32.totalorder %s13, 1
    %p157 = scmp.ne.s32.totalorder %s152, %s154
    %p158 = scmp.eq.s32.totalorder %s13, 0
    %p159 = por %p157, %p158
    %p160 = scmp.ne.s32.totalorder %s152, %s154
    %p161 = scmp.eq.s32.totalorder %s18, 1
    %p162 = por %p160, %p161
    %p163 = scmp.ne.s32.totalorder %s154, %s155
    %p164 = scmp.eq.s32.totalorder %s18, 0
    %p165 = por %p163, %p164
    %p166 = scmp.ne.s32.totalorder %s154, %s155
    %p167 = scmp.eq.s32.totalorder %s19, 1
    %p168 = por %p166, %p167
    %p170 = scmp.ne.s32.totalorder %s155, %s169
    %p171 = scmp.eq.s32.totalorder %s19, 0
    %p172 = por %p170, %p171
    %s173 = ssub.s32 %s13, %s20
    %p174 = scmp.eq.s32.totalorder %s173, 0
    %s176 = sadd.s32 %s175, 1
    %s177 = scalar_select %p174, %s175, %s176
    %p180 = pneg %p174
    %p181 = scmp.eq.s32.totalorder %s13, 1
    %p182 = por %p180, %p181
    %p183 = scmp.ne.s32.totalorder %s175, %s178
    %p184 = scmp.eq.s32.totalorder %s13, 0
    %p185 = por %p183, %p184
    %p186 = scmp.ne.s32.totalorder %s175, %s178
    %p187 = scmp.eq.s32.totalorder %s18, 1
    %p188 = por %p186, %p187
    %p189 = scmp.ne.s32.totalorder %s178, %s179
    %p190 = scmp.eq.s32.totalorder %s18, 0
    %p191 = por %p189, %p190
    %p192 = scmp.ne.s32.totalorder %s178, %s179
    %p193 = scmp.eq.s32.totalorder %s19, 1
    %p194 = por %p192, %p193
    %p196 = scmp.ne.s32.totalorder %s179, %s195
    %p197 = scmp.eq.s32.totalorder %s19, 0
    %p198 = por %p196, %p197
    %p199 = scmp.le.s32.totalorder 1, %s13
    %p200 = scmp.lt.s32.totalorder %s13, 3
    %p201 = pnand %p199, %p200
    %p202 = pneg %p201
    // Predicated region
    $region9: #{face_encoder_forward.6} parent=5 // pred_check
      _
    $region10: #{face_encoder_forward.6} parent=5 // pred_check_branch
      %204 = sbr.rel (%p201) target = $region12
    $region11: #{face_encoder_forward.6} parent=5 // pred_region
      %s205 = ssub.s32 %s13, 1
      // Predicated region
      $region13: #{face_encoder_forward.6} parent=11 // pred_check
        %p206 = pneg %p60
      $region14: #{face_encoder_forward.6} parent=11 // pred_check_branch
        %208 = sbr.rel (%p206) target = $region16
      $region15: #{face_encoder_forward.6} parent=11 // pred_region
        _
      $region16: #{face_encoder_forward.6} parent=11 // pred_fallthru
        _
      // Predicated region
      $region17: #{face_encoder_forward.6} parent=11 // pred_check
        %p209 = pneg %p81
      $region18: #{face_encoder_forward.6} parent=11 // pred_check_branch
        %211 = sbr.rel (%p209) target = $region20
      $region19: #{face_encoder_forward.6} parent=11 // pred_region
        _
      $region20: #{face_encoder_forward.6} parent=11 // pred_fallthru
        _
      // Predicated region
      $region21: #{face_encoder_forward.6} parent=11 // pred_check
        %p212 = pneg %p102
      $region22: #{face_encoder_forward.6} parent=11 // pred_check_branch
        %214 = sbr.rel (%p212) target = $region24
      $region23: #{face_encoder_forward.6} parent=11 // pred_region
        _
      $region24: #{face_encoder_forward.6} parent=11 // pred_fallthru
        _
      // Predicated region
      $region25: #{face_encoder_forward.6} parent=11 // pred_check
        %p215 = pneg %p123
      $region26: #{face_encoder_forward.6} parent=11 // pred_check_branch
        %217 = sbr.rel (%p215) target = $region28
      $region27: #{face_encoder_forward.6} parent=11 // pred_region
        _
      $region28: #{face_encoder_forward.6} parent=11 // pred_fallthru
        _
      // Predicated region
      $region29: #{face_encoder_forward.6} parent=11 // pred_check
        %p218 = pneg %p144
      $region30: #{face_encoder_forward.6} parent=11 // pred_check_branch
        %220 = sbr.rel (%p218) target = $region32
      $region31: #{face_encoder_forward.6} parent=11 // pred_region
        _
      $region32: #{face_encoder_forward.6} parent=11 // pred_fallthru
        _
      // Predicated region
      $region33: #{face_encoder_forward.6} parent=11 // pred_check
        %p221 = pneg %p165
      $region34: #{face_encoder_forward.6} parent=11 // pred_check_branch
        %223 = sbr.rel (%p221) target = $region36
      $region35: #{face_encoder_forward.6} parent=11 // pred_region
        _
      $region36: #{face_encoder_forward.6} parent=11 // pred_fallthru
        _
    $region12: #{face_encoder_forward.6} parent=5 // pred_fallthru
      _
    %p224 = scmp.lt.s32.totalorder %s13, 2
    // Predicated region
    $region37: #{face_encoder_forward.6} parent=5 // pred_check
      %p225 = pneg %p224
    $region38: #{face_encoder_forward.6} parent=5 // pred_check_branch
      %227 = sbr.rel (%p225) target = $region40
    $region39: #{face_encoder_forward.6} parent=5 // pred_region
      // Predicated region
      $region41: #{face_encoder_forward.6} parent=39 // pred_check
        %p228 = pneg %p33
      $region42: #{face_encoder_forward.6} parent=39 // pred_check_branch
        %230 = sbr.rel (%p228) target = $region44
      $region43: #{face_encoder_forward.6} parent=39 // pred_region
        %p231 = scmp.lt.s32.totalorder %s13, 1
        %s232 = scalar_select %p231, %s13, 1
        %s233 = smul.addr %s232, 3
        %s234 = smul.addr %s233, 8
        %s235 = scalar_lea.vmem %s0, %s234
      $region44: #{face_encoder_forward.6} parent=39 // pred_fallthru
        _
    $region40: #{face_encoder_forward.6} parent=5 // pred_fallthru
      _
    %p236 = scmp.le.s32.totalorder 1, %s13
    %p237 = scmp.lt.s32.totalorder %s13, 3
    %p238 = pnand %p236, %p237
    %p239 = pneg %p238
    // Predicated region
    $region45: #{face_encoder_forward.6} parent=5 // pred_check
      _
    $region46: #{face_encoder_forward.6} parent=5 // pred_check_branch
      %241 = sbr.rel (%p238) target = $region48
    $region47: #{face_encoder_forward.6} parent=5 // pred_region
      %s242 = ssub.s32 %s13, 1
      %p243 = scmp.lt.s32.totalorder %s18, 1
      %s244 = scalar_select %p243, %s18, 1
      %s245 = smul.addr %s244, 3
      %s246 = smul.addr %s245, 8
      %s247 = scalar_lea.vmem %s0, %s246
      %p248 = pneg %p39
      %p249 = pneg %p36
      %p250 = pneg %p60
      %p251 = pneg %p57
      %p252 = pneg %p81
      %p253 = pneg %p78
      %p254 = pneg %p102
      %p255 = pneg %p99
      %p256 = pneg %p123
      %p257 = pneg %p120
      %p258 = pneg %p144
      %p259 = pneg %p141
      %p260 = pneg %p165
      %p261 = pneg %p162
      %p262 = pneg %p191
      %p263 = pneg %p188
      %p264 = scmp.lt.s32.totalorder %s18, 1
      %s265 = scalar_select %p264, %s18, 1
      %s266 = smul.addr %s265, 3
      %s267 = smul.addr %s266, 8
      %s268 = scalar_lea.vmem %s7, %s267
      %p269 = scmp.lt.s32.totalorder %s18, 1
      %s270 = scalar_select %p269, %s18, 1
      %s271 = smul.addr %s270, 3
      %s272 = smul.addr %s271, 8
      %s273 = scalar_lea.vmem %s0, %s272
      %p274 = scmp.lt.s32.totalorder %s18, 1
      %s275 = scalar_select %p274, %s18, 1
      %s276 = smul.addr %s275, 3
      %s277 = smul.addr %s276, 8
      %s278 = scalar_lea.vmem %s7, %s277
      %v280 = vld [vmem:[%s273] sm:$0xff]
      %v281 = vld [vmem:[%s273 + $0x8] sm:$0xff]
      %v282 = vld [vmem:[%s273 + $0x10] sm:$0x1]
      %v283 = vld [vmem:[%s1] sm:$0x1]
      %v284 = vld [vmem:[%s2] sm:$0x1]
      %vm285 = vcmask 261120
      %v286 = vsel %vm285, %v280, 0.0
      %287 = vadd.xlane.f32.xlu0 %v286
      %v288 = vpop.xlane.xlu0 %287
      %v289 = vsel %vm285, %v281, 0.0
      %290 = vadd.xlane.f32.xlu0 %v289
      %v291 = vpop.xlane.xlu0 %290
      %vm292 = vcmask 253952
      %v293 = vsel %vm292, %v282, 0.0
      %294 = vadd.xlane.f32.xlu0 %v293
      %v295 = vpop.xlane.xlu0 %294
      %v296 = vrcp.pop 32.0
      %v297 = vmul.f32 %v288, %v296
      %v298 = vmul.f32 %v291, %v296
      %v299 = vmul.f32 %v295, %v296
      %v300 = vsub.f32 %v280, %v297
      %v301 = vsub.f32 %v281, %v298
      %v302 = vsub.f32 %v282, %v299
      %v303 = vmul.f32 %v300, %v300
      %v304 = vmul.f32 %v301, %v301
      %v305 = vmul.f32 %v302, %v302
      %v306 = vsel %vm285, %v303, 0.0
      %307 = vadd.xlane.f32.xlu0 %v306
      %v308 = vpop.xlane.xlu0 %307
      %v309 = vsel %vm285, %v304, 0.0
      %310 = vadd.xlane.f32.xlu0 %v309
      %v311 = vpop.xlane.xlu0 %310
      %v312 = vsel %vm292, %v305, 0.0
      %313 = vadd.xlane.f32.xlu0 %v312
      %v314 = vpop.xlane.xlu0 %313
      %v315 = vmul.f32 %v308, %v296
      %v316 = vmul.f32 %v311, %v296
      %v317 = vmul.f32 %v314, %v296
      %v318 = vadd.f32 %v315, 1e-05
      %v319 = vadd.f32 %v316, 1e-05
      %v320 = vadd.f32 %v317, 1e-05
      %v321 = vrsqrt.pop %v318
      %v322 = vrsqrt.pop %v319
      %v323 = vrsqrt.pop %v320
      %v324 = vmul.f32 %v300, %v321
      %v325 = vmul.f32 %v301, %v322
      %v326 = vmul.f32 %v302, %v323
      %v328 = vlaneseq
      %v329 = vshrl.u32 %v328, 7
      %v330 = vsub.s32 0, %v329
      %v331 = vrot.slane %v283, %v330
      %v333 = vmul.f32 %v324, %v331
      %v334 = vmul.f32 %v325, %v331
      %v335 = vmul.f32 %v326, %v331
      %v337 = vlaneseq
      %v338 = vshrl.u32 %v337, 7
      %v339 = vsub.s32 0, %v338
      %v340 = vrot.slane %v284, %v339
      %v342 = vadd.f32 %v333, %v340
      %v343 = vadd.f32 %v334, %v340
      %v344 = vadd.f32 %v335, %v340
      %v345 = vpack.c.bf16 %v343, %v342
      %v346 = vpack.c.bf16 %v344, %v344
      %v347 = vld [vmem:[%s3] sm:$0xf]
      %v348 = vld [vmem:[%s3 + $0x4] sm:$0xf]
      %v349 = vld [vmem:[%s3 + $0x8] sm:$0xf]
      %v350 = vld [vmem:[%s3 + $0xc] sm:$0xf]
      %v351 = vld [vmem:[%s4] sm:$0x1]
      %v353 = vlaneseq
      %v354 = vshrl.u32 %v353, 7
      %v355 = vsub.s32 0, %v354
      %v356 = vrot.slane %v351, %v355
      %v362 = vunpack.c.l.b16 %v347
      %v363 = vunpack.c.l.b16 %v348
      %v364 = vunpack.c.l.b16 %v349
      %v365 = vunpack.c.l.b16 %v350
      %v366 = vpack.c.b16 %v363, %v362
      %v367 = vpack.c.b16 %v365, %v364
      %v371 = vsel %vm285, %v345, 0
      %v374 = vsel %vm285, %v346, 0
      %376 = vmatprep.subr.bf16.mxu0 0
      %377 = vmatpush1.bf16.msra.mxu0 %v366
      %378 = vmatprep.subr.bf16.mxu0 0
      %379 = vmatpush1.bf16.msra.mxu0 %v367
      %380 = vmatprep.subr.bf16.mxu0 0
      %381 = vmatpush1.bf16.msra.mxu0 0
      %382 = vmatprep.subr.bf16.mxu0 0
      %383 = vmatpush1.bf16.msra.mxu0 0
      %384 = vmatprep.subr.bf16.mxu0 0
      %385 = vmatpush1.bf16.msra.mxu0 0
      %386 = vmatprep.subr.bf16.mxu0 0
      %387 = vmatpush1.bf16.msra.mxu0 0
      %388 = vmatprep.subr.bf16.mxu0 0
      %389 = vmatpush1.bf16.msra.mxu0 0
      %390 = vmatprep.subr.bf16.mxu0 0
      %391 = vmatpush1.bf16.msra.mxu0 0
      %392 = vmatprep.subr.bf16.mxu0 0
      %393 = vmatpush1.bf16.msra.mxu0 0
      %394 = vmatprep.subr.bf16.mxu0 0
      %395 = vmatpush1.bf16.msra.mxu0 0
      %396 = vmatprep.subr.bf16.mxu0 0
      %397 = vmatpush1.bf16.msra.mxu0 0
      %398 = vmatprep.subr.bf16.mxu0 0
      %399 = vmatpush1.bf16.msra.mxu0 0
      %400 = vmatprep.subr.bf16.mxu0 0
      %401 = vmatpush1.bf16.msra.mxu0 0
      %402 = vmatprep.subr.bf16.mxu0 0
      %403 = vmatpush1.bf16.msra.mxu0 0
      %404 = vmatprep.subr.bf16.mxu0 0
      %405 = vmatpush1.bf16.msra.mxu0 0
      %406 = vmatprep.subr.bf16.mxu0 0
      %407 = vmatpush1.bf16.msra.mxu0 0
      %408 = vmatprep.mubr.bf16.mxu0 0
      %409 = vmatmul.mubr.bf16.gmra.mrb[0].mxu0 %v371
      %v410 = vpop.f32.mrb[0].mxu0
      %v411 = vadd.f32 %v356, %v410
      %v412 = vpop.f32.mrb[0].mxu0
      %v413 = vpop.f32.mrb[0].mxu0
      %v414 = vadd.f32 %v356, %v413
      %v415 = vpop.f32.mrb[0].mxu0
      %416 = vmatprep.mubr.bf16.mxu0 0
      %417 = vmatmul.mubr.bf16.gmra.mrb[0].mxu0 %v374
      %v418 = vpop.f32.mrb[0].mxu0
      %v419 = vadd.f32 %v356, %v418
      %v420 = vpop.f32.mrb[0].mxu0
      %v421 = vpop.f32.mrb[0].mxu0
      %v422 = vpop.f32.mrb[0].mxu0
      %423 = vdwg.mxu0
      %s424 = scalar_lea.vmem %s3, 64
      %v425 = vld [vmem:[%s424] sm:$0xf]
      %v426 = vld [vmem:[%s424 + $0x4] sm:$0xf]
      %v427 = vld [vmem:[%s424 + $0x8] sm:$0xf]
      %v428 = vld [vmem:[%s424 + $0xc] sm:$0xf]
      %s429 = scalar_lea.vmem %s4, 4
      %v430 = vld [vmem:[%s429] sm:$0x1]
      %v432 = vlaneseq
      %v433 = vshrl.u32 %v432, 7
      %v434 = vsub.s32 0, %v433
      %v435 = vrot.slane %v430, %v434
      %v441 = vunpack.c.l.b16 %v425
      %v442 = vunpack.c.l.b16 %v426
      %v443 = vunpack.c.l.b16 %v427
      %v444 = vunpack.c.l.b16 %v428
      %v445 = vpack.c.b16 %v442, %v441
      %v446 = vpack.c.b16 %v444, %v443
      %449 = vmatprep.subr.bf16.mxu0 0
      %450 = vmatpush1.bf16.msra.mxu0 %v445
      %451 = vmatprep.subr.bf16.mxu0 0
      %452 = vmatpush1.bf16.msra.mxu0 %v446
      %453 = vmatprep.subr.bf16.mxu0 0
      %454 = vmatpush1.bf16.msra.mxu0 0
      %455 = vmatprep.subr.bf16.mxu0 0
      %456 = vmatpush1.bf16.msra.mxu0 0
      %457 = vmatprep.subr.bf16.mxu0 0
      %458 = vmatpush1.bf16.msra.mxu0 0
      %459 = vmatprep.subr.bf16.mxu0 0
      %460 = vmatpush1.bf16.msra.mxu0 0
      %461 = vmatprep.subr.bf16.mxu0 0
      %462 = vmatpush1.bf16.msra.mxu0 0
      %463 = vmatprep.subr.bf16.mxu0 0
      %464 = vmatpush1.bf16.msra.mxu0 0
      %465 = vmatprep.subr.bf16.mxu0 0
      %466 = vmatpush1.bf16.msra.mxu0 0
      %467 = vmatprep.subr.bf16.mxu0 0
      %468 = vmatpush1.bf16.msra.mxu0 0
      %469 = vmatprep.subr.bf16.mxu0 0
      %470 = vmatpush1.bf16.msra.mxu0 0
      %471 = vmatprep.subr.bf16.mxu0 0
      %472 = vmatpush1.bf16.msra.mxu0 0
      %473 = vmatprep.subr.bf16.mxu0 0
      %474 = vmatpush1.bf16.msra.mxu0 0
      %475 = vmatprep.subr.bf16.mxu0 0
      %476 = vmatpush1.bf16.msra.mxu0 0
      %477 = vmatprep.subr.bf16.mxu0 0
      %478 = vmatpush1.bf16.msra.mxu0 0
      %479 = vmatprep.subr.bf16.mxu0 0
      %480 = vmatpush1.bf16.msra.mxu0 0
      %481 = vmatprep.mubr.bf16.mxu0 0
      %482 = vmatmul.mubr.bf16.gmra.mrb[0].mxu0 %v371
      %v483 = vpop.f32.mrb[0].mxu0
      %v484 = vadd.f32 %v435, %v483
      %v485 = vpop.f32.mrb[0].mxu0
      %v486 = vpop.f32.mrb[0].mxu0
      %v487 = vadd.f32 %v435, %v486
      %v488 = vpop.f32.mrb[0].mxu0
      %489 = vmatprep.mubr.bf16.mxu0 0
      %490 = vmatmul.mubr.bf16.gmra.mrb[0].mxu0 %v374
      %v491 = vpop.f32.mrb[0].mxu0
      %v492 = vadd.f32 %v435, %v491
      %v493 = vpop.f32.mrb[0].mxu0
      %v494 = vpop.f32.mrb[0].mxu0
      %v495 = vpop.f32.mrb[0].mxu0
      %496 = vdwg.mxu0
      %s497 = scalar_lea.vmem %s3, 128
      %v498 = vld [vmem:[%s497] sm:$0xf]
      %v499 = vld [vmem:[%s497 + $0x4] sm:$0xf]
      %v500 = vld [vmem:[%s497 + $0x8] sm:$0xf]
      %v501 = vld [vmem:[%s497 + $0xc] sm:$0xf]
      %s502 = scalar_lea.vmem %s4, 8
      %v503 = vld [vmem:[%s502] sm:$0x1]
      %v505 = vlaneseq
      %v506 = vshrl.u32 %v505, 7
      %v507 = vsub.s32 0, %v506
      %v508 = vrot.slane %v503, %v507
      %v514 = vunpack.c.l.b16 %v498
      %v515 = vunpack.c.l.b16 %v499
      %v516 = vunpack.c.l.b16 %v500
      %v517 = vunpack.c.l.b16 %v501
      %v518 = vpack.c.b16 %v515, %v514
      %v519 = vpack.c.b16 %v517, %v516
      %522 = vmatprep.subr.bf16.mxu0 0
      %523 = vmatpush1.bf16.msra.mxu0 %v518
      %524 = vmatprep.subr.bf16.mxu0 0
      %525 = vmatpush1.bf16.msra.mxu0 %v519
      %526 = vmatprep.subr.bf16.mxu0 0
      %527 = vmatpush1.bf16.msra.mxu0 0
      %528 = vmatprep.subr.bf16.mxu0 0
      %529 = vmatpush1.bf16.msra.mxu0 0
      %530 = vmatprep.subr.bf16.mxu0 0
      %531 = vmatpush1.bf16.msra.mxu0 0
      %532 = vmatprep.subr.bf16.mxu0 0
      %533 = vmatpush1.bf16.msra.mxu0 0
      %534 = vmatprep.subr.bf16.mxu0 0
      %535 = vmatpush1.bf16.msra.mxu0 0
      %536 = vmatprep.subr.bf16.mxu0 0
      %537 = vmatpush1.bf16.msra.mxu0 0
      %538 = vmatprep.subr.bf16.mxu0 0
      %539 = vmatpush1.bf16.msra.mxu0 0
      %540 = vmatprep.subr.bf16.mxu0 0
      %541 = vmatpush1.bf16.msra.mxu0 0
      %542 = vmatprep.subr.bf16.mxu0 0
      %543 = vmatpush1.bf16.msra.mxu0 0
      %544 = vmatprep.subr.bf16.mxu0 0
      %545 = vmatpush1.bf16.msra.mxu0 0
      %546 = vmatprep.subr.bf16.mxu0 0
      %547 = vmatpush1.bf16.msra.mxu0 0
      %548 = vmatprep.subr.bf16.mxu0 0
      %549 = vmatpush1.bf16.msra.mxu0 0
      %550 = vmatprep.subr.bf16.mxu0 0
      %551 = vmatpush1.bf16.msra.mxu0 0
      %552 = vmatprep.subr.bf16.mxu0 0
      %553 = vmatpush1.bf16.msra.mxu0 0
      %554 = vmatprep.mubr.bf16.mxu0 0
      %555 = vmatmul.mubr.bf16.gmra.mrb[0].mxu0 %v371
      %v556 = vpop.f32.mrb[0].mxu0
      %v557 = vadd.f32 %v508, %v556
      %v558 = vpop.f32.mrb[0].mxu0
      %v559 = vpop.f32.mrb[0].mxu0
      %v560 = vadd.f32 %v508, %v559
      %v561 = vpop.f32.mrb[0].mxu0
      %562 = vmatprep.mubr.bf16.mxu0 0
      %563 = vmatmul.mubr.bf16.gmra.mrb[0].mxu0 %v374
      %v564 = vpop.f32.mrb[0].mxu0
      %v565 = vadd.f32 %v508, %v564
      %v566 = vpop.f32.mrb[0].mxu0
      %v567 = vpop.f32.mrb[0].mxu0
      %v568 = vpop.f32.mrb[0].mxu0
      %569 = vdwg.mxu0
      %v570 = vmul.f32 %v411, 0.35355338
      %v571 = vmul.f32 %v414, 0.35355338
      %v572 = vmul.f32 %v419, 0.35355338
      %v573 = vpack.c.bf16 %v571, %v570
      %v574 = vpack.c.bf16 %v572, %v572
      %v575 = vpack.c.bf16 %v487, %v484
      %v576 = vpack.c.bf16 %v492, %v492
      %vm577 = vcmask 64512
      %v579 = vsel %vm577, %v573, 0
      %v582 = vsel %vm577, %v574, 0
      %v585 = vsel %vm577, %v575, 0
      %v588 = vsel %vm577, %v576, 0
      %590 = vmatprep.subr.bf16.mxu0 0
      %591 = vmatpush1.bf16.xpose.msra.mxu0 %v585
      %592 = vmatprep.subr.bf16.mxu0 0
      %593 = vmatpush1.bf16.xpose.msra.mxu0 %v588
      %594 = vmatprep.subr.bf16.mxu0 0
      %595 = vmatpush1.bf16.xpose.msra.mxu0 0
      %596 = vmatprep.subr.bf16.mxu0 0
      %597 = vmatpush1.bf16.xpose.msra.mxu0 0
      %598 = vmatprep.subr.bf16.mxu0 0
      %599 = vmatpush1.bf16.xpose.msra.mxu0 0
      %600 = vmatprep.subr.bf16.mxu0 0
      %601 = vmatpush1.bf16.xpose.msra.mxu0 0
      %602 = vmatprep.subr.bf16.mxu0 0
      %603 = vmatpush1.bf16.xpose.msra.mxu0 0
      %604 = vmatprep.subr.bf16.mxu0 0
      %605 = vmatpush1.bf16.xpose.msra.mxu0 0
      %606 = vmatprep.subr.bf16.mxu0 0
      %607 = vmatpush1.bf16.xpose.msra.mxu0 0
      %608 = vmatprep.subr.bf16.mxu0 0
      %609 = vmatpush1.bf16.xpose.msra.mxu0 0
      %610 = vmatprep.subr.bf16.mxu0 0
      %611 = vmatpush1.bf16.xpose.msra.mxu0 0
      %612 = vmatprep.subr.bf16.mxu0 0
      %613 = vmatpush1.bf16.xpose.msra.mxu0 0
      %614 = vmatprep.subr.bf16.mxu0 0
      %615 = vmatpush1.bf16.xpose.msra.mxu0 0
      %616 = vmatprep.subr.bf16.mxu0 0
      %617 = vmatpush1.bf16.xpose.msra.mxu0 0
      %618 = vmatprep.subr.bf16.mxu0 0
      %619 = vmatpush1.bf16.xpose.msra.mxu0 0
      %620 = vmatprep.subr.bf16.mxu0 0
      %621 = vmatpush1.bf16.xpose.msra.mxu0 0
      %622 = vmatprep.mubr.bf16.mxu0 0
      %623 = vmatmul.mubr.bf16.gmra.mrb[0].mxu0 %v579
      %v624 = vpop.f32.mrb[0].mxu0
      %v625 = vadd.f32 0.0, %v624
      %v626 = vpop.f32.mrb[0].mxu0
      %v627 = vpop.f32.mrb[0].mxu0
      %v628 = vadd.f32 0.0, %v627
      %v629 = vpop.f32.mrb[0].mxu0
      %630 = vmatprep.mubr.bf16.mxu0 0
      %631 = vmatmul.mubr.bf16.gmra.mrb[0].mxu0 %v582
      %v632 = vpop.f32.mrb[0].mxu0
      %v633 = vadd.f32 0.0, %v632
      %v634 = vpop.f32.mrb[0].mxu0
      %v635 = vpop.f32.mrb[0].mxu0
      %v636 = vpop.f32.mrb[0].mxu0
      %637 = vdwg.mxu0
      %vm638 = vcmask 138240
      %v639 = vsel %vm638, %v625, -inf
      %640 = vmax.xlane.f32.xlu0 %v639
      %v641 = vpop.xlane.xlu0 %640
      %v642 = vsel %vm638, %v628, -inf
      %643 = vmax.xlane.f32.xlu0 %v642
      %v644 = vpop.xlane.xlu0 %643
      %vm645 = vcmask 131072
      %v646 = vsel %vm645, %v633, -inf
      %647 = vmax.xlane.f32.xlu0 %v646
      %v648 = vpop.xlane.xlu0 %647
      %v649 = vsub.f32 %v625, %v641
      %v650 = vsub.f32 %v628, %v644
      %v651 = vsub.f32 %v633, %v648
      %v652 = vmul.f32 %v649, 1.442695
      %v653 = vpow.pop %v652
      %v654 = vmul.f32 %v650, 1.442695
      %v655 = vpow.pop %v654
      %v656 = vmul.f32 %v651, 1.442695
      %v657 = vpow.pop %v656
      %v658 = vsel %vm638, %v653, 0.0
      %659 = vadd.xlane.f32.xlu0 %v658
      %v660 = vpop.xlane.xlu0 %659
      %v661 = vsel %vm638, %v655, 0.0
      %662 = vadd.xlane.f32.xlu0 %v661
      %v663 = vpop.xlane.xlu0 %662
      %v664 = vsel %vm645, %v657, 0.0
      %665 = vadd.xlane.f32.xlu0 %v664
      %v666 = vpop.xlane.xlu0 %665
      %v667 = vrcp.pop %v660
      %v668 = vrcp.pop %v663
      %v669 = vrcp.pop %v666
      %v670 = vmul.f32 %v653, %v667
      %v671 = vmul.f32 %v655, %v668
      %v672 = vmul.f32 %v657, %v669
      %v673 = vpack.c.bf16 %v671, %v670
      %v674 = vpack.c.bf16 %v672, %v672
      %v675 = vpack.c.bf16 %v560, %v557
      %v676 = vpack.c.bf16 %v565, %v565
      %v678 = vsel %vm638, %v673, 0
      %v681 = vsel %vm638, %v674, 0
      %vm683 = vcmask 1040384
      %v684 = vsel 0, 4294967295, 65535
      %v685 = vsel %vm683, %v684, 0
      %v687 = vand.u32 %v676, %v685
      %689 = vmatprep.subr.bf16.mxu0 0
      %690 = vmatpush1.bf16.msra.mxu0 %v675
      %691 = vmatprep.subr.bf16.mxu0 0
      %692 = vmatpush1.bf16.msra.mxu0 %v687
      %693 = vmatprep.subr.bf16.mxu0 0
      %694 = vmatpush1.bf16.msra.mxu0 0
      %695 = vmatprep.subr.bf16.mxu0 0
      %696 = vmatpush1.bf16.msra.mxu0 0
      %697 = vmatprep.subr.bf16.mxu0 0
      %698 = vmatpush1.bf16.msra.mxu0 0
      %699 = vmatprep.subr.bf16.mxu0 0
      %700 = vmatpush1.bf16.msra.mxu0 0
      %701 = vmatprep.subr.bf16.mxu0 0
      %702 = vmatpush1.bf16.msra.mxu0 0
      %703 = vmatprep.subr.bf16.mxu0 0
      %704 = vmatpush1.bf16.msra.mxu0 0
      %705 = vmatprep.subr.bf16.mxu0 0
      %706 = vmatpush1.bf16.msra.mxu0 0
      %707 = vmatprep.subr.bf16.mxu0 0
      %708 = vmatpush1.bf16.msra.mxu0 0
      %709 = vmatprep.subr.bf16.mxu0 0
      %710 = vmatpush1.bf16.msra.mxu0 0
      %711 = vmatprep.subr.bf16.mxu0 0
      %712 = vmatpush1.bf16.msra.mxu0 0
      %713 = vmatprep.subr.bf16.mxu0 0
      %714 = vmatpush1.bf16.msra.mxu0 0
      %715 = vmatprep.subr.bf16.mxu0 0
      %716 = vmatpush1.bf16.msra.mxu0 0
      %717 = vmatprep.subr.bf16.mxu0 0
      %718 = vmatpush1.bf16.msra.mxu0 0
      %719 = vmatprep.subr.bf16.mxu0 0
      %720 = vmatpush1.bf16.msra.mxu0 0
      %721 = vmatprep.mubr.bf16.mxu0 0
      %722 = vmatmul.mubr.bf16.gmra.mrb[0].mxu0 %v678
      %v723 = vpop.f32.mrb[0].mxu0
      %v724 = vadd.f32 0.0, %v723
      %v725 = vpop.f32.mrb[0].mxu0
      %v726 = vpop.f32.mrb[0].mxu0
      %v727 = vadd.f32 0.0, %v726
      %v728 = vpop.f32.mrb[0].mxu0
      %729 = vmatprep.mubr.bf16.mxu0 0
      %730 = vmatmul.mubr.bf16.gmra.mrb[0].mxu0 %v681
      %v731 = vpop.f32.mrb[0].mxu0
      %v732 = vadd.f32 0.0, %v731
      %v733 = vpop.f32.mrb[0].mxu0
      %v734 = vpop.f32.mrb[0].mxu0
      %v735 = vpop.f32.mrb[0].mxu0
      %736 = vdwg.mxu0
      %v737 = vpack.c.bf16 %v727, %v724
      %v738 = vpack.c.bf16 %v732, %v732
      %v739 = vld [vmem:[%s5] sm:$0xf]
      %s740 = scalar_lea.vmem %s3, 16
      %v741 = vld [vmem:[%s740] sm:$0xf]
      %v742 = vld [vmem:[%s740 + $0x4] sm:$0xf]
      %v743 = vld [vmem:[%s740 + $0x8] sm:$0xf]
      %v744 = vld [vmem:[%s740 + $0xc] sm:$0xf]
      %s745 = scalar_lea.vmem %s4, 1
      %v746 = vld [vmem:[%s745] sm:$0x1]
      %v748 = vlaneseq
      %v749 = vshrl.u32 %v748, 7
      %v750 = vsub.s32 0, %v749
      %v751 = vrot.slane %v746, %v750
      %v757 = vunpack.c.l.b16 %v741
      %v758 = vunpack.c.l.b16 %v742
      %v759 = vunpack.c.l.b16 %v743
      %v760 = vunpack.c.l.b16 %v744
      %v761 = vpack.c.b16 %v758, %v757
      %v762 = vpack.c.b16 %v760, %v759
      %765 = vmatprep.subr.bf16.mxu0 0
      %766 = vmatpush1.bf16.msra.mxu0 %v761
      %767 = vmatprep.subr.bf16.mxu0 0
      %768 = vmatpush1.bf16.msra.mxu0 %v762
      %769 = vmatprep.subr.bf16.mxu0 0
      %770 = vmatpush1.bf16.msra.mxu0 0
      %771 = vmatprep.subr.bf16.mxu0 0
      %772 = vmatpush1.bf16.msra.mxu0 0
      %773 = vmatprep.subr.bf16.mxu0 0
      %774 = vmatpush1.bf16.msra.mxu0 0
      %775 = vmatprep.subr.bf16.mxu0 0
      %776 = vmatpush1.bf16.msra.mxu0 0
      %777 = vmatprep.subr.bf16.mxu0 0
      %778 = vmatpush1.bf16.msra.mxu0 0
      %779 = vmatprep.subr.bf16.mxu0 0
      %780 = vmatpush1.bf16.msra.mxu0 0
      %781 = vmatprep.subr.bf16.mxu0 0
      %782 = vmatpush1.bf16.msra.mxu0 0
      %783 = vmatprep.subr.bf16.mxu0 0
      %784 = vmatpush1.bf16.msra.mxu0 0
      %785 = vmatprep.subr.bf16.mxu0 0
      %786 = vmatpush1.bf16.msra.mxu0 0
      %787 = vmatprep.subr.bf16.mxu0 0
      %788 = vmatpush1.bf16.msra.mxu0 0
      %789 = vmatprep.subr.bf16.mxu0 0
      %790 = vmatpush1.bf16.msra.mxu0 0
      %791 = vmatprep.subr.bf16.mxu0 0
      %792 = vmatpush1.bf16.msra.mxu0 0
      %793 = vmatprep.subr.bf16.mxu0 0
      %794 = vmatpush1.bf16.msra.mxu0 0
      %795 = vmatprep.subr.bf16.mxu0 0
      %796 = vmatpush1.bf16.msra.mxu0 0
      %797 = vmatprep.mubr.bf16.mxu0 0
      %798 = vmatmul.mubr.bf16.gmra.mrb[0].mxu0 %v371
      %v799 = vpop.f32.mrb[0].mxu0
      %v800 = vadd.f32 %v751, %v799
      %v801 = vpop.f32.mrb[0].mxu0
      %v802 = vpop.f32.mrb[0].mxu0
      %v803 = vadd.f32 %v751, %v802
      %v804 = vpop.f32.mrb[0].mxu0
      %805 = vmatprep.mubr.bf16.mxu0 0
      %806 = vmatmul.mubr.bf16.gmra.mrb[0].mxu0 %v374
      %v807 = vpop.f32.mrb[0].mxu0
      %v808 = vadd.f32 %v751, %v807
      %v809 = vpop.f32.mrb[0].mxu0
      %v810 = vpop.f32.mrb[0].mxu0
      %v811 = vpop.f32.mrb[0].mxu0
      %812 = vdwg.mxu0
      %s813 = scalar_lea.vmem %s3, 80
      %v814 = vld [vmem:[%s813] sm:$0xf]
      %v815 = vld [vmem:[%s813 + $0x4] sm:$0xf]
      %v816 = vld [vmem:[%s813 + $0x8] sm:$0xf]
      %v817 = vld [vmem:[%s813 + $0xc] sm:$0xf]
      %s818 = scalar_lea.vmem %s4, 5
      %v819 = vld [vmem:[%s818] sm:$0x1]
      %v821 = vlaneseq
      %v822 = vshrl.u32 %v821, 7
      %v823 = vsub.s32 0, %v822
      %v824 = vrot.slane %v819, %v823
      %v830 = vunpack.c.l.b16 %v814
      %v831 = vunpack.c.l.b16 %v815
      %v832 = vunpack.c.l.b16 %v816
      %v833 = vunpack.c.l.b16 %v817
      %v834 = vpack.c.b16 %v831, %v830
      %v835 = vpack.c.b16 %v833, %v832
      %838 = vmatprep.subr.bf16.mxu0 0
      %839 = vmatpush1.bf16.msra.mxu0 %v834
      %840 = vmatprep.subr.bf16.mxu0 0
      %841 = vmatpush1.bf16.msra.mxu0 %v835
      %842 = vmatprep.subr.bf16.mxu0 0
      %843 = vmatpush1.bf16.msra.mxu0 0
      %844 = vmatprep.subr.bf16.mxu0 0
      %845 = vmatpush1.bf16.msra.mxu0 0
      %846 = vmatprep.subr.bf16.mxu0 0
      %847 = vmatpush1.bf16.msra.mxu0 0
      %848 = vmatprep.subr.bf16.mxu0 0
      %849 = vmatpush1.bf16.msra.mxu0 0
      %850 = vmatprep.subr.bf16.mxu0 0
      %851 = vmatpush1.bf16.msra.mxu0 0
      %852 = vmatprep.subr.bf16.mxu0 0
      %853 = vmatpush1.bf16.msra.mxu0 0
      %854 = vmatprep.subr.bf16.mxu0 0
      %855 = vmatpush1.bf16.msra.mxu0 0
      %856 = vmatprep.subr.bf16.mxu0 0
      %857 = vmatpush1.bf16.msra.mxu0 0
      %858 = vmatprep.subr.bf16.mxu0 0
      %859 = vmatpush1.bf16.msra.mxu0 0
      %860 = vmatprep.subr.bf16.mxu0 0
      %861 = vmatpush1.bf16.msra.mxu0 0
      %862 = vmatprep.subr.bf16.mxu0 0
      %863 = vmatpush1.bf16.msra.mxu0 0
      %864 = vmatprep.subr.bf16.mxu0 0
      %865 = vmatpush1.bf16.msra.mxu0 0
      %866 = vmatprep.subr.bf16.mxu0 0
      %867 = vmatpush1.bf16.msra.mxu0 0
      %868 = vmatprep.subr.bf16.mxu0 0
      %869 = vmatpush1.bf16.msra.mxu0 0
      %870 = vmatprep.mubr.bf16.mxu0 0
      %871 = vmatmul.mubr.bf16.gmra.mrb[0].mxu0 %v371
      %v872 = vpop.f32.mrb[0].mxu0
      %v873 = vadd.f32 %v824, %v872
      %v874 = vpop.f32.mrb[0].mxu0
      %v875 = vpop.f32.mrb[0].mxu0
      %v876 = vadd.f32 %v824, %v875
      %v877 = vpop.f32.mrb[0].mxu0
      %878 = vmatprep.mubr.bf16.mxu0 0
      %879 = vmatmul.mubr.bf16.gmra.mrb[0].mxu0 %v374
      %v880 = vpop.f32.mrb[0].mxu0
      %v881 = vadd.f32 %v824, %v880
      %v882 = vpop.f32.mrb[0].mxu0
      %v883 = vpop.f32.mrb[0].mxu0
      %v884 = vpop.f32.mrb[0].mxu0
      %885 = vdwg.mxu0
      %s886 = scalar_lea.vmem %s3, 144
      %v887 = vld [vmem:[%s886] sm:$0xf]
      %v888 = vld [vmem:[%s886 + $0x4] sm:$0xf]
      %v889 = vld [vmem:[%s886 + $0x8] sm:$0xf]
      %v890 = vld [vmem:[%s886 + $0xc] sm:$0xf]
      %s891 = scalar_lea.vmem %s4, 9
      %v892 = vld [vmem:[%s891] sm:$0x1]
      %v894 = vlaneseq
      %v895 = vshrl.u32 %v894, 7
      %v896 = vsub.s32 0, %v895
      %v897 = vrot.slane %v892, %v896
      %v903 = vunpack.c.l.b16 %v887
      %v904 = vunpack.c.l.b16 %v888
      %v905 = vunpack.c.l.b16 %v889
      %v906 = vunpack.c.l.b16 %v890
      %v907 = vpack.c.b16 %v904, %v903
      %v908 = vpack.c.b16 %v906, %v905
      %911 = vmatprep.subr.bf16.mxu0 0
      %912 = vmatpush1.bf16.msra.mxu0 %v907
      %913 = vmatprep.subr.bf16.mxu0 0
      %914 = vmatpush1.bf16.msra.mxu0 %v908
      %915 = vmatprep.subr.bf16.mxu0 0
      %916 = vmatpush1.bf16.msra.mxu0 0
      %917 = vmatprep.subr.bf16.mxu0 0
      %918 = vmatpush1.bf16.msra.mxu0 0
      %919 = vmatprep.subr.bf16.mxu0 0
      %920 = vmatpush1.bf16.msra.mxu0 0
      %921 = vmatprep.subr.bf16.mxu0 0
      %922 = vmatpush1.bf16.msra.mxu0 0
      %923 = vmatprep.subr.bf16.mxu0 0
      %924 = vmatpush1.bf16.msra.mxu0 0
      %925 = vmatprep.subr.bf16.mxu0 0
      %926 = vmatpush1.bf16.msra.mxu0 0
      %927 = vmatprep.subr.bf16.mxu0 0
      %928 = vmatpush1.bf16.msra.mxu0 0
      %929 = vmatprep.subr.bf16.mxu0 0
      %930 = vmatpush1.bf16.msra.mxu0 0
      %931 = vmatprep.subr.bf16.mxu0 0
      %932 = vmatpush1.bf16.msra.mxu0 0
      %933 = vmatprep.subr.bf16.mxu0 0
      %934 = vmatpush1.bf16.msra.mxu0 0
      %935 = vmatprep.subr.bf16.mxu0 0
      %936 = vmatpush1.bf16.msra.mxu0 0
      %937 = vmatprep.subr.bf16.mxu0 0
      %938 = vmatpush1.bf16.msra.mxu0 0
      %939 = vmatprep.subr.bf16.mxu0 0
      %940 = vmatpush1.bf16.msra.mxu0 0
      %941 = vmatprep.subr.bf16.mxu0 0
      %942 = vmatpush1.bf16.msra.mxu0 0
      %943 = vmatprep.mubr.bf16.mxu0 0
      %944 = vmatmul.mubr.bf16.gmra.mrb[0].mxu0 %v371
      %v945 = vpop.f32.mrb[0].mxu0
      %v946 = vadd.f32 %v897, %v945
      %v947 = vpop.f32.mrb[0].mxu0
      %v948 = vpop.f32.mrb[0].mxu0
      %v949 = vadd.f32 %v897, %v948
      %v950 = vpop.f32.mrb[0].mxu0
      %951 = vmatprep.mubr.bf16.mxu0 0
      %952 = vmatmul.mubr.bf16.gmra.mrb[0].mxu0 %v374
      %v953 = vpop.f32.mrb[0].mxu0
      %v954 = vadd.f32 %v897, %v953
      %v955 = vpop.f32.mrb[0].mxu0
      %v956 = vpop.f32.mrb[0].mxu0
      %v957 = vpop.f32.mrb[0].mxu0
      %958 = vdwg.mxu0
      %v959 = vmul.f32 %v800, 0.35355338
      %v960 = vmul.f32 %v803, 0.35355338
      %v961 = vmul.f32 %v808, 0.35355338
      %v962 = vpack.c.bf16 %v960, %v959
      %v963 = vpack.c.bf16 %v961, %v961
      %v964 = vpack.c.bf16 %v876, %v873
      %v965 = vpack.c.bf16 %v881, %v881
      %v967 = vsel %vm577, %v962, 0
      %v970 = vsel %vm577, %v963, 0
      %v973 = vsel %vm577, %v964, 0
      %v976 = vsel %vm577, %v965, 0
      %978 = vmatprep.subr.bf16.mxu0 0
      %979 = vmatpush1.bf16.xpose.msra.mxu0 %v973
      %980 = vmatprep.subr.bf16.mxu0 0
      %981 = vmatpush1.bf16.xpose.msra.mxu0 %v976
      %982 = vmatprep.subr.bf16.mxu0 0
      %983 = vmatpush1.bf16.xpose.msra.mxu0 0
      %984 = vmatprep.subr.bf16.mxu0 0
      %985 = vmatpush1.bf16.xpose.msra.mxu0 0
      %986 = vmatprep.subr.bf16.mxu0 0
      %987 = vmatpush1.bf16.xpose.msra.mxu0 0
      %988 = vmatprep.subr.bf16.mxu0 0
      %989 = vmatpush1.bf16.xpose.msra.mxu0 0
      %990 = vmatprep.subr.bf16.mxu0 0
      %991 = vmatpush1.bf16.xpose.msra.mxu0 0
      %992 = vmatprep.subr.bf16.mxu0 0
      %993 = vmatpush1.bf16.xpose.msra.mxu0 0
      %994 = vmatprep.subr.bf16.mxu0 0
      %995 = vmatpush1.bf16.xpose.msra.mxu0 0
      %996 = vmatprep.subr.bf16.mxu0 0
      %997 = vmatpush1.bf16.xpose.msra.mxu0 0
      %998 = vmatprep.subr.bf16.mxu0 0
      %999 = vmatpush1.bf16.xpose.msra.mxu0 0
      %1000 = vmatprep.subr.bf16.mxu0 0
      %1001 = vmatpush1.bf16.xpose.msra.mxu0 0
      %1002 = vmatprep.subr.bf16.mxu0 0
      %1003 = vmatpush1.bf16.xpose.msra.mxu0 0
      %1004 = vmatprep.subr.bf16.mxu0 0
      %1005 = vmatpush1.bf16.xpose.msra.mxu0 0
      %1006 = vmatprep.subr.bf16.mxu0 0
      %1007 = vmatpush1.bf16.xpose.msra.mxu0 0
      %1008 = vmatprep.subr.bf16.mxu0 0
      %1009 = vmatpush1.bf16.xpose.msra.mxu0 0
      %1010 = vmatprep.mubr.bf16.mxu0 0
      %1011 = vmatmul.mubr.bf16.gmra.mrb[0].mxu0 %v967
      %v1012 = vpop.f32.mrb[0].mxu0
      %v1013 = vadd.f32 0.0, %v1012
      %v1014 = vpop.f32.mrb[0].mxu0
      %v1015 = vpop.f32.mrb[0].mxu0
      %v1016 = vadd.f32 0.0, %v1015
      %v1017 = vpop.f32.mrb[0].mxu0
      %1018 = vmatprep.mubr.bf16.mxu0 0
      %1019 = vmatmul.mubr.bf16.gmra.mrb[0].mxu0 %v970
      %v1020 = vpop.f32.mrb[0].mxu0
      %v1021 = vadd.f32 0.0, %v1020
      %v1022 = vpop.f32.mrb[0].mxu0
      %v1023 = vpop.f32.mrb[0].mxu0
      %v1024 = vpop.f32.mrb[0].mxu0
      %1025 = vdwg.mxu0
      %v1026 = vsel %vm638, %v1013, -inf
      %1027 = vmax.xlane.f32.xlu0 %v1026
      %v1028 = vpop.xlane.xlu0 %1027
      %v1029 = vsel %vm638, %v1016, -inf
      %1030 = vmax.xlane.f32.xlu0 %v1029
      %v1031 = vpop.xlane.xlu0 %1030
      %v1032 = vsel %vm645, %v1021, -inf
      %1033 = vmax.xlane.f32.xlu0 %v1032
      %v1034 = vpop.xlane.xlu0 %1033
      %v1035 = vsub.f32 %v1013, %v1028
      %v1036 = vsub.f32 %v1016, %v1031
      %v1037 = vsub.f32 %v1021, %v1034
      %v1038 = vmul.f32 %v1035, 1.442695
      %v1039 = vpow.pop %v1038
      %v1040 = vmul.f32 %v1036, 1.442695
      %v1041 = vpow.pop %v1040
      %v1042 = vmul.f32 %v1037, 1.442695
      %v1043 = vpow.pop %v1042
      %v1044 = vsel %vm638, %v1039, 0.0
      %1045 = vadd.xlane.f32.xlu0 %v1044
      %v1046 = vpop.xlane.xlu0 %1045
      %v1047 = vsel %vm638, %v1041, 0.0
      %1048 = vadd.xlane.f32.xlu0 %v1047
      %v1049 = vpop.xlane.xlu0 %1048
      %v1050 = vsel %vm645, %v1043, 0.0
      %1051 = vadd.xlane.f32.xlu0 %v1050
      %v1052 = vpop.xlane.xlu0 %1051
      %v1053 = vrcp.pop %v1046
      %v1054 = vrcp.pop %v1049
      %v1055 = vrcp.pop %v1052
      %v1056 = vmul.f32 %v1039, %v1053
      %v1057 = vmul.f32 %v1041, %v1054
      %v1058 = vmul.f32 %v1043, %v1055
      %v1059 = vpack.c.bf16 %v1057, %v1056
      %v1060 = vpack.c.bf16 %v1058, %v1058
      %v1061 = vpack.c.bf16 %v949, %v946
      %v1062 = vpack.c.bf16 %v954, %v954
      %v1064 = vsel %vm638, %v1059, 0
      %v1067 = vsel %vm638, %v1060, 0
      %v1070 = vand.u32 %v1062, %v685
      %1072 = vmatprep.subr.bf16.mxu0 0
      %1073 = vmatpush1.bf16.msra.mxu0 %v1061
      %1074 = vmatprep.subr.bf16.mxu0 0
      %1075 = vmatpush1.bf16.msra.mxu0 %v1070
      %1076 = vmatprep.subr.bf16.mxu0 0
      %1077 = vmatpush1.bf16.msra.mxu0 0
      %1078 = vmatprep.subr.bf16.mxu0 0
      %1079 = vmatpush1.bf16.msra.mxu0 0
      %1080 = vmatprep.subr.bf16.mxu0 0
      %1081 = vmatpush1.bf16.msra.mxu0 0
      %1082 = vmatprep.subr.bf16.mxu0 0
      %1083 = vmatpush1.bf16.msra.mxu0 0
      %1084 = vmatprep.subr.bf16.mxu0 0
      %1085 = vmatpush1.bf16.msra.mxu0 0
      %1086 = vmatprep.subr.bf16.mxu0 0
      %1087 = vmatpush1.bf16.msra.mxu0 0
      %1088 = vmatprep.subr.bf16.mxu0 0
      %1089 = vmatpush1.bf16.msra.mxu0 0
      %1090 = vmatprep.subr.bf16.mxu0 0
      %1091 = vmatpush1.bf16.msra.mxu0 0
      %1092 = vmatprep.subr.bf16.mxu0 0
      %1093 = vmatpush1.bf16.msra.mxu0 0
      %1094 = vmatprep.subr.bf16.mxu0 0
      %1095 = vmatpush1.bf16.msra.mxu0 0
      %1096 = vmatprep.subr.bf16.mxu0 0
      %1097 = vmatpush1.bf16.msra.mxu0 0
      %1098 = vmatprep.subr.bf16.mxu0 0
      %1099 = vmatpush1.bf16.msra.mxu0 0
      %1100 = vmatprep.subr.bf16.mxu0 0
      %1101 = vmatpush1.bf16.msra.mxu0 0
      %1102 = vmatprep.subr.bf16.mxu0 0
      %1103 = vmatpush1.bf16.msra.mxu0 0
      %1104 = vmatprep.mubr.bf16.mxu0 0
      %1105 = vmatmul.mubr.bf16.gmra.mrb[0].mxu0 %v1064
      %v1106 = vpop.f32.mrb[0].mxu0
      %v1107 = vadd.f32 0.0, %v1106
      %v1108 = vpop.f32.mrb[0].mxu0
      %v1109 = vpop.f32.mrb[0].mxu0
      %v1110 = vadd.f32 0.0, %v1109
      %v1111 = vpop.f32.mrb[0].mxu0
      %1112 = vmatprep.mubr.bf16.mxu0 0
      %1113 = vmatmul.mubr.bf16.gmra.mrb[0].mxu0 %v1067
      %v1114 = vpop.f32.mrb[0].mxu0
      %v1115 = vadd.f32 0.0, %v1114
      %v1116 = vpop.f32.mrb[0].mxu0
      %v1117 = vpop.f32.mrb[0].mxu0
      %v1118 = vpop.f32.mrb[0].mxu0
      %1119 = vdwg.mxu0
      %v1120 = vpack.c.bf16 %v1110, %v1107
      %v1121 = vpack.c.bf16 %v1115, %v1115
      %s1122 = scalar_lea.vmem %s5, 4
      %v1123 = vld [vmem:[%s1122] sm:$0xf]
      %v1125 = vsel %vm577, %v1120, 0
      %v1128 = vsel %vm577, %v1121, 0
      %vm1130 = vcmask 1043456
      %v1132 = vsel %vm1130, %v1123, 0
      %1134 = vmatprep.subr.bf16.mxu0 0
      %1135 = vmatpush1.bf16.msra.mxu0 %v1132
      %1136 = vmatprep.subr.bf16.mxu0 0
      %1137 = vmatpush1.bf16.msra.mxu0 0
      %1138 = vmatprep.subr.bf16.mxu0 0
      %1139 = vmatpush1.bf16.msra.mxu0 0
      %1140 = vmatprep.subr.bf16.mxu0 0
      %1141 = vmatpush1.bf16.msra.mxu0 0
      %1142 = vmatprep.subr.bf16.mxu0 0
      %1143 = vmatpush1.bf16.msra.mxu0 0
      %1144 = vmatprep.subr.bf16.mxu0 0
      %1145 = vmatpush1.bf16.msra.mxu0 0
      %1146 = vmatprep.subr.bf16.mxu0 0
      %1147 = vmatpush1.bf16.msra.mxu0 0
      %1148 = vmatprep.subr.bf16.mxu0 0
      %1149 = vmatpush1.bf16.msra.mxu0 0
      %1150 = vmatprep.subr.bf16.mxu0 0
      %1151 = vmatpush1.bf16.msra.mxu0 0
      %1152 = vmatprep.subr.bf16.mxu0 0
      %1153 = vmatpush1.bf16.msra.mxu0 0
      %1154 = vmatprep.subr.bf16.mxu0 0
      %1155 = vmatpush1.bf16.msra.mxu0 0
      %1156 = vmatprep.subr.bf16.mxu0 0
      %1157 = vmatpush1.bf16.msra.mxu0 0
      %1158 = vmatprep.subr.bf16.mxu0 0
      %1159 = vmatpush1.bf16.msra.mxu0 0
      %1160 = vmatprep.subr.bf16.mxu0 0
      %1161 = vmatpush1.bf16.msra.mxu0 0
      %1162 = vmatprep.subr.bf16.mxu0 0
      %1163 = vmatpush1.bf16.msra.mxu0 0
      %1164 = vmatprep.subr.bf16.mxu0 0
      %1165 = vmatpush1.bf16.msra.mxu0 0
      %1166 = vmatprep.mubr.bf16.mxu0 0
      %1167 = vmatmul.mubr.bf16.gmra.mrb[0].mxu0 %v1125
      %v1168 = vpop.f32.mrb[0].mxu0
      %v1169 = vadd.f32 0.0, %v1168
      %v1170 = vpop.f32.mrb[0].mxu0
      %v1171 = vpop.f32.mrb[0].mxu0
      %v1172 = vadd.f32 0.0, %v1171
      %v1173 = vpop.f32.mrb[0].mxu0
      %1174 = vmatprep.mubr.bf16.mxu0 0
      %1175 = vmatmul.mubr.bf16.gmra.mrb[0].mxu0 %v1128
      %v1176 = vpop.f32.mrb[0].mxu0
      %v1177 = vadd.f32 0.0, %v1176
      %v1178 = vpop.f32.mrb[0].mxu0
      %v1179 = vpop.f32.mrb[0].mxu0
      %v1180 = vpop.f32.mrb[0].mxu0
      %1181 = vdwg.mxu0
      %v1183 = vsel %vm577, %v737, 0
      %v1186 = vsel %vm577, %v738, 0
      %v1189 = vsel %vm1130, %v739, 0
      %1191 = vmatprep.subr.bf16.mxu0 0
      %1192 = vmatpush1.bf16.msra.mxu0 %v1189
      %1193 = vmatprep.subr.bf16.mxu0 0
      %1194 = vmatpush1.bf16.msra.mxu0 0
      %1195 = vmatprep.subr.bf16.mxu0 0
      %1196 = vmatpush1.bf16.msra.mxu0 0
      %1197 = vmatprep.subr.bf16.mxu0 0
      %1198 = vmatpush1.bf16.msra.mxu0 0
      %1199 = vmatprep.subr.bf16.mxu0 0
      %1200 = vmatpush1.bf16.msra.mxu0 0
      %1201 = vmatprep.subr.bf16.mxu0 0
      %1202 = vmatpush1.bf16.msra.mxu0 0
      %1203 = vmatprep.subr.bf16.mxu0 0
      %1204 = vmatpush1.bf16.msra.mxu0 0
      %1205 = vmatprep.subr.bf16.mxu0 0
      %1206 = vmatpush1.bf16.msra.mxu0 0
      %1207 = vmatprep.subr.bf16.mxu0 0
      %1208 = vmatpush1.bf16.msra.mxu0 0
      %1209 = vmatprep.subr.bf16.mxu0 0
      %1210 = vmatpush1.bf16.msra.mxu0 0
      %1211 = vmatprep.subr.bf16.mxu0 0
      %1212 = vmatpush1.bf16.msra.mxu0 0
      %1213 = vmatprep.subr.bf16.mxu0 0
      %1214 = vmatpush1.bf16.msra.mxu0 0
      %1215 = vmatprep.subr.bf16.mxu0 0
      %1216 = vmatpush1.bf16.msra.mxu0 0
      %1217 = vmatprep.subr.bf16.mxu0 0
      %1218 = vmatpush1.bf16.msra.mxu0 0
      %1219 = vmatprep.subr.bf16.mxu0 0
      %1220 = vmatpush1.bf16.msra.mxu0 0
      %1221 = vmatprep.subr.bf16.mxu0 0
      %1222 = vmatpush1.bf16.msra.mxu0 0
      %1223 = vmatprep.mubr.bf16.mxu0 0
      %1224 = vmatmul.mubr.bf16.gmra.mrb[0].mxu0 %v1183
      %v1225 = vpop.f32.mrb[0].mxu0
      %v1226 = vadd.f32 %v1169, %v1225
      %v1227 = vpop.f32.mrb[0].mxu0
      %v1228 = vpop.f32.mrb[0].mxu0
      %v1229 = vadd.f32 %v1172, %v1228
      %v1230 = vpop.f32.mrb[0].mxu0
      %1231 = vmatprep.mubr.bf16.mxu0 0
      %1232 = vmatmul.mubr.bf16.gmra.mrb[0].mxu0 %v1186
      %v1233 = vpop.f32.mrb[0].mxu0
      %v1234 = vadd.f32 %v1177, %v1233
      %v1235 = vpop.f32.mrb[0].mxu0
      %v1236 = vpop.f32.mrb[0].mxu0
      %v1237 = vpop.f32.mrb[0].mxu0
      %1238 = vdwg.mxu0
      %s1239 = scalar_lea.vmem %s3, 32
      %v1240 = vld [vmem:[%s1239] sm:$0xf]
      %v1241 = vld [vmem:[%s1239 + $0x4] sm:$0xf]
      %v1242 = vld [vmem:[%s1239 + $0x8] sm:$0xf]
      %v1243 = vld [vmem:[%s1239 + $0xc] sm:$0xf]
      %s1244 = scalar_lea.vmem %s4, 2
      %v1245 = vld [vmem:[%s1244] sm:$0x1]
      %v1247 = vlaneseq
      %v1248 = vshrl.u32 %v1247, 7
      %v1249 = vsub.s32 0, %v1248
      %v1250 = vrot.slane %v1245, %v1249
      %v1256 = vunpack.c.l.b16 %v1240
      %v1257 = vunpack.c.l.b16 %v1241
      %v1258 = vunpack.c.l.b16 %v1242
      %v1259 = vunpack.c.l.b16 %v1243
      %v1260 = vpack.c.b16 %v1257, %v1256
      %v1261 = vpack.c.b16 %v1259, %v1258
      %1264 = vmatprep.subr.bf16.mxu0 0
      %1265 = vmatpush1.bf16.msra.mxu0 %v1260
      %1266 = vmatprep.subr.bf16.mxu0 0
      %1267 = vmatpush1.bf16.msra.mxu0 %v1261
      %1268 = vmatprep.subr.bf16.mxu0 0
      %1269 = vmatpush1.bf16.msra.mxu0 0
      %1270 = vmatprep.subr.bf16.mxu0 0
      %1271 = vmatpush1.bf16.msra.mxu0 0
      %1272 = vmatprep.subr.bf16.mxu0 0
      %1273 = vmatpush1.bf16.msra.mxu0 0
      %1274 = vmatprep.subr.bf16.mxu0 0
      %1275 = vmatpush1.bf16.msra.mxu0 0
      %1276 = vmatprep.subr.bf16.mxu0 0
      %1277 = vmatpush1.bf16.msra.mxu0 0
      %1278 = vmatprep.subr.bf16.mxu0 0
      %1279 = vmatpush1.bf16.msra.mxu0 0
      %1280 = vmatprep.subr.bf16.mxu0 0
      %1281 = vmatpush1.bf16.msra.mxu0 0
      %1282 = vmatprep.subr.bf16.mxu0 0
      %1283 = vmatpush1.bf16.msra.mxu0 0
      %1284 = vmatprep.subr.bf16.mxu0 0
      %1285 = vmatpush1.bf16.msra.mxu0 0
      %1286 = vmatprep.subr.bf16.mxu0 0
      %1287 = vmatpush1.bf16.msra.mxu0 0
      %1288 = vmatprep.subr.bf16.mxu0 0
      %1289 = vmatpush1.bf16.msra.mxu0 0
      %1290 = vmatprep.subr.bf16.mxu0 0
      %1291 = vmatpush1.bf16.msra.mxu0 0
      %1292 = vmatprep.subr.bf16.mxu0 0
      %1293 = vmatpush1.bf16.msra.mxu0 0
      %1294 = vmatprep.subr.bf16.mxu0 0
      %1295 = vmatpush1.bf16.msra.mxu0 0
      %1296 = vmatprep.mubr.bf16.mxu0 0
      %1297 = vmatmul.mubr.bf16.gmra.mrb[0].mxu0 %v371
      %v1298 = vpop.f32.mrb[0].mxu0
      %v1299 = vadd.f32 %v1250, %v1298
      %v1300 = vpop.f32.mrb[0].mxu0
      %v1301 = vpop.f32.mrb[0].mxu0
      %v1302 = vadd.f32 %v1250, %v1301
      %v1303 = vpop.f32.mrb[0].mxu0
      %1304 = vmatprep.mubr.bf16.mxu0 0
      %1305 = vmatmul.mubr.bf16.gmra.mrb[0].mxu0 %v374
      %v1306 = vpop.f32.mrb[0].mxu0
      %v1307 = vadd.f32 %v1250, %v1306
      %v1308 = vpop.f32.mrb[0].mxu0
      %v1309 = vpop.f32.mrb[0].mxu0
      %v1310 = vpop.f32.mrb[0].mxu0
      %1311 = vdwg.mxu0
      %s1312 = scalar_lea.vmem %s3, 96
      %v1313 = vld [vmem:[%s1312] sm:$0xf]
      %v1314 = vld [vmem:[%s1312 + $0x4] sm:$0xf]
      %v1315 = vld [vmem:[%s1312 + $0x8] sm:$0xf]
      %v1316 = vld [vmem:[%s1312 + $0xc] sm:$0xf]
      %s1317 = scalar_lea.vmem %s4, 6
      %v1318 = vld [vmem:[%s1317] sm:$0x1]
      %v1320 = vlaneseq
      %v1321 = vshrl.u32 %v1320, 7
      %v1322 = vsub.s32 0, %v1321
      %v1323 = vrot.slane %v1318, %v1322
      %v1329 = vunpack.c.l.b16 %v1313
      %v1330 = vunpack.c.l.b16 %v1314
      %v1331 = vunpack.c.l.b16 %v1315
      %v1332 = vunpack.c.l.b16 %v1316
      %v1333 = vpack.c.b16 %v1330, %v1329
      %v1334 = vpack.c.b16 %v1332, %v1331
      %1337 = vmatprep.subr.bf16.mxu0 0
      %1338 = vmatpush1.bf16.msra.mxu0 %v1333
      %1339 = vmatprep.subr.bf16.mxu0 0
      %1340 = vmatpush1.bf16.msra.mxu0 %v1334
      %1341 = vmatprep.subr.bf16.mxu0 0
      %1342 = vmatpush1.bf16.msra.mxu0 0
      %1343 = vmatprep.subr.bf16.mxu0 0
      %1344 = vmatpush1.bf16.msra.mxu0 0
      %1345 = vmatprep.subr.bf16.mxu0 0
      %1346 = vmatpush1.bf16.msra.mxu0 0
      %1347 = vmatprep.subr.bf16.mxu0 0
      %1348 = vmatpush1.bf16.msra.mxu0 0
      %1349 = vmatprep.subr.bf16.mxu0 0
      %1350 = vmatpush1.bf16.msra.mxu0 0
      %1351 = vmatprep.subr.bf16.mxu0 0
      %1352 = vmatpush1.bf16.msra.mxu0 0
      %1353 = vmatprep.subr.bf16.mxu0 0
      %1354 = vmatpush1.bf16.msra.mxu0 0
      %1355 = vmatprep.subr.bf16.mxu0 0
      %1356 = vmatpush1.bf16.msra.mxu0 0
      %1357 = vmatprep.subr.bf16.mxu0 0
      %1358 = vmatpush1.bf16.msra.mxu0 0
      %1359 = vmatprep.subr.bf16.mxu0 0
      %1360 = vmatpush1.bf16.msra.mxu0 0
      %1361 = vmatprep.subr.bf16.mxu0 0
      %1362 = vmatpush1.bf16.msra.mxu0 0
      %1363 = vmatprep.subr.bf16.mxu0 0
      %1364 = vmatpush1.bf16.msra.mxu0 0
      %1365 = vmatprep.subr.bf16.mxu0 0
      %1366 = vmatpush1.bf16.msra.mxu0 0
      %1367 = vmatprep.subr.bf16.mxu0 0
      %1368 = vmatpush1.bf16.msra.mxu0 0
      %1369 = vmatprep.mubr.bf16.mxu0 0
      %1370 = vmatmul.mubr.bf16.gmra.mrb[0].mxu0 %v371
      %v1371 = vpop.f32.mrb[0].mxu0
      %v1372 = vadd.f32 %v1323, %v1371
      %v1373 = vpop.f32.mrb[0].mxu0
      %v1374 = vpop.f32.mrb[0].mxu0
      %v1375 = vadd.f32 %v1323, %v1374
      %v1376 = vpop.f32.mrb[0].mxu0
      %1377 = vmatprep.mubr.bf16.mxu0 0
      %1378 = vmatmul.mubr.bf16.gmra.mrb[0].mxu0 %v374
      %v1379 = vpop.f32.mrb[0].mxu0
      %v1380 = vadd.f32 %v1323, %v1379
      %v1381 = vpop.f32.mrb[0].mxu0
      %v1382 = vpop.f32.mrb[0].mxu0
      %v1383 = vpop.f32.mrb[0].mxu0
      %1384 = vdwg.mxu0
      %s1385 = scalar_lea.vmem %s3, 160
      %v1386 = vld [vmem:[%s1385] sm:$0xf]
      %v1387 = vld [vmem:[%s1385 + $0x4] sm:$0xf]
      %v1388 = vld [vmem:[%s1385 + $0x8] sm:$0xf]
      %v1389 = vld [vmem:[%s1385 + $0xc] sm:$0xf]
      %s1390 = scalar_lea.vmem %s4, 10
      %v1391 = vld [vmem:[%s1390] sm:$0x1]
      %v1393 = vlaneseq
      %v1394 = vshrl.u32 %v1393, 7
      %v1395 = vsub.s32 0, %v1394
      %v1396 = vrot.slane %v1391, %v1395
      %v1402 = vunpack.c.l.b16 %v1386
      %v1403 = vunpack.c.l.b16 %v1387
      %v1404 = vunpack.c.l.b16 %v1388
      %v1405 = vunpack.c.l.b16 %v1389
      %v1406 = vpack.c.b16 %v1403, %v1402
      %v1407 = vpack.c.b16 %v1405, %v1404
      %1410 = vmatprep.subr.bf16.mxu0 0
      %1411 = vmatpush1.bf16.msra.mxu0 %v1406
      %1412 = vmatprep.subr.bf16.mxu0 0
      %1413 = vmatpush1.bf16.msra.mxu0 %v1407
      %1414 = vmatprep.subr.bf16.mxu0 0
      %1415 = vmatpush1.bf16.msra.mxu0 0
      %1416 = vmatprep.subr.bf16.mxu0 0
      %1417 = vmatpush1.bf16.msra.mxu0 0
      %1418 = vmatprep.subr.bf16.mxu0 0
      %1419 = vmatpush1.bf16.msra.mxu0 0
      %1420 = vmatprep.subr.bf16.mxu0 0
      %1421 = vmatpush1.bf16.msra.mxu0 0
      %1422 = vmatprep.subr.bf16.mxu0 0
      %1423 = vmatpush1.bf16.msra.mxu0 0
      %1424 = vmatprep.subr.bf16.mxu0 0
      %1425 = vmatpush1.bf16.msra.mxu0 0
      %1426 = vmatprep.subr.bf16.mxu0 0
      %1427 = vmatpush1.bf16.msra.mxu0 0
      %1428 = vmatprep.subr.bf16.mxu0 0
      %1429 = vmatpush1.bf16.msra.mxu0 0
      %1430 = vmatprep.subr.bf16.mxu0 0
      %1431 = vmatpush1.bf16.msra.mxu0 0
      %1432 = vmatprep.subr.bf16.mxu0 0
      %1433 = vmatpush1.bf16.msra.mxu0 0
      %1434 = vmatprep.subr.bf16.mxu0 0
      %1435 = vmatpush1.bf16.msra.mxu0 0
      %1436 = vmatprep.subr.bf16.mxu0 0
      %1437 = vmatpush1.bf16.msra.mxu0 0
      %1438 = vmatprep.subr.bf16.mxu0 0
      %1439 = vmatpush1.bf16.msra.mxu0 0
      %1440 = vmatprep.subr.bf16.mxu0 0
      %1441 = vmatpush1.bf16.msra.mxu0 0
      %1442 = vmatprep.mubr.bf16.mxu0 0
      %1443 = vmatmul.mubr.bf16.gmra.mrb[0].mxu0 %v371
      %v1444 = vpop.f32.mrb[0].mxu0
      %v1445 = vadd.f32 %v1396, %v1444
      %v1446 = vpop.f32.mrb[0].mxu0
      %v1447 = vpop.f32.mrb[0].mxu0
      %v1448 = vadd.f32 %v1396, %v1447
      %v1449 = vpop.f32.mrb[0].mxu0
      %1450 = vmatprep.mubr.bf16.mxu0 0
      %1451 = vmatmul.mubr.bf16.gmra.mrb[0].mxu0 %v374
      %v1452 = vpop.f32.mrb[0].mxu0
      %v1453 = vadd.f32 %v1396, %v1452
      %v1454 = vpop.f32.mrb[0].mxu0
      %v1455 = vpop.f32.mrb[0].mxu0
      %v1456 = vpop.f32.mrb[0].mxu0
      %1457 = vdwg.mxu0
      %v1458 = vmul.f32 %v1299, 0.35355338
      %v1459 = vmul.f32 %v1302, 0.35355338
      %v1460 = vmul.f32 %v1307, 0.35355338
      %v1461 = vpack.c.bf16 %v1459, %v1458
      %v1462 = vpack.c.bf16 %v1460, %v1460
      %v1463 = vpack.c.bf16 %v1375, %v1372
      %v1464 = vpack.c.bf16 %v1380, %v1380
      %v1466 = vsel %vm577, %v1461, 0
      %v1469 = vsel %vm577, %v1462, 0
      %v1472 = vsel %vm577, %v1463, 0
      %v1475 = vsel %vm577, %v1464, 0
      %1477 = vmatprep.subr.bf16.mxu0 0
      %1478 = vmatpush1.bf16.xpose.msra.mxu0 %v1472
      %1479 = vmatprep.subr.bf16.mxu0 0
      %1480 = vmatpush1.bf16.xpose.msra.mxu0 %v1475
      %1481 = vmatprep.subr.bf16.mxu0 0
      %1482 = vmatpush1.bf16.xpose.msra.mxu0 0
      %1483 = vmatprep.subr.bf16.mxu0 0
      %1484 = vmatpush1.bf16.xpose.msra.mxu0 0
      %1485 = vmatprep.subr.bf16.mxu0 0
      %1486 = vmatpush1.bf16.xpose.msra.mxu0 0
      %1487 = vmatprep.subr.bf16.mxu0 0
      %1488 = vmatpush1.bf16.xpose.msra.mxu0 0
      %1489 = vmatprep.subr.bf16.mxu0 0
      %1490 = vmatpush1.bf16.xpose.msra.mxu0 0
      %1491 = vmatprep.subr.bf16.mxu0 0
      %1492 = vmatpush1.bf16.xpose.msra.mxu0 0
      %1493 = vmatprep.subr.bf16.mxu0 0
      %1494 = vmatpush1.bf16.xpose.msra.mxu0 0
      %1495 = vmatprep.subr.bf16.mxu0 0
      %1496 = vmatpush1.bf16.xpose.msra.mxu0 0
      %1497 = vmatprep.subr.bf16.mxu0 0
      %1498 = vmatpush1.bf16.xpose.msra.mxu0 0
      %1499 = vmatprep.subr.bf16.mxu0 0
      %1500 = vmatpush1.bf16.xpose.msra.mxu0 0
      %1501 = vmatprep.subr.bf16.mxu0 0
      %1502 = vmatpush1.bf16.xpose.msra.mxu0 0
      %1503 = vmatprep.subr.bf16.mxu0 0
      %1504 = vmatpush1.bf16.xpose.msra.mxu0 0
      %1505 = vmatprep.subr.bf16.mxu0 0
      %1506 = vmatpush1.bf16.xpose.msra.mxu0 0
      %1507 = vmatprep.subr.bf16.mxu0 0
      %1508 = vmatpush1.bf16.xpose.msra.mxu0 0
      %1509 = vmatprep.mubr.bf16.mxu0 0
      %1510 = vmatmul.mubr.bf16.gmra.mrb[0].mxu0 %v1466
      %v1511 = vpop.f32.mrb[0].mxu0
      %v1512 = vadd.f32 0.0, %v1511
      %v1513 = vpop.f32.mrb[0].mxu0
      %v1514 = vpop.f32.mrb[0].mxu0
      %v1515 = vadd.f32 0.0, %v1514
      %v1516 = vpop.f32.mrb[0].mxu0
      %1517 = vmatprep.mubr.bf16.mxu0 0
      %1518 = vmatmul.mubr.bf16.gmra.mrb[0].mxu0 %v1469
      %v1519 = vpop.f32.mrb[0].mxu0
      %v1520 = vadd.f32 0.0, %v1519
      %v1521 = vpop.f32.mrb[0].mxu0
      %v1522 = vpop.f32.mrb[0].mxu0
      %v1523 = vpop.f32.mrb[0].mxu0
      %1524 = vdwg.mxu0
      %v1525 = vsel %vm638, %v1512, -inf
      %1526 = vmax.xlane.f32.xlu0 %v1525
      %v1527 = vpop.xlane.xlu0 %1526
      %v1528 = vsel %vm638, %v1515, -inf
      %1529 = vmax.xlane.f32.xlu0 %v1528
      %v1530 = vpop.xlane.xlu0 %1529
      %v1531 = vsel %vm645, %v1520, -inf
      %1532 = vmax.xlane.f32.xlu0 %v1531
      %v1533 = vpop.xlane.xlu0 %1532
      %v1534 = vsub.f32 %v1512, %v1527
      %v1535 = vsub.f32 %v1515, %v1530
      %v1536 = vsub.f32 %v1520, %v1533
      %v1537 = vmul.f32 %v1534, 1.442695
      %v1538 = vpow.pop %v1537
      %v1539 = vmul.f32 %v1535, 1.442695
      %v1540 = vpow.pop %v1539
      %v1541 = vmul.f32 %v1536, 1.442695
      %v1542 = vpow.pop %v1541
      %v1543 = vsel %vm638, %v1538, 0.0
      %1544 = vadd.xlane.f32.xlu0 %v1543
      %v1545 = vpop.xlane.xlu0 %1544
      %v1546 = vsel %vm638, %v1540, 0.0
      %1547 = vadd.xlane.f32.xlu0 %v1546
      %v1548 = vpop.xlane.xlu0 %1547
      %v1549 = vsel %vm645, %v1542, 0.0
      %1550 = vadd.xlane.f32.xlu0 %v1549
      %v1551 = vpop.xlane.xlu0 %1550
      %v1552 = vrcp.pop %v1545
      %v1553 = vrcp.pop %v1548
      %v1554 = vrcp.pop %v1551
      %v1555 = vmul.f32 %v1538, %v1552
      %v1556 = vmul.f32 %v1540, %v1553
      %v1557 = vmul.f32 %v1542, %v1554
      %v1558 = vpack.c.bf16 %v1556, %v1555
      %v1559 = vpack.c.bf16 %v1557, %v1557
      %v1560 = vpack.c.bf16 %v1448, %v1445
      %v1561 = vpack.c.bf16 %v1453, %v1453
      %v1563 = vsel %vm638, %v1558, 0
      %v1566 = vsel %vm638, %v1559, 0
      %v1569 = vand.u32 %v1561, %v685
      %1571 = vmatprep.subr.bf16.mxu0 0
      %1572 = vmatpush1.bf16.msra.mxu0 %v1560
      %1573 = vmatprep.subr.bf16.mxu0 0
      %1574 = vmatpush1.bf16.msra.mxu0 %v1569
      %1575 = vmatprep.subr.bf16.mxu0 0
      %1576 = vmatpush1.bf16.msra.mxu0 0
      %1577 = vmatprep.subr.bf16.mxu0 0
      %1578 = vmatpush1.bf16.msra.mxu0 0
      %1579 = vmatprep.subr.bf16.mxu0 0
      %1580 = vmatpush1.bf16.msra.mxu0 0
      %1581 = vmatprep.subr.bf16.mxu0 0
      %1582 = vmatpush1.bf16.msra.mxu0 0
      %1583 = vmatprep.subr.bf16.mxu0 0
      %1584 = vmatpush1.bf16.msra.mxu0 0
      %1585 = vmatprep.subr.bf16.mxu0 0
      %1586 = vmatpush1.bf16.msra.mxu0 0
      %1587 = vmatprep.subr.bf16.mxu0 0
      %1588 = vmatpush1.bf16.msra.mxu0 0
      %1589 = vmatprep.subr.bf16.mxu0 0
      %1590 = vmatpush1.bf16.msra.mxu0 0
      %1591 = vmatprep.subr.bf16.mxu0 0
      %1592 = vmatpush1.bf16.msra.mxu0 0
      %1593 = vmatprep.subr.bf16.mxu0 0
      %1594 = vmatpush1.bf16.msra.mxu0 0
      %1595 = vmatprep.subr.bf16.mxu0 0
      %1596 = vmatpush1.bf16.msra.mxu0 0
      %1597 = vmatprep.subr.bf16.mxu0 0
      %1598 = vmatpush1.bf16.msra.mxu0 0
      %1599 = vmatprep.subr.bf16.mxu0 0
      %1600 = vmatpush1.bf16.msra.mxu0 0
      %1601 = vmatprep.subr.bf16.mxu0 0
      %1602 = vmatpush1.bf16.msra.mxu0 0
      %1603 = vmatprep.mubr.bf16.mxu0 0
      %1604 = vmatmul.mubr.bf16.gmra.mrb[0].mxu0 %v1563
      %v1605 = vpop.f32.mrb[0].mxu0
      %v1606 = vadd.f32 0.0, %v1605
      %v1607 = vpop.f32.mrb[0].mxu0
      %v1608 = vpop.f32.mrb[0].mxu0
      %v1609 = vadd.f32 0.0, %v1608
      %v1610 = vpop.f32.mrb[0].mxu0
      %1611 = vmatprep.mubr.bf16.mxu0 0
      %1612 = vmatmul.mubr.bf16.gmra.mrb[0].mxu0 %v1566
      %v1613 = vpop.f32.mrb[0].mxu0
      %v1614 = vadd.f32 0.0, %v1613
      %v1615 = vpop.f32.mrb[0].mxu0
      %v1616 = vpop.f32.mrb[0].mxu0
      %v1617 = vpop.f32.mrb[0].mxu0
      %1618 = vdwg.mxu0
      %v1619 = vpack.c.bf16 %v1609, %v1606
      %v1620 = vpack.c.bf16 %v1614, %v1614
      %s1621 = scalar_lea.vmem %s5, 8
      %v1622 = vld [vmem:[%s1621] sm:$0xf]
      %v1624 = vsel %vm577, %v1619, 0
      %v1627 = vsel %vm577, %v1620, 0
      %v1630 = vsel %vm1130, %v1622, 0
      %1632 = vmatprep.subr.bf16.mxu0 0
      %1633 = vmatpush1.bf16.msra.mxu0 %v1630
      %1634 = vmatprep.subr.bf16.mxu0 0
      %1635 = vmatpush1.bf16.msra.mxu0 0
      %1636 = vmatprep.subr.bf16.mxu0 0
      %1637 = vmatpush1.bf16.msra.mxu0 0
      %1638 = vmatprep.subr.bf16.mxu0 0
      %1639 = vmatpush1.bf16.msra.mxu0 0
      %1640 = vmatprep.subr.bf16.mxu0 0
      %1641 = vmatpush1.bf16.msra.mxu0 0
      %1642 = vmatprep.subr.bf16.mxu0 0
      %1643 = vmatpush1.bf16.msra.mxu0 0
      %1644 = vmatprep.subr.bf16.mxu0 0
      %1645 = vmatpush1.bf16.msra.mxu0 0
      %1646 = vmatprep.subr.bf16.mxu0 0
      %1647 = vmatpush1.bf16.msra.mxu0 0
      %1648 = vmatprep.subr.bf16.mxu0 0
      %1649 = vmatpush1.bf16.msra.mxu0 0
      %1650 = vmatprep.subr.bf16.mxu0 0
      %1651 = vmatpush1.bf16.msra.mxu0 0
      %1652 = vmatprep.subr.bf16.mxu0 0
      %1653 = vmatpush1.bf16.msra.mxu0 0
      %1654 = vmatprep.subr.bf16.mxu0 0
      %1655 = vmatpush1.bf16.msra.mxu0 0
      %1656 = vmatprep.subr.bf16.mxu0 0
      %1657 = vmatpush1.bf16.msra.mxu0 0
      %1658 = vmatprep.subr.bf16.mxu0 0
      %1659 = vmatpush1.bf16.msra.mxu0 0
      %1660 = vmatprep.subr.bf16.mxu0 0
      %1661 = vmatpush1.bf16.msra.mxu0 0
      %1662 = vmatprep.subr.bf16.mxu0 0
      %1663 = vmatpush1.bf16.msra.mxu0 0
      %1664 = vmatprep.mubr.bf16.mxu0 0
      %1665 = vmatmul.mubr.bf16.gmra.mrb[0].mxu0 %v1624
      %v1666 = vpop.f32.mrb[0].mxu0
      %v1667 = vadd.f32 0.0, %v1666
      %v1668 = vpop.f32.mrb[0].mxu0
      %v1669 = vpop.f32.mrb[0].mxu0
      %v1670 = vadd.f32 0.0, %v1669
      %v1671 = vpop.f32.mrb[0].mxu0
      %1672 = vmatprep.mubr.bf16.mxu0 0
      %1673 = vmatmul.mubr.bf16.gmra.mrb[0].mxu0 %v1627
      %v1674 = vpop.f32.mrb[0].mxu0
      %v1675 = vadd.f32 0.0, %v1674
      %v1676 = vpop.f32.mrb[0].mxu0
      %v1677 = vpop.f32.mrb[0].mxu0
      %v1678 = vpop.f32.mrb[0].mxu0
      %1679 = vdwg.mxu0
      %v1680 = vadd.f32 %v1226, %v1667
      %v1681 = vadd.f32 %v1229, %v1670
      %v1682 = vadd.f32 %v1234, %v1675
      %s1683 = scalar_lea.vmem %s3, 48
      %v1684 = vld [vmem:[%s1683] sm:$0xf]
      %v1685 = vld [vmem:[%s1683 + $0x4] sm:$0xf]
      %v1686 = vld [vmem:[%s1683 + $0x8] sm:$0xf]
      %v1687 = vld [vmem:[%s1683 + $0xc] sm:$0xf]
      %s1688 = scalar_lea.vmem %s4, 3
      %v1689 = vld [vmem:[%s1688] sm:$0x1]
      %v1691 = vlaneseq
      %v1692 = vshrl.u32 %v1691, 7
      %v1693 = vsub.s32 0, %v1692
      %v1694 = vrot.slane %v1689, %v1693
      %v1700 = vunpack.c.l.b16 %v1684
      %v1701 = vunpack.c.l.b16 %v1685
      %v1702 = vunpack.c.l.b16 %v1686
      %v1703 = vunpack.c.l.b16 %v1687
      %v1704 = vpack.c.b16 %v1701, %v1700
      %v1705 = vpack.c.b16 %v1703, %v1702
      %1708 = vmatprep.subr.bf16.mxu0 0
      %1709 = vmatpush1.bf16.msra.mxu0 %v1704
      %1710 = vmatprep.subr.bf16.mxu0 0
      %1711 = vmatpush1.bf16.msra.mxu0 %v1705
      %1712 = vmatprep.subr.bf16.mxu0 0
      %1713 = vmatpush1.bf16.msra.mxu0 0
      %1714 = vmatprep.subr.bf16.mxu0 0
      %1715 = vmatpush1.bf16.msra.mxu0 0
      %1716 = vmatprep.subr.bf16.mxu0 0
      %1717 = vmatpush1.bf16.msra.mxu0 0
      %1718 = vmatprep.subr.bf16.mxu0 0
      %1719 = vmatpush1.bf16.msra.mxu0 0
      %1720 = vmatprep.subr.bf16.mxu0 0
      %1721 = vmatpush1.bf16.msra.mxu0 0
      %1722 = vmatprep.subr.bf16.mxu0 0
      %1723 = vmatpush1.bf16.msra.mxu0 0
      %1724 = vmatprep.subr.bf16.mxu0 0
      %1725 = vmatpush1.bf16.msra.mxu0 0
      %1726 = vmatprep.subr.bf16.mxu0 0
      %1727 = vmatpush1.bf16.msra.mxu0 0
      %1728 = vmatprep.subr.bf16.mxu0 0
      %1729 = vmatpush1.bf16.msra.mxu0 0
      %1730 = vmatprep.subr.bf16.mxu0 0
      %1731 = vmatpush1.bf16.msra.mxu0 0
      %1732 = vmatprep.subr.bf16.mxu0 0
      %1733 = vmatpush1.bf16.msra.mxu0 0
      %1734 = vmatprep.subr.bf16.mxu0 0
      %1735 = vmatpush1.bf16.msra.mxu0 0
      %1736 = vmatprep.subr.bf16.mxu0 0
      %1737 = vmatpush1.bf16.msra.mxu0 0
      %1738 = vmatprep.subr.bf16.mxu0 0
      %1739 = vmatpush1.bf16.msra.mxu0 0
      %1740 = vmatprep.mubr.bf16.mxu0 0
      %1741 = vmatmul.mubr.bf16.gmra.mrb[0].mxu0 %v371
      %v1742 = vpop.f32.mrb[0].mxu0
      %v1743 = vadd.f32 %v1694, %v1742
      %v1744 = vpop.f32.mrb[0].mxu0
      %v1745 = vpop.f32.mrb[0].mxu0
      %v1746 = vadd.f32 %v1694, %v1745
      %v1747 = vpop.f32.mrb[0].mxu0
      %1748 = vmatprep.mubr.bf16.mxu0 0
      %1749 = vmatmul.mubr.bf16.gmra.mrb[0].mxu0 %v374
      %v1750 = vpop.f32.mrb[0].mxu0
      %v1751 = vadd.f32 %v1694, %v1750
      %v1752 = vpop.f32.mrb[0].mxu0
      %v1753 = vpop.f32.mrb[0].mxu0
      %v1754 = vpop.f32.mrb[0].mxu0
      %1755 = vdwg.mxu0
      %s1756 = scalar_lea.vmem %s3, 112
      %v1757 = vld [vmem:[%s1756] sm:$0xf]
      %v1758 = vld [vmem:[%s1756 + $0x4] sm:$0xf]
      %v1759 = vld [vmem:[%s1756 + $0x8] sm:$0xf]
      %v1760 = vld [vmem:[%s1756 + $0xc] sm:$0xf]
      %s1761 = scalar_lea.vmem %s4, 7
      %v1762 = vld [vmem:[%s1761] sm:$0x1]
      %v1764 = vlaneseq
      %v1765 = vshrl.u32 %v1764, 7
      %v1766 = vsub.s32 0, %v1765
      %v1767 = vrot.slane %v1762, %v1766
      %v1773 = vunpack.c.l.b16 %v1757
      %v1774 = vunpack.c.l.b16 %v1758
      %v1775 = vunpack.c.l.b16 %v1759
      %v1776 = vunpack.c.l.b16 %v1760
      %v1777 = vpack.c.b16 %v1774, %v1773
      %v1778 = vpack.c.b16 %v1776, %v1775
      %1781 = vmatprep.subr.bf16.mxu0 0
      %1782 = vmatpush1.bf16.msra.mxu0 %v1777
      %1783 = vmatprep.subr.bf16.mxu0 0
      %1784 = vmatpush1.bf16.msra.mxu0 %v1778
      %1785 = vmatprep.subr.bf16.mxu0 0
      %1786 = vmatpush1.bf16.msra.mxu0 0
      %1787 = vmatprep.subr.bf16.mxu0 0
      %1788 = vmatpush1.bf16.msra.mxu0 0
      %1789 = vmatprep.subr.bf16.mxu0 0
      %1790 = vmatpush1.bf16.msra.mxu0 0
      %1791 = vmatprep.subr.bf16.mxu0 0
      %1792 = vmatpush1.bf16.msra.mxu0 0
      %1793 = vmatprep.subr.bf16.mxu0 0
      %1794 = vmatpush1.bf16.msra.mxu0 0
      %1795 = vmatprep.subr.bf16.mxu0 0
      %1796 = vmatpush1.bf16.msra.mxu0 0
      %1797 = vmatprep.subr.bf16.mxu0 0
      %1798 = vmatpush1.bf16.msra.mxu0 0
      %1799 = vmatprep.subr.bf16.mxu0 0
      %1800 = vmatpush1.bf16.msra.mxu0 0
      %1801 = vmatprep.subr.bf16.mxu0 0
      %1802 = vmatpush1.bf16.msra.mxu0 0
      %1803 = vmatprep.subr.bf16.mxu0 0
      %1804 = vmatpush1.bf16.msra.mxu0 0
      %1805 = vmatprep.subr.bf16.mxu0 0
      %1806 = vmatpush1.bf16.msra.mxu0 0
      %1807 = vmatprep.subr.bf16.mxu0 0
      %1808 = vmatpush1.bf16.msra.mxu0 0
      %1809 = vmatprep.subr.bf16.mxu0 0
      %1810 = vmatpush1.bf16.msra.mxu0 0
      %1811 = vmatprep.subr.bf16.mxu0 0
      %1812 = vmatpush1.bf16.msra.mxu0 0
      %1813 = vmatprep.mubr.bf16.mxu0 0
      %1814 = vmatmul.mubr.bf16.gmra.mrb[0].mxu0 %v371
      %v1815 = vpop.f32.mrb[0].mxu0
      %v1816 = vadd.f32 %v1767, %v1815
      %v1817 = vpop.f32.mrb[0].mxu0
      %v1818 = vpop.f32.mrb[0].mxu0
      %v1819 = vadd.f32 %v1767, %v1818
      %v1820 = vpop.f32.mrb[0].mxu0
      %1821 = vmatprep.mubr.bf16.mxu0 0
      %1822 = vmatmul.mubr.bf16.gmra.mrb[0].mxu0 %v374
      %v1823 = vpop.f32.mrb[0].mxu0
      %v1824 = vadd.f32 %v1767, %v1823
      %v1825 = vpop.f32.mrb[0].mxu0
      %v1826 = vpop.f32.mrb[0].mxu0
      %v1827 = vpop.f32.mrb[0].mxu0
      %1828 = vdwg.mxu0
      %s1829 = scalar_lea.vmem %s3, 176
      %v1830 = vld [vmem:[%s1829] sm:$0xf]
      %v1831 = vld [vmem:[%s1829 + $0x4] sm:$0xf]
      %v1832 = vld [vmem:[%s1829 + $0x8] sm:$0xf]
      %v1833 = vld [vmem:[%s1829 + $0xc] sm:$0xf]
      %s1834 = scalar_lea.vmem %s4, 11
      %v1835 = vld [vmem:[%s1834] sm:$0x1]
      %v1837 = vlaneseq
      %v1838 = vshrl.u32 %v1837, 7
      %v1839 = vsub.s32 0, %v1838
      %v1840 = vrot.slane %v1835, %v1839
      %v1846 = vunpack.c.l.b16 %v1830
      %v1847 = vunpack.c.l.b16 %v1831
      %v1848 = vunpack.c.l.b16 %v1832
      %v1849 = vunpack.c.l.b16 %v1833
      %v1850 = vpack.c.b16 %v1847, %v1846
      %v1851 = vpack.c.b16 %v1849, %v1848
      %1854 = vmatprep.subr.bf16.mxu0 0
      %1855 = vmatpush1.bf16.msra.mxu0 %v1850
      %1856 = vmatprep.subr.bf16.mxu0 0
      %1857 = vmatpush1.bf16.msra.mxu0 %v1851
      %1858 = vmatprep.subr.bf16.mxu0 0
      %1859 = vmatpush1.bf16.msra.mxu0 0
      %1860 = vmatprep.subr.bf16.mxu0 0
      %1861 = vmatpush1.bf16.msra.mxu0 0
      %1862 = vmatprep.subr.bf16.mxu0 0
      %1863 = vmatpush1.bf16.msra.mxu0 0
      %1864 = vmatprep.subr.bf16.mxu0 0
      %1865 = vmatpush1.bf16.msra.mxu0 0
      %1866 = vmatprep.subr.bf16.mxu0 0
      %1867 = vmatpush1.bf16.msra.mxu0 0
      %1868 = vmatprep.subr.bf16.mxu0 0
      %1869 = vmatpush1.bf16.msra.mxu0 0
      %1870 = vmatprep.subr.bf16.mxu0 0
      %1871 = vmatpush1.bf16.msra.mxu0 0
      %1872 = vmatprep.subr.bf16.mxu0 0
      %1873 = vmatpush1.bf16.msra.mxu0 0
      %1874 = vmatprep.subr.bf16.mxu0 0
      %1875 = vmatpush1.bf16.msra.mxu0 0
      %1876 = vmatprep.subr.bf16.mxu0 0
      %1877 = vmatpush1.bf16.msra.mxu0 0
      %1878 = vmatprep.subr.bf16.mxu0 0
      %1879 = vmatpush1.bf16.msra.mxu0 0
      %1880 = vmatprep.subr.bf16.mxu0 0
      %1881 = vmatpush1.bf16.msra.mxu0 0
      %1882 = vmatprep.subr.bf16.mxu0 0
      %1883 = vmatpush1.bf16.msra.mxu0 0
      %1884 = vmatprep.subr.bf16.mxu0 0
      %1885 = vmatpush1.bf16.msra.mxu0 0
      %1886 = vmatprep.mubr.bf16.mxu0 0
      %1887 = vmatmul.mubr.bf16.gmra.mrb[0].mxu0 %v371
      %v1888 = vpop.f32.mrb[0].mxu0
      %v1889 = vadd.f32 %v1840, %v1888
      %v1890 = vpop.f32.mrb[0].mxu0
      %v1891 = vpop.f32.mrb[0].mxu0
      %v1892 = vadd.f32 %v1840, %v1891
      %v1893 = vpop.f32.mrb[0].mxu0
      %1894 = vmatprep.mubr.bf16.mxu0 0
      %1895 = vmatmul.mubr.bf16.gmra.mrb[0].mxu0 %v374
      %v1896 = vpop.f32.mrb[0].mxu0
      %v1897 = vadd.f32 %v1840, %v1896
      %v1898 = vpop.f32.mrb[0].mxu0
      %v1899 = vpop.f32.mrb[0].mxu0
      %v1900 = vpop.f32.mrb[0].mxu0
      %1901 = vdwg.mxu0
      %v1902 = vmul.f32 %v1743, 0.35355338
      %v1903 = vmul.f32 %v1746, 0.35355338
      %v1904 = vmul.f32 %v1751, 0.35355338
      %v1905 = vpack.c.bf16 %v1903, %v1902
      %v1906 = vpack.c.bf16 %v1904, %v1904
      %v1907 = vpack.c.bf16 %v1819, %v1816
      %v1908 = vpack.c.bf16 %v1824, %v1824
      %v1910 = vsel %vm577, %v1905, 0
      %v1913 = vsel %vm577, %v1906, 0
      %v1916 = vsel %vm577, %v1907, 0
      %v1919 = vsel %vm577, %v1908, 0
      %1921 = vmatprep.subr.bf16.mxu0 0
      %1922 = vmatpush1.bf16.xpose.msra.mxu0 %v1916
      %1923 = vmatprep.subr.bf16.mxu0 0
      %1924 = vmatpush1.bf16.xpose.msra.mxu0 %v1919
      %1925 = vmatprep.subr.bf16.mxu0 0
      %1926 = vmatpush1.bf16.xpose.msra.mxu0 0
      %1927 = vmatprep.subr.bf16.mxu0 0
      %1928 = vmatpush1.bf16.xpose.msra.mxu0 0
      %1929 = vmatprep.subr.bf16.mxu0 0
      %1930 = vmatpush1.bf16.xpose.msra.mxu0 0
      %1931 = vmatprep.subr.bf16.mxu0 0
      %1932 = vmatpush1.bf16.xpose.msra.mxu0 0
      %1933 = vmatprep.subr.bf16.mxu0 0
      %1934 = vmatpush1.bf16.xpose.msra.mxu0 0
      %1935 = vmatprep.subr.bf16.mxu0 0
      %1936 = vmatpush1.bf16.xpose.msra.mxu0 0
      %1937 = vmatprep.subr.bf16.mxu0 0
      %1938 = vmatpush1.bf16.xpose.msra.mxu0 0
      %1939 = vmatprep.subr.bf16.mxu0 0
      %1940 = vmatpush1.bf16.xpose.msra.mxu0 0
      %1941 = vmatprep.subr.bf16.mxu0 0
      %1942 = vmatpush1.bf16.xpose.msra.mxu0 0
      %1943 = vmatprep.subr.bf16.mxu0 0
      %1944 = vmatpush1.bf16.xpose.msra.mxu0 0
      %1945 = vmatprep.subr.bf16.mxu0 0
      %1946 = vmatpush1.bf16.xpose.msra.mxu0 0
      %1947 = vmatprep.subr.bf16.mxu0 0
      %1948 = vmatpush1.bf16.xpose.msra.mxu0 0
      %1949 = vmatprep.subr.bf16.mxu0 0
      %1950 = vmatpush1.bf16.xpose.msra.mxu0 0
      %1951 = vmatprep.subr.bf16.mxu0 0
      %1952 = vmatpush1.bf16.xpose.msra.mxu0 0
      %1953 = vmatprep.mubr.bf16.mxu0 0
      %1954 = vmatmul.mubr.bf16.gmra.mrb[0].mxu0 %v1910
      %v1955 = vpop.f32.mrb[0].mxu0
      %v1956 = vadd.f32 0.0, %v1955
      %v1957 = vpop.f32.mrb[0].mxu0
      %v1958 = vpop.f32.mrb[0].mxu0
      %v1959 = vadd.f32 0.0, %v1958
      %v1960 = vpop.f32.mrb[0].mxu0
      %1961 = vmatprep.mubr.bf16.mxu0 0
      %1962 = vmatmul.mubr.bf16.gmra.mrb[0].mxu0 %v1913
      %v1963 = vpop.f32.mrb[0].mxu0
      %v1964 = vadd.f32 0.0, %v1963
      %v1965 = vpop.f32.mrb[0].mxu0
      %v1966 = vpop.f32.mrb[0].mxu0
      %v1967 = vpop.f32.mrb[0].mxu0
      %1968 = vdwg.mxu0
      %v1969 = vsel %vm638, %v1956, -inf
      %1970 = vmax.xlane.f32.xlu0 %v1969
      %v1971 = vpop.xlane.xlu0 %1970
      %v1972 = vsel %vm638, %v1959, -inf
      %1973 = vmax.xlane.f32.xlu0 %v1972
      %v1974 = vpop.xlane.xlu0 %1973
      %v1975 = vsel %vm645, %v1964, -inf
      %1976 = vmax.xlane.f32.xlu0 %v1975
      %v1977 = vpop.xlane.xlu0 %1976
      %v1978 = vsub.f32 %v1956, %v1971
      %v1979 = vsub.f32 %v1959, %v1974
      %v1980 = vsub.f32 %v1964, %v1977
      %v1981 = vmul.f32 %v1978, 1.442695
      %v1982 = vpow.pop %v1981
      %v1983 = vmul.f32 %v1979, 1.442695
      %v1984 = vpow.pop %v1983
      %v1985 = vmul.f32 %v1980, 1.442695
      %v1986 = vpow.pop %v1985
      %v1987 = vsel %vm638, %v1982, 0.0
      %1988 = vadd.xlane.f32.xlu0 %v1987
      %v1989 = vpop.xlane.xlu0 %1988
      %v1990 = vsel %vm638, %v1984, 0.0
      %1991 = vadd.xlane.f32.xlu0 %v1990
      %v1992 = vpop.xlane.xlu0 %1991
      %v1993 = vsel %vm645, %v1986, 0.0
      %1994 = vadd.xlane.f32.xlu0 %v1993
      %v1995 = vpop.xlane.xlu0 %1994
      %v1996 = vrcp.pop %v1989
      %v1997 = vrcp.pop %v1992
      %v1998 = vrcp.pop %v1995
      %v1999 = vmul.f32 %v1982, %v1996
      %v2000 = vmul.f32 %v1984, %v1997
      %v2001 = vmul.f32 %v1986, %v1998
      %v2002 = vpack.c.bf16 %v2000, %v1999
      %v2003 = vpack.c.bf16 %v2001, %v2001
      %v2004 = vpack.c.bf16 %v1892, %v1889
      %v2005 = vpack.c.bf16 %v1897, %v1897
      %v2007 = vsel %vm638, %v2002, 0
      %v2010 = vsel %vm638, %v2003, 0
      %v2013 = vand.u32 %v2005, %v685
      %2015 = vmatprep.subr.bf16.mxu0 0
      %2016 = vmatpush1.bf16.msra.mxu0 %v2004
      %2017 = vmatprep.subr.bf16.mxu0 0
      %2018 = vmatpush1.bf16.msra.mxu0 %v2013
      %2019 = vmatprep.subr.bf16.mxu0 0
      %2020 = vmatpush1.bf16.msra.mxu0 0
      %2021 = vmatprep.subr.bf16.mxu0 0
      %2022 = vmatpush1.bf16.msra.mxu0 0
      %2023 = vmatprep.subr.bf16.mxu0 0
      %2024 = vmatpush1.bf16.msra.mxu0 0
      %2025 = vmatprep.subr.bf16.mxu0 0
      %2026 = vmatpush1.bf16.msra.mxu0 0
      %2027 = vmatprep.subr.bf16.mxu0 0
      %2028 = vmatpush1.bf16.msra.mxu0 0
      %2029 = vmatprep.subr.bf16.mxu0 0
      %2030 = vmatpush1.bf16.msra.mxu0 0
      %2031 = vmatprep.subr.bf16.mxu0 0
      %2032 = vmatpush1.bf16.msra.mxu0 0
      %2033 = vmatprep.subr.bf16.mxu0 0
      %2034 = vmatpush1.bf16.msra.mxu0 0
      %2035 = vmatprep.subr.bf16.mxu0 0
      %2036 = vmatpush1.bf16.msra.mxu0 0
      %2037 = vmatprep.subr.bf16.mxu0 0
      %2038 = vmatpush1.bf16.msra.mxu0 0
      %2039 = vmatprep.subr.bf16.mxu0 0
      %2040 = vmatpush1.bf16.msra.mxu0 0
      %2041 = vmatprep.subr.bf16.mxu0 0
      %2042 = vmatpush1.bf16.msra.mxu0 0
      %2043 = vmatprep.subr.bf16.mxu0 0
      %2044 = vmatpush1.bf16.msra.mxu0 0
      %2045 = vmatprep.subr.bf16.mxu0 0
      %2046 = vmatpush1.bf16.msra.mxu0 0
      %2047 = vmatprep.mubr.bf16.mxu0 0
      %2048 = vmatmul.mubr.bf16.gmra.mrb[0].mxu0 %v2007
      %v2049 = vpop.f32.mrb[0].mxu0
      %v2050 = vadd.f32 0.0, %v2049
      %v2051 = vpop.f32.mrb[0].mxu0
      %v2052 = vpop.f32.mrb[0].mxu0
      %v2053 = vadd.f32 0.0, %v2052
      %v2054 = vpop.f32.mrb[0].mxu0
      %2055 = vmatprep.mubr.bf16.mxu0 0
      %2056 = vmatmul.mubr.bf16.gmra.mrb[0].mxu0 %v2010
      %v2057 = vpop.f32.mrb[0].mxu0
      %v2058 = vadd.f32 0.0, %v2057
      %v2059 = vpop.f32.mrb[0].mxu0
      %v2060 = vpop.f32.mrb[0].mxu0
      %v2061 = vpop.f32.mrb[0].mxu0
      %2062 = vdwg.mxu0
      %v2063 = vpack.c.bf16 %v2053, %v2050
      %v2064 = vpack.c.bf16 %v2058, %v2058
      %s2065 = scalar_lea.vmem %s5, 12
      %v2066 = vld [vmem:[%s2065] sm:$0xf]
      %v2068 = vsel %vm577, %v2063, 0
      %v2071 = vsel %vm577, %v2064, 0
      %v2074 = vsel %vm1130, %v2066, 0
      %2076 = vmatprep.subr.bf16.mxu0 0
      %2077 = vmatpush1.bf16.msra.mxu0 %v2074
      %2078 = vmatprep.subr.bf16.mxu0 0
      %2079 = vmatpush1.bf16.msra.mxu0 0
      %2080 = vmatprep.subr.bf16.mxu0 0
      %2081 = vmatpush1.bf16.msra.mxu0 0
      %2082 = vmatprep.subr.bf16.mxu0 0
      %2083 = vmatpush1.bf16.msra.mxu0 0
      %2084 = vmatprep.subr.bf16.mxu0 0
      %2085 = vmatpush1.bf16.msra.mxu0 0
      %2086 = vmatprep.subr.bf16.mxu0 0
      %2087 = vmatpush1.bf16.msra.mxu0 0
      %2088 = vmatprep.subr.bf16.mxu0 0
      %2089 = vmatpush1.bf16.msra.mxu0 0
      %2090 = vmatprep.subr.bf16.mxu0 0
      %2091 = vmatpush1.bf16.msra.mxu0 0
      %2092 = vmatprep.subr.bf16.mxu0 0
      %2093 = vmatpush1.bf16.msra.mxu0 0
      %2094 = vmatprep.subr.bf16.mxu0 0
      %2095 = vmatpush1.bf16.msra.mxu0 0
      %2096 = vmatprep.subr.bf16.mxu0 0
      %2097 = vmatpush1.bf16.msra.mxu0 0
      %2098 = vmatprep.subr.bf16.mxu0 0
      %2099 = vmatpush1.bf16.msra.mxu0 0
      %2100 = vmatprep.subr.bf16.mxu0 0
      %2101 = vmatpush1.bf16.msra.mxu0 0
      %2102 = vmatprep.subr.bf16.mxu0 0
      %2103 = vmatpush1.bf16.msra.mxu0 0
      %2104 = vmatprep.subr.bf16.mxu0 0
      %2105 = vmatpush1.bf16.msra.mxu0 0
      %2106 = vmatprep.subr.bf16.mxu0 0
      %2107 = vmatpush1.bf16.msra.mxu0 0
      %2108 = vmatprep.mubr.bf16.mxu0 0
      %2109 = vmatmul.mubr.bf16.gmra.mrb[0].mxu0 %v2068
      %v2110 = vpop.f32.mrb[0].mxu0
      %v2111 = vadd.f32 0.0, %v2110
      %v2112 = vpop.f32.mrb[0].mxu0
      %v2113 = vpop.f32.mrb[0].mxu0
      %v2114 = vadd.f32 0.0, %v2113
      %v2115 = vpop.f32.mrb[0].mxu0
      %2116 = vmatprep.mubr.bf16.mxu0 0
      %2117 = vmatmul.mubr.bf16.gmra.mrb[0].mxu0 %v2071
      %v2118 = vpop.f32.mrb[0].mxu0
      %v2119 = vadd.f32 0.0, %v2118
      %v2120 = vpop.f32.mrb[0].mxu0
      %v2121 = vpop.f32.mrb[0].mxu0
      %v2122 = vpop.f32.mrb[0].mxu0
      %2123 = vdwg.mxu0
      %v2124 = vadd.f32 %v1680, %v2111
      %v2125 = vadd.f32 %v1681, %v2114
      %v2126 = vadd.f32 %v1682, %v2119
      %v2127 = vadd.f32 %v280, %v2124
      %v2128 = vadd.f32 %v281, %v2125
      %v2129 = vadd.f32 %v282, %v2126
      %v2130 = vld [vmem:[%s6] sm:$0x1]
      %v2132 = vlaneseq
      %v2133 = vshrl.u32 %v2132, 7
      %v2134 = vsub.s32 0, %v2133
      %v2135 = vrot.slane %v2130, %v2134
      %v2137 = vadd.f32 %v2127, %v2135
      %v2138 = vadd.f32 %v2128, %v2135
      %v2139 = vadd.f32 %v2129, %v2135
      %2140 = vst.msk [vmem:[%s278] sm:$0xff] %vm285, %v2137
      %2141 = vst.msk [vmem:[%s278 + $0x8] sm:$0xff] %vm285, %v2138
      %2142 = vst.msk [vmem:[%s278 + $0x10] sm:$0x1] %vm292, %v2139
      %p2143 = scmp.lt.s32.totalorder %s18, 1
      %s2144 = scalar_select %p2143, %s18, 1
      %s2145 = smul.addr %s2144, 3
      %s2146 = smul.addr %s2145, 8
      %s2147 = scalar_lea.vmem %s7, %s2146
      // Predicated region
      $region49: #{face_encoder_forward.6} parent=47 // pred_check
        %p2148 = pneg %p188
      $region50: #{face_encoder_forward.6} parent=47 // pred_check_branch
        %2150 = sbr.rel (%p2148) target = $region52
      $region51: #{face_encoder_forward.6} parent=47 // pred_region
        _
      $region52: #{face_encoder_forward.6} parent=47 // pred_fallthru
        _
    $region48: #{face_encoder_forward.6} parent=5 // pred_fallthru
      _
    %p2151 = scmp.le.s32.totalorder 2, %s13
    // Predicated region
    $region53: #{face_encoder_forward.6} parent=5 // pred_check
      %p2152 = pneg %p2151
    $region54: #{face_encoder_forward.6} parent=5 // pred_check_branch
      %2154 = sbr.rel (%p2152) target = $region56
    $region55: #{face_encoder_forward.6} parent=5 // pred_region
      %s2155 = ssub.s32 %s13, 2
      // Predicated region
      $region57: #{face_encoder_forward.6} parent=55 // pred_check
        %p2156 = pneg %p194
      $region58: #{face_encoder_forward.6} parent=55 // pred_check_branch
        %2158 = sbr.rel (%p2156) target = $region60
      $region59: #{face_encoder_forward.6} parent=55 // pred_region
        %p2159 = scmp.lt.s32.totalorder %s19, 1
        %s2160 = scalar_select %p2159, %s19, 1
        %s2161 = smul.addr %s2160, 3
        %s2162 = smul.addr %s2161, 8
        %s2163 = scalar_lea.vmem %s7, %s2162
      $region60: #{face_encoder_forward.6} parent=55 // pred_fallthru
        _
    $region56: #{face_encoder_forward.6} parent=5 // pred_fallthru
      _
  $region6: #{face_encoder_forward.6} parent=0 // loop_footer
    %s17 = sadd.s32 1, %s13
  $region7: #{face_encoder_forward.6} parent=0 // loop_footer_branch
    %12 = sbr.rel target = $region3
  $region8: #{face_encoder_forward.6} parent=0 // loop_exit
    _

// kernel: face_encoder_forward.7
$region0: #{face_encoder_forward.7}
  #allocation0 [shape = 'u32[]', space=smem, size = 0x4, offset = 0x4, fixed_abs, tag = 'smem constant byte address 0x4 - core index']
  #allocation1 [shape = 'u32[144,128]{1,0:T(1,128)}', space=vmem, size = 0x12000, scoped, tag = 'internal scratch']
  %s0 = inlined_call_operand.vmem [shape: f32[2,17,32], index: 0, kind: input, shape index: {}]
  %s1 = inlined_call_operand.vmem [shape: f32[1,32], index: 1, kind: input, shape index: {}]
  %s2 = inlined_call_operand.vmem [shape: f32[1,32], index: 2, kind: input, shape index: {}]
  %s3 = inlined_call_operand.vmem [shape: bf16[32,2048], index: 3, kind: input, shape index: {}]
  %s4 = inlined_call_operand.vmem [shape: f32[1,2048], index: 4, kind: input, shape index: {}]
  %s5 = inlined_call_operand.vmem [shape: bf16[2048,32], index: 5, kind: input, shape index: {}]
  %s6 = inlined_call_operand.vmem [shape: f32[1,32], index: 6, kind: input, shape index: {}]
  %s7 = inlined_call_operand.vmem [shape: f32[2,17,32], index: 7, kind: output, shape index: {}]
  %s8 = sld [smem:[#allocation0]]
  $region61: #{face_encoder_forward.7} parent=0
    _
  %s10 = ssub.s32 1, %s8
  %s11 = scalar_select 0, %s10, %s8
  loop: start=0, step=1, limit=4
  $region2: #{face_encoder_forward.7} parent=0 // loop_pre_header
    _
  $region3: #{face_encoder_forward.7} parent=0 // loop_header
    %s13 = sphi 0, %s17
    %p14 = scmp.ge.s32.totalorder %s13, 4
    %s23 = sphi 0, %s25
    %s26 = sphi 0, %s23
    %s27 = sphi 0, %s26
    %s43 = sphi 0, %s27
    %s47 = sphi 0, %s47
    %s49 = sphi 0, %s47
    %s50 = sphi 0, %s49
    %s64 = sphi 0, %s50
    %s68 = sphi 0, %s68
    %s70 = sphi 0, %s68
    %s71 = sphi 0, %s70
    %s85 = sphi 0, %s71
    %s89 = sphi 0, %s89
    %s91 = sphi 0, %s89
    %s92 = sphi 0, %s91
    %s106 = sphi 0, %s92
    %s110 = sphi 0, %s110
    %s112 = sphi 0, %s110
    %s113 = sphi 0, %s112
    %s127 = sphi 0, %s113
    %s131 = sphi 0, %s131
    %s133 = sphi 0, %s131
    %s134 = sphi 0, %s133
    %s148 = sphi 0, %s134
    %s152 = sphi 0, %s152
    %s154 = sphi 0, %s152
    %s155 = sphi 0, %s154
    %s169 = sphi 0, %s155
    %s175 = sphi 0, %s177
    %s178 = sphi 0, %s175
    %s179 = sphi 0, %s178
    %s195 = sphi 0, %s179
  $region4: #{face_encoder_forward.7} parent=0 // loop_header_branch
    %16 = sbr.rel (%p14) target = $region8
  $region5: #{face_encoder_forward.7} parent=0 // loop_body
    %s18 = ssub.s32 %s13, 1
    %s19 = ssub.s32 %s13, 2
    %s20 = sadd.s32 %s13, 1
    %s21 = ssub.s32 %s13, %s20
    %p22 = scmp.eq.s32.totalorder %s21, 0
    %s24 = sadd.s32 %s23, 1
    %s25 = scalar_select %p22, %s23, %s24
    %p28 = pneg %p22
    %p29 = scmp.eq.s32.totalorder %s13, 1
    %p30 = por %p28, %p29
    %p31 = scmp.ne.s32.totalorder %s23, %s26
    %p32 = scmp.eq.s32.totalorder %s13, 0
    %p33 = por %p31, %p32
    %p34 = scmp.ne.s32.totalorder %s23, %s26
    %p35 = scmp.eq.s32.totalorder %s18, 1
    %p36 = por %p34, %p35
    %p37 = scmp.ne.s32.totalorder %s26, %s27
    %p38 = scmp.eq.s32.totalorder %s18, 0
    %p39 = por %p37, %p38
    %p40 = scmp.ne.s32.totalorder %s26, %s27
    %p41 = scmp.eq.s32.totalorder %s19, 1
    %p42 = por %p40, %p41
    %p44 = scmp.ne.s32.totalorder %s27, %s43
    %p45 = scmp.eq.s32.totalorder %s19, 0
    %p46 = por %p44, %p45
    %s48 = sadd.s32 %s47, 1
    %p51 = scmp.eq.s32.totalorder %s13, 1
    %p52 = scmp.ne.s32.totalorder %s47, %s49
    %p53 = scmp.eq.s32.totalorder %s13, 0
    %p54 = por %p52, %p53
    %p55 = scmp.ne.s32.totalorder %s47, %s49
    %p56 = scmp.eq.s32.totalorder %s18, 1
    %p57 = por %p55, %p56
    %p58 = scmp.ne.s32.totalorder %s49, %s50
    %p59 = scmp.eq.s32.totalorder %s18, 0
    %p60 = por %p58, %p59
    %p61 = scmp.ne.s32.totalorder %s49, %s50
    %p62 = scmp.eq.s32.totalorder %s19, 1
    %p63 = por %p61, %p62
    %p65 = scmp.ne.s32.totalorder %s50, %s64
    %p66 = scmp.eq.s32.totalorder %s19, 0
    %p67 = por %p65, %p66
    %s69 = sadd.s32 %s68, 1
    %p72 = scmp.eq.s32.totalorder %s13, 1
    %p73 = scmp.ne.s32.totalorder %s68, %s70
    %p74 = scmp.eq.s32.totalorder %s13, 0
    %p75 = por %p73, %p74
    %p76 = scmp.ne.s32.totalorder %s68, %s70
    %p77 = scmp.eq.s32.totalorder %s18, 1
    %p78 = por %p76, %p77
    %p79 = scmp.ne.s32.totalorder %s70, %s71
    %p80 = scmp.eq.s32.totalorder %s18, 0
    %p81 = por %p79, %p80
    %p82 = scmp.ne.s32.totalorder %s70, %s71
    %p83 = scmp.eq.s32.totalorder %s19, 1
    %p84 = por %p82, %p83
    %p86 = scmp.ne.s32.totalorder %s71, %s85
    %p87 = scmp.eq.s32.totalorder %s19, 0
    %p88 = por %p86, %p87
    %s90 = sadd.s32 %s89, 1
    %p93 = scmp.eq.s32.totalorder %s13, 1
    %p94 = scmp.ne.s32.totalorder %s89, %s91
    %p95 = scmp.eq.s32.totalorder %s13, 0
    %p96 = por %p94, %p95
    %p97 = scmp.ne.s32.totalorder %s89, %s91
    %p98 = scmp.eq.s32.totalorder %s18, 1
    %p99 = por %p97, %p98
    %p100 = scmp.ne.s32.totalorder %s91, %s92
    %p101 = scmp.eq.s32.totalorder %s18, 0
    %p102 = por %p100, %p101
    %p103 = scmp.ne.s32.totalorder %s91, %s92
    %p104 = scmp.eq.s32.totalorder %s19, 1
    %p105 = por %p103, %p104
    %p107 = scmp.ne.s32.totalorder %s92, %s106
    %p108 = scmp.eq.s32.totalorder %s19, 0
    %p109 = por %p107, %p108
    %s111 = sadd.s32 %s110, 1
    %p114 = scmp.eq.s32.totalorder %s13, 1
    %p115 = scmp.ne.s32.totalorder %s110, %s112
    %p116 = scmp.eq.s32.totalorder %s13, 0
    %p117 = por %p115, %p116
    %p118 = scmp.ne.s32.totalorder %s110, %s112
    %p119 = scmp.eq.s32.totalorder %s18, 1
    %p120 = por %p118, %p119
    %p121 = scmp.ne.s32.totalorder %s112, %s113
    %p122 = scmp.eq.s32.totalorder %s18, 0
    %p123 = por %p121, %p122
    %p124 = scmp.ne.s32.totalorder %s112, %s113
    %p125 = scmp.eq.s32.totalorder %s19, 1
    %p126 = por %p124, %p125
    %p128 = scmp.ne.s32.totalorder %s113, %s127
    %p129 = scmp.eq.s32.totalorder %s19, 0
    %p130 = por %p128, %p129
    %s132 = sadd.s32 %s131, 1
    %p135 = scmp.eq.s32.totalorder %s13, 1
    %p136 = scmp.ne.s32.totalorder %s131, %s133
    %p137 = scmp.eq.s32.totalorder %s13, 0
    %p138 = por %p136, %p137
    %p139 = scmp.ne.s32.totalorder %s131, %s133
    %p140 = scmp.eq.s32.totalorder %s18, 1
    %p141 = por %p139, %p140
    %p142 = scmp.ne.s32.totalorder %s133, %s134
    %p143 = scmp.eq.s32.totalorder %s18, 0
    %p144 = por %p142, %p143
    %p145 = scmp.ne.s32.totalorder %s133, %s134
    %p146 = scmp.eq.s32.totalorder %s19, 1
    %p147 = por %p145, %p146
    %p149 = scmp.ne.s32.totalorder %s134, %s148
    %p150 = scmp.eq.s32.totalorder %s19, 0
    %p151 = por %p149, %p150
    %s153 = sadd.s32 %s152, 1
    %p156 = scmp.eq.s32.totalorder %s13, 1
    %p157 = scmp.ne.s32.totalorder %s152, %s154
    %p158 = scmp.eq.s32.totalorder %s13, 0
    %p159 = por %p157, %p158
    %p160 = scmp.ne.s32.totalorder %s152, %s154
    %p161 = scmp.eq.s32.totalorder %s18, 1
    %p162 = por %p160, %p161
    %p163 = scmp.ne.s32.totalorder %s154, %s155
    %p164 = scmp.eq.s32.totalorder %s18, 0
    %p165 = por %p163, %p164
    %p166 = scmp.ne.s32.totalorder %s154, %s155
    %p167 = scmp.eq.s32.totalorder %s19, 1
    %p168 = por %p166, %p167
    %p170 = scmp.ne.s32.totalorder %s155, %s169
    %p171 = scmp.eq.s32.totalorder %s19, 0
    %p172 = por %p170, %p171
    %s173 = ssub.s32 %s13, %s20
    %p174 = scmp.eq.s32.totalorder %s173, 0
    %s176 = sadd.s32 %s175, 1
    %s177 = scalar_select %p174, %s175, %s176
    %p180 = pneg %p174
    %p181 = scmp.eq.s32.totalorder %s13, 1
    %p182 = por %p180, %p181
    %p183 = scmp.ne.s32.totalorder %s175, %s178
    %p184 = scmp.eq.s32.totalorder %s13, 0
    %p185 = por %p183, %p184
    %p186 = scmp.ne.s32.totalorder %s175, %s178
    %p187 = scmp.eq.s32.totalorder %s18, 1
    %p188 = por %p186, %p187
    %p189 = scmp.ne.s32.totalorder %s178, %s179
    %p190 = scmp.eq.s32.totalorder %s18, 0
    %p191 = por %p189, %p190
    %p192 = scmp.ne.s32.totalorder %s178, %s179
    %p193 = scmp.eq.s32.totalorder %s19, 1
    %p194 = por %p192, %p193
    %p196 = scmp.ne.s32.totalorder %s179, %s195
    %p197 = scmp.eq.s32.totalorder %s19, 0
    %p198 = por %p196, %p197
    %p199 = scmp.le.s32.totalorder 1, %s13
    %p200 = scmp.lt.s32.totalorder %s13, 3
    %p201 = pnand %p199, %p200
    %p202 = pneg %p201
    // Predicated region
    $region9: #{face_encoder_forward.7} parent=5 // pred_check
      _
    $region10: #{face_encoder_forward.7} parent=5 // pred_check_branch
      %204 = sbr.rel (%p201) target = $region12
    $region11: #{face_encoder_forward.7} parent=5 // pred_region
      %s205 = ssub.s32 %s13, 1
      // Predicated region
      $region13: #{face_encoder_forward.7} parent=11 // pred_check
        %p206 = pneg %p60
      $region14: #{face_encoder_forward.7} parent=11 // pred_check_branch
        %208 = sbr.rel (%p206) target = $region16
      $region15: #{face_encoder_forward.7} parent=11 // pred_region
        _
      $region16: #{face_encoder_forward.7} parent=11 // pred_fallthru
        _
      // Predicated region
      $region17: #{face_encoder_forward.7} parent=11 // pred_check
        %p209 = pneg %p81
      $region18: #{face_encoder_forward.7} parent=11 // pred_check_branch
        %211 = sbr.rel (%p209) target = $region20
      $region19: #{face_encoder_forward.7} parent=11 // pred_region
        _
      $region20: #{face_encoder_forward.7} parent=11 // pred_fallthru
        _
      // Predicated region
      $region21: #{face_encoder_forward.7} parent=11 // pred_check
        %p212 = pneg %p102
      $region22: #{face_encoder_forward.7} parent=11 // pred_check_branch
        %214 = sbr.rel (%p212) target = $region24
      $region23: #{face_encoder_forward.7} parent=11 // pred_region
        _
      $region24: #{face_encoder_forward.7} parent=11 // pred_fallthru
        _
      // Predicated region
      $region25: #{face_encoder_forward.7} parent=11 // pred_check
        %p215 = pneg %p123
      $region26: #{face_encoder_forward.7} parent=11 // pred_check_branch
        %217 = sbr.rel (%p215) target = $region28
      $region27: #{face_encoder_forward.7} parent=11 // pred_region
        _
      $region28: #{face_encoder_forward.7} parent=11 // pred_fallthru
        _
      // Predicated region
      $region29: #{face_encoder_forward.7} parent=11 // pred_check
        %p218 = pneg %p144
      $region30: #{face_encoder_forward.7} parent=11 // pred_check_branch
        %220 = sbr.rel (%p218) target = $region32
      $region31: #{face_encoder_forward.7} parent=11 // pred_region
        _
      $region32: #{face_encoder_forward.7} parent=11 // pred_fallthru
        _
      // Predicated region
      $region33: #{face_encoder_forward.7} parent=11 // pred_check
        %p221 = pneg %p165
      $region34: #{face_encoder_forward.7} parent=11 // pred_check_branch
        %223 = sbr.rel (%p221) target = $region36
      $region35: #{face_encoder_forward.7} parent=11 // pred_region
        _
      $region36: #{face_encoder_forward.7} parent=11 // pred_fallthru
        _
    $region12: #{face_encoder_forward.7} parent=5 // pred_fallthru
      _
    %p224 = scmp.lt.s32.totalorder %s13, 2
    // Predicated region
    $region37: #{face_encoder_forward.7} parent=5 // pred_check
      %p225 = pneg %p224
    $region38: #{face_encoder_forward.7} parent=5 // pred_check_branch
      %227 = sbr.rel (%p225) target = $region40
    $region39: #{face_encoder_forward.7} parent=5 // pred_region
      // Predicated region
      $region41: #{face_encoder_forward.7} parent=39 // pred_check
        %p228 = pneg %p33
      $region42: #{face_encoder_forward.7} parent=39 // pred_check_branch
        %230 = sbr.rel (%p228) target = $region44
      $region43: #{face_encoder_forward.7} parent=39 // pred_region
        %p231 = scmp.lt.s32.totalorder %s13, 1
        %s232 = scalar_select %p231, %s13, 1
        %s233 = smul.addr %s232, 3
        %s234 = smul.addr %s233, 8
        %s235 = scalar_lea.vmem %s0, %s234
      $region44: #{face_encoder_forward.7} parent=39 // pred_fallthru
        _
    $region40: #{face_encoder_forward.7} parent=5 // pred_fallthru
      _
    %p236 = scmp.le.s32.totalorder 1, %s13
    %p237 = scmp.lt.s32.totalorder %s13, 3
    %p238 = pnand %p236, %p237
    %p239 = pneg %p238
    // Predicated region
    $region45: #{face_encoder_forward.7} parent=5 // pred_check
      _
    $region46: #{face_encoder_forward.7} parent=5 // pred_check_branch
      %241 = sbr.rel (%p238) target = $region48
    $region47: #{face_encoder_forward.7} parent=5 // pred_region
      %s242 = ssub.s32 %s13, 1
      %p243 = scmp.lt.s32.totalorder %s18, 1
      %s244 = scalar_select %p243, %s18, 1
      %s245 = smul.addr %s244, 3
      %s246 = smul.addr %s245, 8
      %s247 = scalar_lea.vmem %s0, %s246
      %p248 = pneg %p39
      %p249 = pneg %p36
      %p250 = pneg %p60
      %p251 = pneg %p57
      %p252 = pneg %p81
      %p253 = pneg %p78
      %p254 = pneg %p102
      %p255 = pneg %p99
      %p256 = pneg %p123
      %p257 = pneg %p120
      %p258 = pneg %p144
      %p259 = pneg %p141
      %p260 = pneg %p165
      %p261 = pneg %p162
      %p262 = pneg %p191
      %p263 = pneg %p188
      %p264 = scmp.lt.s32.totalorder %s18, 1
      %s265 = scalar_select %p264, %s18, 1
      %s266 = smul.addr %s265, 3
      %s267 = smul.addr %s266, 8
      %s268 = scalar_lea.vmem %s7, %s267
      %p269 = scmp.lt.s32.totalorder %s18, 1
      %s270 = scalar_select %p269, %s18, 1
      %s271 = smul.addr %s270, 3
      %s272 = smul.addr %s271, 8
      %s273 = scalar_lea.vmem %s0, %s272
      %p274 = scmp.lt.s32.totalorder %s18, 1
      %s275 = scalar_select %p274, %s18, 1
      %s276 = smul.addr %s275, 3
      %s277 = smul.addr %s276, 8
      %s278 = scalar_lea.vmem %s7, %s277
      %v280 = vld [vmem:[%s273] sm:$0xff]
      %v281 = vld [vmem:[%s273 + $0x8] sm:$0xff]
      %v282 = vld [vmem:[%s273 + $0x10] sm:$0x1]
      %v283 = vld [vmem:[%s1] sm:$0x1]
      %v284 = vld [vmem:[%s2] sm:$0x1]
      %vm285 = vcmask 261120
      %v286 = vsel %vm285, %v280, 0.0
      %287 = vadd.xlane.f32.xlu0 %v286
      %v288 = vpop.xlane.xlu0 %287
      %v289 = vsel %vm285, %v281, 0.0
      %290 = vadd.xlane.f32.xlu0 %v289
      %v291 = vpop.xlane.xlu0 %290
      %vm292 = vcmask 253952
      %v293 = vsel %vm292, %v282, 0.0
      %294 = vadd.xlane.f32.xlu0 %v293
      %v295 = vpop.xlane.xlu0 %294
      %v296 = vrcp.pop 32.0
      %v297 = vmul.f32 %v288, %v296
      %v298 = vmul.f32 %v291, %v296
      %v299 = vmul.f32 %v295, %v296
      %v300 = vsub.f32 %v280, %v297
      %v301 = vsub.f32 %v281, %v298
      %v302 = vsub.f32 %v282, %v299
      %v303 = vmul.f32 %v300, %v300
      %v304 = vmul.f32 %v301, %v301
      %v305 = vmul.f32 %v302, %v302
      %v306 = vsel %vm285, %v303, 0.0
      %307 = vadd.xlane.f32.xlu0 %v306
      %v308 = vpop.xlane.xlu0 %307
      %v309 = vsel %vm285, %v304, 0.0
      %310 = vadd.xlane.f32.xlu0 %v309
      %v311 = vpop.xlane.xlu0 %310
      %v312 = vsel %vm292, %v305, 0.0
      %313 = vadd.xlane.f32.xlu0 %v312
      %v314 = vpop.xlane.xlu0 %313
      %v315 = vmul.f32 %v308, %v296
      %v316 = vmul.f32 %v311, %v296
      %v317 = vmul.f32 %v314, %v296
      %v318 = vadd.f32 %v315, 1e-05
      %v319 = vadd.f32 %v316, 1e-05
      %v320 = vadd.f32 %v317, 1e-05
      %v321 = vrsqrt.pop %v318
      %v322 = vrsqrt.pop %v319
      %v323 = vrsqrt.pop %v320
      %v324 = vmul.f32 %v300, %v321
      %v325 = vmul.f32 %v301, %v322
      %v326 = vmul.f32 %v302, %v323
      %v328 = vlaneseq
      %v329 = vshrl.u32 %v328, 7
      %v330 = vsub.s32 0, %v329
      %v331 = vrot.slane %v283, %v330
      %v333 = vmul.f32 %v324, %v331
      %v334 = vmul.f32 %v325, %v331
      %v335 = vmul.f32 %v326, %v331
      %v337 = vlaneseq
      %v338 = vshrl.u32 %v337, 7
      %v339 = vsub.s32 0, %v338
      %v340 = vrot.slane %v284, %v339
      %v342 = vadd.f32 %v333, %v340
      %v343 = vadd.f32 %v334, %v340
      %v344 = vadd.f32 %v335, %v340
      %v345 = vpack.c.bf16 %v343, %v342
      %v346 = vpack.c.bf16 %v344, %v344
      %v347 = vld [vmem:[%s3] sm:$0xff]
      %v348 = vld [vmem:[%s3 + $0x8] sm:$0xff]
      %v349 = vld [vmem:[%s3 + $0x10] sm:$0xff]
      %v350 = vld [vmem:[%s3 + $0x18] sm:$0xff]
      %v351 = vld [vmem:[%s3 + $0x20] sm:$0xff]
      %v352 = vld [vmem:[%s3 + $0x28] sm:$0xff]
      %v353 = vld [vmem:[%s3 + $0x30] sm:$0xff]
      %v354 = vld [vmem:[%s3 + $0x38] sm:$0xff]
      %v355 = vld [vmem:[%s3 + $0x40] sm:$0xff]
      %v356 = vld [vmem:[%s3 + $0x48] sm:$0xff]
      %v357 = vld [vmem:[%s3 + $0x50] sm:$0xff]
      %v358 = vld [vmem:[%s3 + $0x58] sm:$0xff]
      %v359 = vld [vmem:[%s3 + $0x60] sm:$0xff]
      %v360 = vld [vmem:[%s3 + $0x68] sm:$0xff]
      %v361 = vld [vmem:[%s3 + $0x70] sm:$0xff]
      %v362 = vld [vmem:[%s3 + $0x78] sm:$0xff]
      %v363 = vld [vmem:[%s3 + $0x80] sm:$0xff]
      %v364 = vld [vmem:[%s3 + $0x88] sm:$0xff]
      %v365 = vld [vmem:[%s3 + $0x90] sm:$0xff]
      %v366 = vld [vmem:[%s3 + $0x98] sm:$0xff]
      %v367 = vld [vmem:[%s3 + $0xa0] sm:$0xff]
      %v368 = vld [vmem:[%s3 + $0xa8] sm:$0xff]
      %v369 = vld [vmem:[%s3 + $0xb0] sm:$0xff]
      %v370 = vld [vmem:[%s3 + $0xb8] sm:$0xff]
      %v371 = vld [vmem:[%s3 + $0xc0] sm:$0xff]
      %v372 = vld [vmem:[%s3 + $0xc8] sm:$0xff]
      %v373 = vld [vmem:[%s3 + $0xd0] sm:$0xff]
      %v374 = vld [vmem:[%s3 + $0xd8] sm:$0xff]
      %v375 = vld [vmem:[%s3 + $0xe0] sm:$0xff]
      %v376 = vld [vmem:[%s3 + $0xe8] sm:$0xff]
      %v377 = vld [vmem:[%s3 + $0xf0] sm:$0xff]
      %v378 = vld [vmem:[%s3 + $0xf8] sm:$0xff]
      %v379 = vld [vmem:[%s4] sm:$0xff]
      %v380 = vld [vmem:[%s4 + $0x8] sm:$0xff]
      %v383 = vlaneseq
      %v384 = vshrl.u32 %v383, 7
      %v385 = vsub.s32 0, %v384
      %v386 = vrot.slane %v379, %v385
      %v387 = vlaneseq
      %v388 = vshrl.u32 %v387, 7
      %v389 = vsub.s32 1, %v388
      %v390 = vrot.slane %v379, %v389
      %v391 = vlaneseq
      %v392 = vshrl.u32 %v391, 7
      %v393 = vsub.s32 2, %v392
      %v394 = vrot.slane %v379, %v393
      %v395 = vlaneseq
      %v396 = vshrl.u32 %v395, 7
      %v397 = vsub.s32 3, %v396
      %v398 = vrot.slane %v379, %v397
      %v399 = vlaneseq
      %v400 = vshrl.u32 %v399, 7
      %v401 = vsub.s32 4, %v400
      %v402 = vrot.slane %v379, %v401
      %v403 = vlaneseq
      %v404 = vshrl.u32 %v403, 7
      %v405 = vsub.s32 5, %v404
      %v406 = vrot.slane %v379, %v405
      %v407 = vlaneseq
      %v408 = vshrl.u32 %v407, 7
      %v409 = vsub.s32 6, %v408
      %v410 = vrot.slane %v379, %v409
      %v411 = vlaneseq
      %v412 = vshrl.u32 %v411, 7
      %v413 = vsub.s32 7, %v412
      %v414 = vrot.slane %v379, %v413
      %v415 = vlaneseq
      %v416 = vshrl.u32 %v415, 7
      %v417 = vsub.s32 0, %v416
      %v418 = vrot.slane %v380, %v417
      %v419 = vlaneseq
      %v420 = vshrl.u32 %v419, 7
      %v421 = vsub.s32 1, %v420
      %v422 = vrot.slane %v380, %v421
      %v423 = vlaneseq
      %v424 = vshrl.u32 %v423, 7
      %v425 = vsub.s32 2, %v424
      %v426 = vrot.slane %v380, %v425
      %v427 = vlaneseq
      %v428 = vshrl.u32 %v427, 7
      %v429 = vsub.s32 3, %v428
      %v430 = vrot.slane %v380, %v429
      %v431 = vlaneseq
      %v432 = vshrl.u32 %v431, 7
      %v433 = vsub.s32 4, %v432
      %v434 = vrot.slane %v380, %v433
      %v435 = vlaneseq
      %v436 = vshrl.u32 %v435, 7
      %v437 = vsub.s32 5, %v436
      %v438 = vrot.slane %v380, %v437
      %v439 = vlaneseq
      %v440 = vshrl.u32 %v439, 7
      %v441 = vsub.s32 6, %v440
      %v442 = vrot.slane %v380, %v441
      %v443 = vlaneseq
      %v444 = vshrl.u32 %v443, 7
      %v445 = vsub.s32 7, %v444
      %v446 = vrot.slane %v380, %v445
      %v495 = vunpack.c.l.b16 %v347
      %v496 = vunpack.c.h.b16 %v347
      %v497 = vunpack.c.l.b16 %v348
      %v498 = vunpack.c.h.b16 %v348
      %v499 = vunpack.c.l.b16 %v349
      %v500 = vunpack.c.h.b16 %v349
      %v501 = vunpack.c.l.b16 %v350
      %v502 = vunpack.c.h.b16 %v350
      %v503 = vunpack.c.l.b16 %v351
      %v504 = vunpack.c.h.b16 %v351
      %v505 = vunpack.c.l.b16 %v352
      %v506 = vunpack.c.h.b16 %v352
      %v507 = vunpack.c.l.b16 %v353
      %v508 = vunpack.c.h.b16 %v353
      %v509 = vunpack.c.l.b16 %v354
      %v510 = vunpack.c.h.b16 %v354
      %v511 = vunpack.c.l.b16 %v355
      %v512 = vunpack.c.h.b16 %v355
      %v513 = vunpack.c.l.b16 %v356
      %v514 = vunpack.c.h.b16 %v356
      %v515 = vunpack.c.l.b16 %v357
      %v516 = vunpack.c.h.b16 %v357
      %v517 = vunpack.c.l.b16 %v358
      %v518 = vunpack.c.h.b16 %v358
      %v519 = vunpack.c.l.b16 %v359
      %v520 = vunpack.c.h.b16 %v359
      %v521 = vunpack.c.l.b16 %v360
      %v522 = vunpack.c.h.b16 %v360
      %v523 = vunpack.c.l.b16 %v361
      %v524 = vunpack.c.h.b16 %v361
      %v525 = vunpack.c.l.b16 %v362
      %v526 = vunpack.c.h.b16 %v362
      %v527 = vunpack.c.l.b16 %v363
      %v528 = vunpack.c.h.b16 %v363
      %v529 = vunpack.c.l.b16 %v364
      %v530 = vunpack.c.h.b16 %v364
      %v531 = vunpack.c.l.b16 %v365
      %v532 = vunpack.c.h.b16 %v365
      %v533 = vunpack.c.l.b16 %v366
      %v534 = vunpack.c.h.b16 %v366
      %v535 = vunpack.c.l.b16 %v367
      %v536 = vunpack.c.h.b16 %v367
      %v537 = vunpack.c.l.b16 %v368
      %v538 = vunpack.c.h.b16 %v368
      %v539 = vunpack.c.l.b16 %v369
      %v540 = vunpack.c.h.b16 %v369
      %v541 = vunpack.c.l.b16 %v370
      %v542 = vunpack.c.h.b16 %v370
      %v543 = vunpack.c.l.b16 %v371
      %v544 = vunpack.c.h.b16 %v371
      %v545 = vunpack.c.l.b16 %v372
      %v546 = vunpack.c.h.b16 %v372
      %v547 = vunpack.c.l.b16 %v373
      %v548 = vunpack.c.h.b16 %v373
      %v549 = vunpack.c.l.b16 %v374
      %v550 = vunpack.c.h.b16 %v374
      %v551 = vunpack.c.l.b16 %v375
      %v552 = vunpack.c.h.b16 %v375
      %v553 = vunpack.c.l.b16 %v376
      %v554 = vunpack.c.h.b16 %v376
      %v555 = vunpack.c.l.b16 %v377
      %v556 = vunpack.c.h.b16 %v377
      %v557 = vunpack.c.l.b16 %v378
      %v558 = vunpack.c.h.b16 %v378
      %v559 = vpack.c.b16 %v511, %v495
      %v560 = vpack.c.b16 %v512, %v496
      %v561 = vpack.c.b16 %v513, %v497
      %v562 = vpack.c.b16 %v514, %v498
      %v563 = vpack.c.b16 %v515, %v499
      %v564 = vpack.c.b16 %v516, %v500
      %v565 = vpack.c.b16 %v517, %v501
      %v566 = vpack.c.b16 %v518, %v502
      %v567 = vpack.c.b16 %v519, %v503
      %v568 = vpack.c.b16 %v520, %v504
      %v569 = vpack.c.b16 %v521, %v505
      %v570 = vpack.c.b16 %v522, %v506
      %v571 = vpack.c.b16 %v523, %v507
      %v572 = vpack.c.b16 %v524, %v508
      %v573 = vpack.c.b16 %v525, %v509
      %v574 = vpack.c.b16 %v526, %v510
      %v575 = vpack.c.b16 %v543, %v527
      %v576 = vpack.c.b16 %v544, %v528
      %v577 = vpack.c.b16 %v545, %v529
      %v578 = vpack.c.b16 %v546, %v530
      %v579 = vpack.c.b16 %v547, %v531
      %v580 = vpack.c.b16 %v548, %v532
      %v581 = vpack.c.b16 %v549, %v533
      %v582 = vpack.c.b16 %v550, %v534
      %v583 = vpack.c.b16 %v551, %v535
      %v584 = vpack.c.b16 %v552, %v536
      %v585 = vpack.c.b16 %v553, %v537
      %v586 = vpack.c.b16 %v554, %v538
      %v587 = vpack.c.b16 %v555, %v539
      %v588 = vpack.c.b16 %v556, %v540
      %v589 = vpack.c.b16 %v557, %v541
      %v590 = vpack.c.b16 %v558, %v542
      %v624 = vsel %vm285, %v345, 0
      %v627 = vsel %vm285, %v346, 0
      %629 = vmatprep.subr.bf16.mxu0 %v560
      %630 = vmatpush1.bf16.msra.mxu0 %v559
      %631 = vmatprep.subr.bf16.mxu0 %v576
      %632 = vmatpush1.bf16.msra.mxu0 %v575
      %633 = vmatprep.subr.bf16.mxu0 0
      %634 = vmatpush1.bf16.msra.mxu0 0
      %635 = vmatprep.subr.bf16.mxu0 0
      %636 = vmatpush1.bf16.msra.mxu0 0
      %637 = vmatprep.subr.bf16.mxu0 0
      %638 = vmatpush1.bf16.msra.mxu0 0
      %639 = vmatprep.subr.bf16.mxu0 0
      %640 = vmatpush1.bf16.msra.mxu0 0
      %641 = vmatprep.subr.bf16.mxu0 0
      %642 = vmatpush1.bf16.msra.mxu0 0
      %643 = vmatprep.subr.bf16.mxu0 0
      %644 = vmatpush1.bf16.msra.mxu0 0
      %645 = vmatprep.subr.bf16.mxu0 0
      %646 = vmatpush1.bf16.msra.mxu0 0
      %647 = vmatprep.subr.bf16.mxu0 0
      %648 = vmatpush1.bf16.msra.mxu0 0
      %649 = vmatprep.subr.bf16.mxu0 0
      %650 = vmatpush1.bf16.msra.mxu0 0
      %651 = vmatprep.subr.bf16.mxu0 0
      %652 = vmatpush1.bf16.msra.mxu0 0
      %653 = vmatprep.subr.bf16.mxu0 0
      %654 = vmatpush1.bf16.msra.mxu0 0
      %655 = vmatprep.subr.bf16.mxu0 0
      %656 = vmatpush1.bf16.msra.mxu0 0
      %657 = vmatprep.subr.bf16.mxu0 0
      %658 = vmatpush1.bf16.msra.mxu0 0
      %659 = vmatprep.subr.bf16.mxu0 0
      %660 = vmatpush1.bf16.msra.mxu0 0
      %661 = vmatprep.mubr.bf16.mxu0 0
      %662 = vmatmul.mubr.bf16.gmra.mrb[0].mxu0 %v624
      %v663 = vpop.f32.mrb[0].mxu0
      %v664 = vadd.f32 %v386, %v663
      %v665 = vpop.f32.mrb[0].mxu0
      %v666 = vadd.f32 %v390, %v665
      %v667 = vpop.f32.mrb[0].mxu0
      %v668 = vadd.f32 %v386, %v667
      %v669 = vpop.f32.mrb[0].mxu0
      %v670 = vadd.f32 %v390, %v669
      %671 = vmatprep.mubr.bf16.mxu0 0
      %672 = vmatmul.mubr.bf16.gmra.mrb[0].mxu0 %v627
      %v673 = vpop.f32.mrb[0].mxu0
      %v674 = vadd.f32 %v386, %v673
      %v675 = vpop.f32.mrb[0].mxu0
      %v676 = vadd.f32 %v390, %v675
      %v677 = vpop.f32.mrb[0].mxu0
      %v678 = vpop.f32.mrb[0].mxu0
      %679 = vdwg.mxu0
      %680 = vmatprep.subr.bf16.mxu0 %v562
      %681 = vmatpush1.bf16.msra.mxu0 %v561
      %682 = vmatprep.subr.bf16.mxu0 %v578
      %683 = vmatpush1.bf16.msra.mxu0 %v577
      %684 = vmatprep.subr.bf16.mxu0 0
      %685 = vmatpush1.bf16.msra.mxu0 0
      %686 = vmatprep.subr.bf16.mxu0 0
      %687 = vmatpush1.bf16.msra.mxu0 0
      %688 = vmatprep.subr.bf16.mxu0 0
      %689 = vmatpush1.bf16.msra.mxu0 0
      %690 = vmatprep.subr.bf16.mxu0 0
      %691 = vmatpush1.bf16.msra.mxu0 0
      %692 = vmatprep.subr.bf16.mxu0 0
      %693 = vmatpush1.bf16.msra.mxu0 0
      %694 = vmatprep.subr.bf16.mxu0 0
      %695 = vmatpush1.bf16.msra.mxu0 0
      %696 = vmatprep.subr.bf16.mxu0 0
      %697 = vmatpush1.bf16.msra.mxu0 0
      %698 = vmatprep.subr.bf16.mxu0 0
      %699 = vmatpush1.bf16.msra.mxu0 0
      %700 = vmatprep.subr.bf16.mxu0 0
      %701 = vmatpush1.bf16.msra.mxu0 0
      %702 = vmatprep.subr.bf16.mxu0 0
      %703 = vmatpush1.bf16.msra.mxu0 0
      %704 = vmatprep.subr.bf16.mxu0 0
      %705 = vmatpush1.bf16.msra.mxu0 0
      %706 = vmatprep.subr.bf16.mxu0 0
      %707 = vmatpush1.bf16.msra.mxu0 0
      %708 = vmatprep.subr.bf16.mxu0 0
      %709 = vmatpush1.bf16.msra.mxu0 0
      %710 = vmatprep.subr.bf16.mxu0 0
      %711 = vmatpush1.bf16.msra.mxu0 0
      %712 = vmatprep.mubr.bf16.mxu0 0
      %713 = vmatmul.mubr.bf16.gmra.mrb[0].mxu0 %v624
      %v714 = vpop.f32.mrb[0].mxu0
      %v715 = vadd.f32 %v394, %v714
      %v716 = vpop.f32.mrb[0].mxu0
      %v717 = vadd.f32 %v398, %v716
      %v718 = vpop.f32.mrb[0].mxu0
      %v719 = vadd.f32 %v394, %v718
      %v720 = vpop.f32.mrb[0].mxu0
      %v721 = vadd.f32 %v398, %v720
      %722 = vmatprep.mubr.bf16.mxu0 0
      %723 = vmatmul.mubr.bf16.gmra.mrb[0].mxu0 %v627
      %v724 = vpop.f32.mrb[0].mxu0
      %v725 = vadd.f32 %v394, %v724
      %v726 = vpop.f32.mrb[0].mxu0
      %v727 = vadd.f32 %v398, %v726
      %v728 = vpop.f32.mrb[0].mxu0
      %v729 = vpop.f32.mrb[0].mxu0
      %730 = vdwg.mxu0
      %731 = vmatprep.subr.bf16.mxu0 %v564
      %732 = vmatpush1.bf16.msra.mxu0 %v563
      %733 = vmatprep.subr.bf16.mxu0 %v580
      %734 = vmatpush1.bf16.msra.mxu0 %v579
      %735 = vmatprep.subr.bf16.mxu0 0
      %736 = vmatpush1.bf16.msra.mxu0 0
      %737 = vmatprep.subr.bf16.mxu0 0
      %738 = vmatpush1.bf16.msra.mxu0 0
      %739 = vmatprep.subr.bf16.mxu0 0
      %740 = vmatpush1.bf16.msra.mxu0 0
      %741 = vmatprep.subr.bf16.mxu0 0
      %742 = vmatpush1.bf16.msra.mxu0 0
      %743 = vmatprep.subr.bf16.mxu0 0
      %744 = vmatpush1.bf16.msra.mxu0 0
      %745 = vmatprep.subr.bf16.mxu0 0
      %746 = vmatpush1.bf16.msra.mxu0 0
      %747 = vmatprep.subr.bf16.mxu0 0
      %748 = vmatpush1.bf16.msra.mxu0 0
      %749 = vmatprep.subr.bf16.mxu0 0
      %750 = vmatpush1.bf16.msra.mxu0 0
      %751 = vmatprep.subr.bf16.mxu0 0
      %752 = vmatpush1.bf16.msra.mxu0 0
      %753 = vmatprep.subr.bf16.mxu0 0
      %754 = vmatpush1.bf16.msra.mxu0 0
      %755 = vmatprep.subr.bf16.mxu0 0
      %756 = vmatpush1.bf16.msra.mxu0 0
      %757 = vmatprep.subr.bf16.mxu0 0
      %758 = vmatpush1.bf16.msra.mxu0 0
      %759 = vmatprep.subr.bf16.mxu0 0
      %760 = vmatpush1.bf16.msra.mxu0 0
      %761 = vmatprep.subr.bf16.mxu0 0
      %762 = vmatpush1.bf16.msra.mxu0 0
      %763 = vmatprep.mubr.bf16.mxu0 0
      %764 = vmatmul.mubr.bf16.gmra.mrb[0].mxu0 %v624
      %v765 = vpop.f32.mrb[0].mxu0
      %v766 = vadd.f32 %v402, %v765
      %v767 = vpop.f32.mrb[0].mxu0
      %v768 = vadd.f32 %v406, %v767
      %v769 = vpop.f32.mrb[0].mxu0
      %v770 = vadd.f32 %v402, %v769
      %v771 = vpop.f32.mrb[0].mxu0
      %v772 = vadd.f32 %v406, %v771
      %773 = vmatprep.mubr.bf16.mxu0 0
      %774 = vmatmul.mubr.bf16.gmra.mrb[0].mxu0 %v627
      %v775 = vpop.f32.mrb[0].mxu0
      %v776 = vadd.f32 %v402, %v775
      %v777 = vpop.f32.mrb[0].mxu0
      %v778 = vadd.f32 %v406, %v777
      %v779 = vpop.f32.mrb[0].mxu0
      %v780 = vpop.f32.mrb[0].mxu0
      %781 = vdwg.mxu0
      %782 = vmatprep.subr.bf16.mxu0 %v566
      %783 = vmatpush1.bf16.msra.mxu0 %v565
      %784 = vmatprep.subr.bf16.mxu0 %v582
      %785 = vmatpush1.bf16.msra.mxu0 %v581
      %786 = vmatprep.subr.bf16.mxu0 0
      %787 = vmatpush1.bf16.msra.mxu0 0
      %788 = vmatprep.subr.bf16.mxu0 0
      %789 = vmatpush1.bf16.msra.mxu0 0
      %790 = vmatprep.subr.bf16.mxu0 0
      %791 = vmatpush1.bf16.msra.mxu0 0
      %792 = vmatprep.subr.bf16.mxu0 0
      %793 = vmatpush1.bf16.msra.mxu0 0
      %794 = vmatprep.subr.bf16.mxu0 0
      %795 = vmatpush1.bf16.msra.mxu0 0
      %796 = vmatprep.subr.bf16.mxu0 0
      %797 = vmatpush1.bf16.msra.mxu0 0
      %798 = vmatprep.subr.bf16.mxu0 0
      %799 = vmatpush1.bf16.msra.mxu0 0
      %800 = vmatprep.subr.bf16.mxu0 0
      %801 = vmatpush1.bf16.msra.mxu0 0
      %802 = vmatprep.subr.bf16.mxu0 0
      %803 = vmatpush1.bf16.msra.mxu0 0
      %804 = vmatprep.subr.bf16.mxu0 0
      %805 = vmatpush1.bf16.msra.mxu0 0
      %806 = vmatprep.subr.bf16.mxu0 0
      %807 = vmatpush1.bf16.msra.mxu0 0
      %808 = vmatprep.subr.bf16.mxu0 0
      %809 = vmatpush1.bf16.msra.mxu0 0
      %810 = vmatprep.subr.bf16.mxu0 0
      %811 = vmatpush1.bf16.msra.mxu0 0
      %812 = vmatprep.subr.bf16.mxu0 0
      %813 = vmatpush1.bf16.msra.mxu0 0
      %814 = vmatprep.mubr.bf16.mxu0 0
      %815 = vmatmul.mubr.bf16.gmra.mrb[0].mxu0 %v624
      %v816 = vpop.f32.mrb[0].mxu0
      %v817 = vadd.f32 %v410, %v816
      %v818 = vpop.f32.mrb[0].mxu0
      %v819 = vadd.f32 %v414, %v818
      %v820 = vpop.f32.mrb[0].mxu0
      %v821 = vadd.f32 %v410, %v820
      %v822 = vpop.f32.mrb[0].mxu0
      %v823 = vadd.f32 %v414, %v822
      %824 = vmatprep.mubr.bf16.mxu0 0
      %825 = vmatmul.mubr.bf16.gmra.mrb[0].mxu0 %v627
      %v826 = vpop.f32.mrb[0].mxu0
      %v827 = vadd.f32 %v410, %v826
      %v828 = vpop.f32.mrb[0].mxu0
      %v829 = vadd.f32 %v414, %v828
      %v830 = vpop.f32.mrb[0].mxu0
      %v831 = vpop.f32.mrb[0].mxu0
      %832 = vdwg.mxu0
      %833 = vmatprep.subr.bf16.mxu0 %v568
      %834 = vmatpush1.bf16.msra.mxu0 %v567
      %835 = vmatprep.subr.bf16.mxu0 %v584
      %836 = vmatpush1.bf16.msra.mxu0 %v583
      %837 = vmatprep.subr.bf16.mxu0 0
      %838 = vmatpush1.bf16.msra.mxu0 0
      %839 = vmatprep.subr.bf16.mxu0 0
      %840 = vmatpush1.bf16.msra.mxu0 0
      %841 = vmatprep.subr.bf16.mxu0 0
      %842 = vmatpush1.bf16.msra.mxu0 0
      %843 = vmatprep.subr.bf16.mxu0 0
      %844 = vmatpush1.bf16.msra.mxu0 0
      %845 = vmatprep.subr.bf16.mxu0 0
      %846 = vmatpush1.bf16.msra.mxu0 0
      %847 = vmatprep.subr.bf16.mxu0 0
      %848 = vmatpush1.bf16.msra.mxu0 0
      %849 = vmatprep.subr.bf16.mxu0 0
      %850 = vmatpush1.bf16.msra.mxu0 0
      %851 = vmatprep.subr.bf16.mxu0 0
      %852 = vmatpush1.bf16.msra.mxu0 0
      %853 = vmatprep.subr.bf16.mxu0 0
      %854 = vmatpush1.bf16.msra.mxu0 0
      %855 = vmatprep.subr.bf16.mxu0 0
      %856 = vmatpush1.bf16.msra.mxu0 0
      %857 = vmatprep.subr.bf16.mxu0 0
      %858 = vmatpush1.bf16.msra.mxu0 0
      %859 = vmatprep.subr.bf16.mxu0 0
      %860 = vmatpush1.bf16.msra.mxu0 0
      %861 = vmatprep.subr.bf16.mxu0 0
      %862 = vmatpush1.bf16.msra.mxu0 0
      %863 = vmatprep.subr.bf16.mxu0 0
      %864 = vmatpush1.bf16.msra.mxu0 0
      %865 = vmatprep.mubr.bf16.mxu0 0
      %866 = vmatmul.mubr.bf16.gmra.mrb[0].mxu0 %v624
      %v867 = vpop.f32.mrb[0].mxu0
      %v868 = vadd.f32 %v418, %v867
      %v869 = vpop.f32.mrb[0].mxu0
      %v870 = vadd.f32 %v422, %v869
      %v871 = vpop.f32.mrb[0].mxu0
      %v872 = vadd.f32 %v418, %v871
      %v873 = vpop.f32.mrb[0].mxu0
      %v874 = vadd.f32 %v422, %v873
      %875 = vmatprep.mubr.bf16.mxu0 0
      %876 = vmatmul.mubr.bf16.gmra.mrb[0].mxu0 %v627
      %v877 = vpop.f32.mrb[0].mxu0
      %v878 = vadd.f32 %v418, %v877
      %v879 = vpop.f32.mrb[0].mxu0
      %v880 = vadd.f32 %v422, %v879
      %v881 = vpop.f32.mrb[0].mxu0
      %v882 = vpop.f32.mrb[0].mxu0
      %883 = vdwg.mxu0
      %884 = vmatprep.subr.bf16.mxu0 %v570
      %885 = vmatpush1.bf16.msra.mxu0 %v569
      %886 = vmatprep.subr.bf16.mxu0 %v586
      %887 = vmatpush1.bf16.msra.mxu0 %v585
      %888 = vmatprep.subr.bf16.mxu0 0
      %889 = vmatpush1.bf16.msra.mxu0 0
      %890 = vmatprep.subr.bf16.mxu0 0
      %891 = vmatpush1.bf16.msra.mxu0 0
      %892 = vmatprep.subr.bf16.mxu0 0
      %893 = vmatpush1.bf16.msra.mxu0 0
      %894 = vmatprep.subr.bf16.mxu0 0
      %895 = vmatpush1.bf16.msra.mxu0 0
      %896 = vmatprep.subr.bf16.mxu0 0
      %897 = vmatpush1.bf16.msra.mxu0 0
      %898 = vmatprep.subr.bf16.mxu0 0
      %899 = vmatpush1.bf16.msra.mxu0 0
      %900 = vmatprep.subr.bf16.mxu0 0
      %901 = vmatpush1.bf16.msra.mxu0 0
      %902 = vmatprep.subr.bf16.mxu0 0
      %903 = vmatpush1.bf16.msra.mxu0 0
      %904 = vmatprep.subr.bf16.mxu0 0
      %905 = vmatpush1.bf16.msra.mxu0 0
      %906 = vmatprep.subr.bf16.mxu0 0
      %907 = vmatpush1.bf16.msra.mxu0 0
      %908 = vmatprep.subr.bf16.mxu0 0
      %909 = vmatpush1.bf16.msra.mxu0 0
      %910 = vmatprep.subr.bf16.mxu0 0
      %911 = vmatpush1.bf16.msra.mxu0 0
      %912 = vmatprep.subr.bf16.mxu0 0
      %913 = vmatpush1.bf16.msra.mxu0 0
      %914 = vmatprep.subr.bf16.mxu0 0
      %915 = vmatpush1.bf16.msra.mxu0 0
      %916 = vmatprep.mubr.bf16.mxu0 0
      %917 = vmatmul.mubr.bf16.gmra.mrb[0].mxu0 %v624
      %v918 = vpop.f32.mrb[0].mxu0
      %v919 = vadd.f32 %v426, %v918
      %v920 = vpop.f32.mrb[0].mxu0
      %v921 = vadd.f32 %v430, %v920
      %v922 = vpop.f32.mrb[0].mxu0
      %v923 = vadd.f32 %v426, %v922
      %v924 = vpop.f32.mrb[0].mxu0
      %v925 = vadd.f32 %v430, %v924
      %926 = vmatprep.mubr.bf16.mxu0 0
      %927 = vmatmul.mubr.bf16.gmra.mrb[0].mxu0 %v627
      %v928 = vpop.f32.mrb[0].mxu0
      %v929 = vadd.f32 %v426, %v928
      %v930 = vpop.f32.mrb[0].mxu0
      %v931 = vadd.f32 %v430, %v930
      %v932 = vpop.f32.mrb[0].mxu0
      %v933 = vpop.f32.mrb[0].mxu0
      %934 = vdwg.mxu0
      %935 = vmatprep.subr.bf16.mxu0 %v572
      %936 = vmatpush1.bf16.msra.mxu0 %v571
      %937 = vmatprep.subr.bf16.mxu0 %v588
      %938 = vmatpush1.bf16.msra.mxu0 %v587
      %939 = vmatprep.subr.bf16.mxu0 0
      %940 = vmatpush1.bf16.msra.mxu0 0
      %941 = vmatprep.subr.bf16.mxu0 0
      %942 = vmatpush1.bf16.msra.mxu0 0
      %943 = vmatprep.subr.bf16.mxu0 0
      %944 = vmatpush1.bf16.msra.mxu0 0
      %945 = vmatprep.subr.bf16.mxu0 0
      %946 = vmatpush1.bf16.msra.mxu0 0
      %947 = vmatprep.subr.bf16.mxu0 0
      %948 = vmatpush1.bf16.msra.mxu0 0
      %949 = vmatprep.subr.bf16.mxu0 0
      %950 = vmatpush1.bf16.msra.mxu0 0
      %951 = vmatprep.subr.bf16.mxu0 0
      %952 = vmatpush1.bf16.msra.mxu0 0
      %953 = vmatprep.subr.bf16.mxu0 0
      %954 = vmatpush1.bf16.msra.mxu0 0
      %955 = vmatprep.subr.bf16.mxu0 0
      %956 = vmatpush1.bf16.msra.mxu0 0
      %957 = vmatprep.subr.bf16.mxu0 0
      %958 = vmatpush1.bf16.msra.mxu0 0
      %959 = vmatprep.subr.bf16.mxu0 0
      %960 = vmatpush1.bf16.msra.mxu0 0
      %961 = vmatprep.subr.bf16.mxu0 0
      %962 = vmatpush1.bf16.msra.mxu0 0
      %963 = vmatprep.subr.bf16.mxu0 0
      %964 = vmatpush1.bf16.msra.mxu0 0
      %965 = vmatprep.subr.bf16.mxu0 0
      %966 = vmatpush1.bf16.msra.mxu0 0
      %967 = vmatprep.mubr.bf16.mxu0 0
      %968 = vmatmul.mubr.bf16.gmra.mrb[0].mxu0 %v624
      %v969 = vpop.f32.mrb[0].mxu0
      %v970 = vadd.f32 %v434, %v969
      %v971 = vpop.f32.mrb[0].mxu0
      %v972 = vadd.f32 %v438, %v971
      %v973 = vpop.f32.mrb[0].mxu0
      %v974 = vadd.f32 %v434, %v973
      %v975 = vpop.f32.mrb[0].mxu0
      %v976 = vadd.f32 %v438, %v975
      %977 = vmatprep.mubr.bf16.mxu0 0
      %978 = vmatmul.mubr.bf16.gmra.mrb[0].mxu0 %v627
      %v979 = vpop.f32.mrb[0].mxu0
      %v980 = vadd.f32 %v434, %v979
      %v981 = vpop.f32.mrb[0].mxu0
      %v982 = vadd.f32 %v438, %v981
      %v983 = vpop.f32.mrb[0].mxu0
      %v984 = vpop.f32.mrb[0].mxu0
      %985 = vdwg.mxu0
      %986 = vmatprep.subr.bf16.mxu0 %v574
      %987 = vmatpush1.bf16.msra.mxu0 %v573
      %988 = vmatprep.subr.bf16.mxu0 %v590
      %989 = vmatpush1.bf16.msra.mxu0 %v589
      %990 = vmatprep.subr.bf16.mxu0 0
      %991 = vmatpush1.bf16.msra.mxu0 0
      %992 = vmatprep.subr.bf16.mxu0 0
      %993 = vmatpush1.bf16.msra.mxu0 0
      %994 = vmatprep.subr.bf16.mxu0 0
      %995 = vmatpush1.bf16.msra.mxu0 0
      %996 = vmatprep.subr.bf16.mxu0 0
      %997 = vmatpush1.bf16.msra.mxu0 0
      %998 = vmatprep.subr.bf16.mxu0 0
      %999 = vmatpush1.bf16.msra.mxu0 0
      %1000 = vmatprep.subr.bf16.mxu0 0
      %1001 = vmatpush1.bf16.msra.mxu0 0
      %1002 = vmatprep.subr.bf16.mxu0 0
      %1003 = vmatpush1.bf16.msra.mxu0 0
      %1004 = vmatprep.subr.bf16.mxu0 0
      %1005 = vmatpush1.bf16.msra.mxu0 0
      %1006 = vmatprep.subr.bf16.mxu0 0
      %1007 = vmatpush1.bf16.msra.mxu0 0
      %1008 = vmatprep.subr.bf16.mxu0 0
      %1009 = vmatpush1.bf16.msra.mxu0 0
      %1010 = vmatprep.subr.bf16.mxu0 0
      %1011 = vmatpush1.bf16.msra.mxu0 0
      %1012 = vmatprep.subr.bf16.mxu0 0
      %1013 = vmatpush1.bf16.msra.mxu0 0
      %1014 = vmatprep.subr.bf16.mxu0 0
      %1015 = vmatpush1.bf16.msra.mxu0 0
      %1016 = vmatprep.subr.bf16.mxu0 0
      %1017 = vmatpush1.bf16.msra.mxu0 0
      %1018 = vmatprep.mubr.bf16.mxu0 0
      %1019 = vmatmul.mubr.bf16.gmra.mrb[0].mxu0 %v624
      %v1020 = vpop.f32.mrb[0].mxu0
      %v1021 = vadd.f32 %v442, %v1020
      %v1022 = vpop.f32.mrb[0].mxu0
      %v1023 = vadd.f32 %v446, %v1022
      %v1024 = vpop.f32.mrb[0].mxu0
      %v1025 = vadd.f32 %v442, %v1024
      %v1026 = vpop.f32.mrb[0].mxu0
      %v1027 = vadd.f32 %v446, %v1026
      %1028 = vmatprep.mubr.bf16.mxu0 0
      %1029 = vmatmul.mubr.bf16.gmra.mrb[0].mxu0 %v627
      %v1030 = vpop.f32.mrb[0].mxu0
      %v1031 = vadd.f32 %v442, %v1030
      %v1032 = vpop.f32.mrb[0].mxu0
      %v1033 = vadd.f32 %v446, %v1032
      %v1034 = vpop.f32.mrb[0].mxu0
      %v1035 = vpop.f32.mrb[0].mxu0
      %1036 = vdwg.mxu0
      %v1037 = vmax.f32 %v664, 0.0
      %v1038 = vmax.f32 %v666, 0.0
      %v1039 = vmax.f32 %v715, 0.0
      %v1040 = vmax.f32 %v717, 0.0
      %v1041 = vmax.f32 %v766, 0.0
      %v1042 = vmax.f32 %v768, 0.0
      %v1043 = vmax.f32 %v817, 0.0
      %v1044 = vmax.f32 %v819, 0.0
      %v1045 = vmax.f32 %v868, 0.0
      %v1046 = vmax.f32 %v870, 0.0
      %v1047 = vmax.f32 %v919, 0.0
      %v1048 = vmax.f32 %v921, 0.0
      %v1049 = vmax.f32 %v970, 0.0
      %v1050 = vmax.f32 %v972, 0.0
      %v1051 = vmax.f32 %v1021, 0.0
      %v1052 = vmax.f32 %v1023, 0.0
      %v1053 = vmax.f32 %v668, 0.0
      %v1054 = vmax.f32 %v670, 0.0
      %v1055 = vmax.f32 %v719, 0.0
      %v1056 = vmax.f32 %v721, 0.0
      %v1057 = vmax.f32 %v770, 0.0
      %v1058 = vmax.f32 %v772, 0.0
      %v1059 = vmax.f32 %v821, 0.0
      %v1060 = vmax.f32 %v823, 0.0
      %v1061 = vmax.f32 %v872, 0.0
      %v1062 = vmax.f32 %v874, 0.0
      %v1063 = vmax.f32 %v923, 0.0
      %v1064 = vmax.f32 %v925, 0.0
      %v1065 = vmax.f32 %v974, 0.0
      %v1066 = vmax.f32 %v976, 0.0
      %v1067 = vmax.f32 %v1025, 0.0
      %v1068 = vmax.f32 %v1027, 0.0
      %v1069 = vmax.f32 %v674, 0.0
      %v1070 = vmax.f32 %v676, 0.0
      %v1071 = vmax.f32 %v725, 0.0
      %v1072 = vmax.f32 %v727, 0.0
      %v1073 = vmax.f32 %v776, 0.0
      %v1074 = vmax.f32 %v778, 0.0
      %v1075 = vmax.f32 %v827, 0.0
      %v1076 = vmax.f32 %v829, 0.0
      %v1077 = vmax.f32 %v878, 0.0
      %v1078 = vmax.f32 %v880, 0.0
      %v1079 = vmax.f32 %v929, 0.0
      %v1080 = vmax.f32 %v931, 0.0
      %v1081 = vmax.f32 %v980, 0.0
      %v1082 = vmax.f32 %v982, 0.0
      %v1083 = vmax.f32 %v1031, 0.0
      %v1084 = vmax.f32 %v1033, 0.0
      %v1085 = vpack.c.bf16 %v1053, %v1037
      %v1086 = vpack.c.bf16 %v1054, %v1038
      %v1087 = vpack.c.bf16 %v1055, %v1039
      %v1088 = vpack.c.bf16 %v1056, %v1040
      %v1089 = vpack.c.bf16 %v1057, %v1041
      %v1090 = vpack.c.bf16 %v1058, %v1042
      %v1091 = vpack.c.bf16 %v1059, %v1043
      %v1092 = vpack.c.bf16 %v1060, %v1044
      %v1093 = vpack.c.bf16 %v1061, %v1045
      %v1094 = vpack.c.bf16 %v1062, %v1046
      %v1095 = vpack.c.bf16 %v1063, %v1047
      %v1096 = vpack.c.bf16 %v1064, %v1048
      %v1097 = vpack.c.bf16 %v1065, %v1049
      %v1098 = vpack.c.bf16 %v1066, %v1050
      %v1099 = vpack.c.bf16 %v1067, %v1051
      %v1100 = vpack.c.bf16 %v1068, %v1052
      %v1101 = vpack.c.bf16 %v1069, %v1069
      %v1102 = vpack.c.bf16 %v1070, %v1070
      %v1103 = vpack.c.bf16 %v1071, %v1071
      %v1104 = vpack.c.bf16 %v1072, %v1072
      %v1105 = vpack.c.bf16 %v1073, %v1073
      %v1106 = vpack.c.bf16 %v1074, %v1074
      %v1107 = vpack.c.bf16 %v1075, %v1075
      %v1108 = vpack.c.bf16 %v1076, %v1076
      %v1109 = vpack.c.bf16 %v1077, %v1077
      %v1110 = vpack.c.bf16 %v1078, %v1078
      %v1111 = vpack.c.bf16 %v1079, %v1079
      %v1112 = vpack.c.bf16 %v1080, %v1080
      %v1113 = vpack.c.bf16 %v1081, %v1081
      %v1114 = vpack.c.bf16 %v1082, %v1082
      %v1115 = vpack.c.bf16 %v1083, %v1083
      %v1116 = vpack.c.bf16 %v1084, %v1084
      %v1117 = vld [vmem:[%s5] sm:$0xf]
      %v1118 = vld [vmem:[%s5 + $0x4] sm:$0xf]
      %v1119 = vld [vmem:[%s5 + $0x8] sm:$0xf]
      %v1120 = vld [vmem:[%s5 + $0xc] sm:$0xf]
      %v1121 = vld [vmem:[%s5 + $0x10] sm:$0xf]
      %v1122 = vld [vmem:[%s5 + $0x14] sm:$0xf]
      %v1123 = vld [vmem:[%s5 + $0x18] sm:$0xf]
      %v1124 = vld [vmem:[%s5 + $0x1c] sm:$0xf]
      %v1125 = vld [vmem:[%s5 + $0x20] sm:$0xf]
      %v1126 = vld [vmem:[%s5 + $0x24] sm:$0xf]
      %v1127 = vld [vmem:[%s5 + $0x28] sm:$0xf]
      %v1128 = vld [vmem:[%s5 + $0x2c] sm:$0xf]
      %v1129 = vld [vmem:[%s5 + $0x30] sm:$0xf]
      %v1130 = vld [vmem:[%s5 + $0x34] sm:$0xf]
      %v1131 = vld [vmem:[%s5 + $0x38] sm:$0xf]
      %v1132 = vld [vmem:[%s5 + $0x3c] sm:$0xf]
      %v1133 = vld [vmem:[%s5 + $0x40] sm:$0xf]
      %v1134 = vld [vmem:[%s5 + $0x44] sm:$0xf]
      %v1135 = vld [vmem:[%s5 + $0x48] sm:$0xf]
      %v1136 = vld [vmem:[%s5 + $0x4c] sm:$0xf]
      %v1137 = vld [vmem:[%s5 + $0x50] sm:$0xf]
      %v1138 = vld [vmem:[%s5 + $0x54] sm:$0xf]
      %v1139 = vld [vmem:[%s5 + $0x58] sm:$0xf]
      %v1140 = vld [vmem:[%s5 + $0x5c] sm:$0xf]
      %v1141 = vld [vmem:[%s5 + $0x60] sm:$0xf]
      %v1142 = vld [vmem:[%s5 + $0x64] sm:$0xf]
      %v1143 = vld [vmem:[%s5 + $0x68] sm:$0xf]
      %v1144 = vld [vmem:[%s5 + $0x6c] sm:$0xf]
      %v1145 = vld [vmem:[%s5 + $0x70] sm:$0xf]
      %v1146 = vld [vmem:[%s5 + $0x74] sm:$0xf]
      %v1147 = vld [vmem:[%s5 + $0x78] sm:$0xf]
      %v1148 = vld [vmem:[%s5 + $0x7c] sm:$0xf]
      %v1149 = vld [vmem:[%s5 + $0x80] sm:$0xf]
      %v1150 = vld [vmem:[%s5 + $0x84] sm:$0xf]
      %v1151 = vld [vmem:[%s5 + $0x88] sm:$0xf]
      %v1152 = vld [vmem:[%s5 + $0x8c] sm:$0xf]
      %v1153 = vld [vmem:[%s5 + $0x90] sm:$0xf]
      %v1154 = vld [vmem:[%s5 + $0x94] sm:$0xf]
      %v1155 = vld [vmem:[%s5 + $0x98] sm:$0xf]
      %v1156 = vld [vmem:[%s5 + $0x9c] sm:$0xf]
      %v1157 = vld [vmem:[%s5 + $0xa0] sm:$0xf]
      %v1158 = vld [vmem:[%s5 + $0xa4] sm:$0xf]
      %v1159 = vld [vmem:[%s5 + $0xa8] sm:$0xf]
      %v1160 = vld [vmem:[%s5 + $0xac] sm:$0xf]
      %v1161 = vld [vmem:[%s5 + $0xb0] sm:$0xf]
      %v1162 = vld [vmem:[%s5 + $0xb4] sm:$0xf]
      %v1163 = vld [vmem:[%s5 + $0xb8] sm:$0xf]
      %v1164 = vld [vmem:[%s5 + $0xbc] sm:$0xf]
      %v1165 = vld [vmem:[%s5 + $0xc0] sm:$0xf]
      %v1166 = vld [vmem:[%s5 + $0xc4] sm:$0xf]
      %v1167 = vld [vmem:[%s5 + $0xc8] sm:$0xf]
      %v1168 = vld [vmem:[%s5 + $0xcc] sm:$0xf]
      %v1169 = vld [vmem:[%s5 + $0xd0] sm:$0xf]
      %v1170 = vld [vmem:[%s5 + $0xd4] sm:$0xf]
      %v1171 = vld [vmem:[%s5 + $0xd8] sm:$0xf]
      %v1172 = vld [vmem:[%s5 + $0xdc] sm:$0xf]
      %v1173 = vld [vmem:[%s5 + $0xe0] sm:$0xf]
      %v1174 = vld [vmem:[%s5 + $0xe4] sm:$0xf]
      %v1175 = vld [vmem:[%s5 + $0xe8] sm:$0xf]
      %v1176 = vld [vmem:[%s5 + $0xec] sm:$0xf]
      %v1177 = vld [vmem:[%s5 + $0xf0] sm:$0xf]
      %v1178 = vld [vmem:[%s5 + $0xf4] sm:$0xf]
      %v1179 = vld [vmem:[%s5 + $0xf8] sm:$0xf]
      %v1180 = vld [vmem:[%s5 + $0xfc] sm:$0xf]
      %v1181 = vld [vmem:[%s5 + $0x100] sm:$0xf]
      %v1182 = vld [vmem:[%s5 + $0x104] sm:$0xf]
      %v1183 = vld [vmem:[%s5 + $0x108] sm:$0xf]
      %v1184 = vld [vmem:[%s5 + $0x10c] sm:$0xf]
      %v1185 = vld [vmem:[%s5 + $0x110] sm:$0xf]
      %v1186 = vld [vmem:[%s5 + $0x114] sm:$0xf]
      %v1187 = vld [vmem:[%s5 + $0x118] sm:$0xf]
      %v1188 = vld [vmem:[%s5 + $0x11c] sm:$0xf]
      %v1189 = vld [vmem:[%s5 + $0x120] sm:$0xf]
      %v1190 = vld [vmem:[%s5 + $0x124] sm:$0xf]
      %v1191 = vld [vmem:[%s5 + $0x128] sm:$0xf]
      %v1192 = vld [vmem:[%s5 + $0x12c] sm:$0xf]
      %v1193 = vld [vmem:[%s5 + $0x130] sm:$0xf]
      %v1194 = vld [vmem:[%s5 + $0x134] sm:$0xf]
      %v1195 = vld [vmem:[%s5 + $0x138] sm:$0xf]
      %v1196 = vld [vmem:[%s5 + $0x13c] sm:$0xf]
      %v1197 = vld [vmem:[%s5 + $0x140] sm:$0xf]
      %v1198 = vld [vmem:[%s5 + $0x144] sm:$0xf]
      %v1199 = vld [vmem:[%s5 + $0x148] sm:$0xf]
      %v1200 = vld [vmem:[%s5 + $0x14c] sm:$0xf]
      %v1201 = vld [vmem:[%s5 + $0x150] sm:$0xf]
      %v1202 = vld [vmem:[%s5 + $0x154] sm:$0xf]
      %v1203 = vld [vmem:[%s5 + $0x158] sm:$0xf]
      %v1204 = vld [vmem:[%s5 + $0x15c] sm:$0xf]
      %v1205 = vld [vmem:[%s5 + $0x160] sm:$0xf]
      %v1206 = vld [vmem:[%s5 + $0x164] sm:$0xf]
      %v1207 = vld [vmem:[%s5 + $0x168] sm:$0xf]
      %v1208 = vld [vmem:[%s5 + $0x16c] sm:$0xf]
      %v1209 = vld [vmem:[%s5 + $0x170] sm:$0xf]
      %v1210 = vld [vmem:[%s5 + $0x174] sm:$0xf]
      %v1211 = vld [vmem:[%s5 + $0x178] sm:$0xf]
      %v1212 = vld [vmem:[%s5 + $0x17c] sm:$0xf]
      %v1213 = vld [vmem:[%s5 + $0x180] sm:$0xf]
      %v1214 = vld [vmem:[%s5 + $0x184] sm:$0xf]
      %v1215 = vld [vmem:[%s5 + $0x188] sm:$0xf]
      %v1216 = vld [vmem:[%s5 + $0x18c] sm:$0xf]
      %v1217 = vld [vmem:[%s5 + $0x190] sm:$0xf]
      %v1218 = vld [vmem:[%s5 + $0x194] sm:$0xf]
      %v1219 = vld [vmem:[%s5 + $0x198] sm:$0xf]
      %v1220 = vld [vmem:[%s5 + $0x19c] sm:$0xf]
      %v1221 = vld [vmem:[%s5 + $0x1a0] sm:$0xf]
      %v1222 = vld [vmem:[%s5 + $0x1a4] sm:$0xf]
      %v1223 = vld [vmem:[%s5 + $0x1a8] sm:$0xf]
      %v1224 = vld [vmem:[%s5 + $0x1ac] sm:$0xf]
      %v1225 = vld [vmem:[%s5 + $0x1b0] sm:$0xf]
      %v1226 = vld [vmem:[%s5 + $0x1b4] sm:$0xf]
      %v1227 = vld [vmem:[%s5 + $0x1b8] sm:$0xf]
      %v1228 = vld [vmem:[%s5 + $0x1bc] sm:$0xf]
      %v1229 = vld [vmem:[%s5 + $0x1c0] sm:$0xf]
      %v1230 = vld [vmem:[%s5 + $0x1c4] sm:$0xf]
      %v1231 = vld [vmem:[%s5 + $0x1c8] sm:$0xf]
      %v1232 = vld [vmem:[%s5 + $0x1cc] sm:$0xf]
      %v1233 = vld [vmem:[%s5 + $0x1d0] sm:$0xf]
      %v1234 = vld [vmem:[%s5 + $0x1d4] sm:$0xf]
      %v1235 = vld [vmem:[%s5 + $0x1d8] sm:$0xf]
      %v1236 = vld [vmem:[%s5 + $0x1dc] sm:$0xf]
      %v1237 = vld [vmem:[%s5 + $0x1e0] sm:$0xf]
      %v1238 = vld [vmem:[%s5 + $0x1e4] sm:$0xf]
      %v1239 = vld [vmem:[%s5 + $0x1e8] sm:$0xf]
      %v1240 = vld [vmem:[%s5 + $0x1ec] sm:$0xf]
      %v1241 = vld [vmem:[%s5 + $0x1f0] sm:$0xf]
      %v1242 = vld [vmem:[%s5 + $0x1f4] sm:$0xf]
      %v1243 = vld [vmem:[%s5 + $0x1f8] sm:$0xf]
      %v1244 = vld [vmem:[%s5 + $0x1fc] sm:$0xf]
      %v1245 = vld [vmem:[%s5 + $0x200] sm:$0xf]
      %v1246 = vld [vmem:[%s5 + $0x204] sm:$0xf]
      %v1247 = vld [vmem:[%s5 + $0x208] sm:$0xf]
      %v1248 = vld [vmem:[%s5 + $0x20c] sm:$0xf]
      %v1249 = vld [vmem:[%s5 + $0x210] sm:$0xf]
      %v1250 = vld [vmem:[%s5 + $0x214] sm:$0xf]
      %v1251 = vld [vmem:[%s5 + $0x218] sm:$0xf]
      %v1252 = vld [vmem:[%s5 + $0x21c] sm:$0xf]
      %v1253 = vld [vmem:[%s5 + $0x220] sm:$0xf]
      %v1254 = vld [vmem:[%s5 + $0x224] sm:$0xf]
      %v1255 = vld [vmem:[%s5 + $0x228] sm:$0xf]
      %v1256 = vld [vmem:[%s5 + $0x22c] sm:$0xf]
      %v1257 = vld [vmem:[%s5 + $0x230] sm:$0xf]
      %v1258 = vld [vmem:[%s5 + $0x234] sm:$0xf]
      %v1259 = vld [vmem:[%s5 + $0x238] sm:$0xf]
      %v1260 = vld [vmem:[%s5 + $0x23c] sm:$0xf]
      %v1261 = vld [vmem:[%s5 + $0x240] sm:$0xf]
      %v1262 = vld [vmem:[%s5 + $0x244] sm:$0xf]
      %v1263 = vld [vmem:[%s5 + $0x248] sm:$0xf]
      %v1264 = vld [vmem:[%s5 + $0x24c] sm:$0xf]
      %v1265 = vld [vmem:[%s5 + $0x250] sm:$0xf]
      %v1266 = vld [vmem:[%s5 + $0x254] sm:$0xf]
      %v1267 = vld [vmem:[%s5 + $0x258] sm:$0xf]
      %v1268 = vld [vmem:[%s5 + $0x25c] sm:$0xf]
      %v1269 = vld [vmem:[%s5 + $0x260] sm:$0xf]
      %v1270 = vld [vmem:[%s5 + $0x264] sm:$0xf]
      %v1271 = vld [vmem:[%s5 + $0x268] sm:$0xf]
      %v1272 = vld [vmem:[%s5 + $0x26c] sm:$0xf]
      %v1273 = vld [vmem:[%s5 + $0x270] sm:$0xf]
      %v1274 = vld [vmem:[%s5 + $0x274] sm:$0xf]
      %v1275 = vld [vmem:[%s5 + $0x278] sm:$0xf]
      %v1276 = vld [vmem:[%s5 + $0x27c] sm:$0xf]
      %v1277 = vld [vmem:[%s5 + $0x280] sm:$0xf]
      %v1278 = vld [vmem:[%s5 + $0x284] sm:$0xf]
      %v1279 = vld [vmem:[%s5 + $0x288] sm:$0xf]
      %v1280 = vld [vmem:[%s5 + $0x28c] sm:$0xf]
      %v1281 = vld [vmem:[%s5 + $0x290] sm:$0xf]
      %v1282 = vld [vmem:[%s5 + $0x294] sm:$0xf]
      %v1283 = vld [vmem:[%s5 + $0x298] sm:$0xf]
      %v1284 = vld [vmem:[%s5 + $0x29c] sm:$0xf]
      %v1285 = vld [vmem:[%s5 + $0x2a0] sm:$0xf]
      %v1286 = vld [vmem:[%s5 + $0x2a4] sm:$0xf]
      %v1287 = vld [vmem:[%s5 + $0x2a8] sm:$0xf]
      %v1288 = vld [vmem:[%s5 + $0x2ac] sm:$0xf]
      %v1289 = vld [vmem:[%s5 + $0x2b0] sm:$0xf]
      %v1290 = vld [vmem:[%s5 + $0x2b4] sm:$0xf]
      %v1291 = vld [vmem:[%s5 + $0x2b8] sm:$0xf]
      %v1292 = vld [vmem:[%s5 + $0x2bc] sm:$0xf]
      %v1293 = vld [vmem:[%s5 + $0x2c0] sm:$0xf]
      %v1294 = vld [vmem:[%s5 + $0x2c4] sm:$0xf]
      %v1295 = vld [vmem:[%s5 + $0x2c8] sm:$0xf]
      %v1296 = vld [vmem:[%s5 + $0x2cc] sm:$0xf]
      %v1297 = vld [vmem:[%s5 + $0x2d0] sm:$0xf]
      %v1298 = vld [vmem:[%s5 + $0x2d4] sm:$0xf]
      %v1299 = vld [vmem:[%s5 + $0x2d8] sm:$0xf]
      %v1300 = vld [vmem:[%s5 + $0x2dc] sm:$0xf]
      %v1301 = vld [vmem:[%s5 + $0x2e0] sm:$0xf]
      %v1302 = vld [vmem:[%s5 + $0x2e4] sm:$0xf]
      %v1303 = vld [vmem:[%s5 + $0x2e8] sm:$0xf]
      %v1304 = vld [vmem:[%s5 + $0x2ec] sm:$0xf]
      %v1305 = vld [vmem:[%s5 + $0x2f0] sm:$0xf]
      %v1306 = vld [vmem:[%s5 + $0x2f4] sm:$0xf]
      %v1307 = vld [vmem:[%s5 + $0x2f8] sm:$0xf]
      %v1308 = vld [vmem:[%s5 + $0x2fc] sm:$0xf]
      %v1309 = vld [vmem:[%s5 + $0x300] sm:$0xf]
      %v1310 = vld [vmem:[%s5 + $0x304] sm:$0xf]
      %v1311 = vld [vmem:[%s5 + $0x308] sm:$0xf]
      %v1312 = vld [vmem:[%s5 + $0x30c] sm:$0xf]
      %v1313 = vld [vmem:[%s5 + $0x310] sm:$0xf]
      %v1314 = vld [vmem:[%s5 + $0x314] sm:$0xf]
      %v1315 = vld [vmem:[%s5 + $0x318] sm:$0xf]
      %v1316 = vld [vmem:[%s5 + $0x31c] sm:$0xf]
      %v1317 = vld [vmem:[%s5 + $0x320] sm:$0xf]
      %v1318 = vld [vmem:[%s5 + $0x324] sm:$0xf]
      %v1319 = vld [vmem:[%s5 + $0x328] sm:$0xf]
      %v1320 = vld [vmem:[%s5 + $0x32c] sm:$0xf]
      %v1321 = vld [vmem:[%s5 + $0x330] sm:$0xf]
      %v1322 = vld [vmem:[%s5 + $0x334] sm:$0xf]
      %v1323 = vld [vmem:[%s5 + $0x338] sm:$0xf]
      %v1324 = vld [vmem:[%s5 + $0x33c] sm:$0xf]
      %v1325 = vld [vmem:[%s5 + $0x340] sm:$0xf]
      %v1326 = vld [vmem:[%s5 + $0x344] sm:$0xf]
      %v1327 = vld [vmem:[%s5 + $0x348] sm:$0xf]
      %v1328 = vld [vmem:[%s5 + $0x34c] sm:$0xf]
      %v1329 = vld [vmem:[%s5 + $0x350] sm:$0xf]
      %v1330 = vld [vmem:[%s5 + $0x354] sm:$0xf]
      %v1331 = vld [vmem:[%s5 + $0x358] sm:$0xf]
      %v1332 = vld [vmem:[%s5 + $0x35c] sm:$0xf]
      %v1333 = vld [vmem:[%s5 + $0x360] sm:$0xf]
      %v1334 = vld [vmem:[%s5 + $0x364] sm:$0xf]
      %v1335 = vld [vmem:[%s5 + $0x368] sm:$0xf]
      %v1336 = vld [vmem:[%s5 + $0x36c] sm:$0xf]
      %v1337 = vld [vmem:[%s5 + $0x370] sm:$0xf]
      %v1338 = vld [vmem:[%s5 + $0x374] sm:$0xf]
      %v1339 = vld [vmem:[%s5 + $0x378] sm:$0xf]
      %v1340 = vld [vmem:[%s5 + $0x37c] sm:$0xf]
      %v1341 = vld [vmem:[%s5 + $0x380] sm:$0xf]
      %v1342 = vld [vmem:[%s5 + $0x384] sm:$0xf]
      %v1343 = vld [vmem:[%s5 + $0x388] sm:$0xf]
      %v1344 = vld [vmem:[%s5 + $0x38c] sm:$0xf]
      %v1345 = vld [vmem:[%s5 + $0x390] sm:$0xf]
      %v1346 = vld [vmem:[%s5 + $0x394] sm:$0xf]
      %v1347 = vld [vmem:[%s5 + $0x398] sm:$0xf]
      %v1348 = vld [vmem:[%s5 + $0x39c] sm:$0xf]
      %v1349 = vld [vmem:[%s5 + $0x3a0] sm:$0xf]
      %v1350 = vld [vmem:[%s5 + $0x3a4] sm:$0xf]
      %v1351 = vld [vmem:[%s5 + $0x3a8] sm:$0xf]
      %v1352 = vld [vmem:[%s5 + $0x3ac] sm:$0xf]
      %v1353 = vld [vmem:[%s5 + $0x3b0] sm:$0xf]
      %v1354 = vld [vmem:[%s5 + $0x3b4] sm:$0xf]
      %v1355 = vld [vmem:[%s5 + $0x3b8] sm:$0xf]
      %v1356 = vld [vmem:[%s5 + $0x3bc] sm:$0xf]
      %v1357 = vld [vmem:[%s5 + $0x3c0] sm:$0xf]
      %v1358 = vld [vmem:[%s5 + $0x3c4] sm:$0xf]
      %v1359 = vld [vmem:[%s5 + $0x3c8] sm:$0xf]
      %v1360 = vld [vmem:[%s5 + $0x3cc] sm:$0xf]
      %v1361 = vld [vmem:[%s5 + $0x3d0] sm:$0xf]
      %v1362 = vld [vmem:[%s5 + $0x3d4] sm:$0xf]
      %v1363 = vld [vmem:[%s5 + $0x3d8] sm:$0xf]
      %v1364 = vld [vmem:[%s5 + $0x3dc] sm:$0xf]
      %v1365 = vld [vmem:[%s5 + $0x3e0] sm:$0xf]
      %v1366 = vld [vmem:[%s5 + $0x3e4] sm:$0xf]
      %v1367 = vld [vmem:[%s5 + $0x3e8] sm:$0xf]
      %v1368 = vld [vmem:[%s5 + $0x3ec] sm:$0xf]
      %v1369 = vld [vmem:[%s5 + $0x3f0] sm:$0xf]
      %v1370 = vld [vmem:[%s5 + $0x3f4] sm:$0xf]
      %v1371 = vld [vmem:[%s5 + $0x3f8] sm:$0xf]
      %v1372 = vld [vmem:[%s5 + $0x3fc] sm:$0xf]
      %v1373 = vld [vmem:[%s6] sm:$0x1]
      %v1375 = vlaneseq
      %v1376 = vshrl.u32 %v1375, 7
      %v1377 = vsub.s32 0, %v1376
      %v1378 = vrot.slane %v1373, %v1377
      %v1636 = vunpack.c.l.b16 %v1117
      %v1637 = vunpack.c.l.b16 %v1118
      %v1638 = vunpack.c.l.b16 %v1119
      %v1639 = vunpack.c.l.b16 %v1120
      %v1640 = vunpack.c.l.b16 %v1121
      %v1641 = vunpack.c.l.b16 %v1122
      %v1642 = vunpack.c.l.b16 %v1123
      %v1643 = vunpack.c.l.b16 %v1124
      %v1644 = vunpack.c.l.b16 %v1125
      %v1645 = vunpack.c.l.b16 %v1126
      %v1646 = vunpack.c.l.b16 %v1127
      %v1647 = vunpack.c.l.b16 %v1128
      %v1648 = vunpack.c.l.b16 %v1129
      %v1649 = vunpack.c.l.b16 %v1130
      %v1650 = vunpack.c.l.b16 %v1131
      %v1651 = vunpack.c.l.b16 %v1132
      %v1652 = vunpack.c.l.b16 %v1133
      %v1653 = vunpack.c.l.b16 %v1134
      %v1654 = vunpack.c.l.b16 %v1135
      %v1655 = vunpack.c.l.b16 %v1136
      %v1656 = vunpack.c.l.b16 %v1137
      %v1657 = vunpack.c.l.b16 %v1138
      %v1658 = vunpack.c.l.b16 %v1139
      %v1659 = vunpack.c.l.b16 %v1140
      %v1660 = vunpack.c.l.b16 %v1141
      %v1661 = vunpack.c.l.b16 %v1142
      %v1662 = vunpack.c.l.b16 %v1143
      %v1663 = vunpack.c.l.b16 %v1144
      %v1664 = vunpack.c.l.b16 %v1145
      %v1665 = vunpack.c.l.b16 %v1146
      %v1666 = vunpack.c.l.b16 %v1147
      %v1667 = vunpack.c.l.b16 %v1148
      %v1668 = vunpack.c.l.b16 %v1149
      %v1669 = vunpack.c.l.b16 %v1150
      %v1670 = vunpack.c.l.b16 %v1151
      %v1671 = vunpack.c.l.b16 %v1152
      %v1672 = vunpack.c.l.b16 %v1153
      %v1673 = vunpack.c.l.b16 %v1154
      %v1674 = vunpack.c.l.b16 %v1155
      %v1675 = vunpack.c.l.b16 %v1156
      %v1676 = vunpack.c.l.b16 %v1157
      %v1677 = vunpack.c.l.b16 %v1158
      %v1678 = vunpack.c.l.b16 %v1159
      %v1679 = vunpack.c.l.b16 %v1160
      %v1680 = vunpack.c.l.b16 %v1161
      %v1681 = vunpack.c.l.b16 %v1162
      %v1682 = vunpack.c.l.b16 %v1163
      %v1683 = vunpack.c.l.b16 %v1164
      %v1684 = vunpack.c.l.b16 %v1165
      %v1685 = vunpack.c.l.b16 %v1166
      %v1686 = vunpack.c.l.b16 %v1167
      %v1687 = vunpack.c.l.b16 %v1168
      %v1688 = vunpack.c.l.b16 %v1169
      %v1689 = vunpack.c.l.b16 %v1170
      %v1690 = vunpack.c.l.b16 %v1171
      %v1691 = vunpack.c.l.b16 %v1172
      %v1692 = vunpack.c.l.b16 %v1173
      %v1693 = vunpack.c.l.b16 %v1174
      %v1694 = vunpack.c.l.b16 %v1175
      %v1695 = vunpack.c.l.b16 %v1176
      %v1696 = vunpack.c.l.b16 %v1177
      %v1697 = vunpack.c.l.b16 %v1178
      %v1698 = vunpack.c.l.b16 %v1179
      %v1699 = vunpack.c.l.b16 %v1180
      %v1700 = vunpack.c.l.b16 %v1181
      %v1701 = vunpack.c.l.b16 %v1182
      %v1702 = vunpack.c.l.b16 %v1183
      %v1703 = vunpack.c.l.b16 %v1184
      %v1704 = vunpack.c.l.b16 %v1185
      %v1705 = vunpack.c.l.b16 %v1186
      %v1706 = vunpack.c.l.b16 %v1187
      %v1707 = vunpack.c.l.b16 %v1188
      %v1708 = vunpack.c.l.b16 %v1189
      %v1709 = vunpack.c.l.b16 %v1190
      %v1710 = vunpack.c.l.b16 %v1191
      %v1711 = vunpack.c.l.b16 %v1192
      %v1712 = vunpack.c.l.b16 %v1193
      %v1713 = vunpack.c.l.b16 %v1194
      %v1714 = vunpack.c.l.b16 %v1195
      %v1715 = vunpack.c.l.b16 %v1196
      %v1716 = vunpack.c.l.b16 %v1197
      %v1717 = vunpack.c.l.b16 %v1198
      %v1718 = vunpack.c.l.b16 %v1199
      %v1719 = vunpack.c.l.b16 %v1200
      %v1720 = vunpack.c.l.b16 %v1201
      %v1721 = vunpack.c.l.b16 %v1202
      %v1722 = vunpack.c.l.b16 %v1203
      %v1723 = vunpack.c.l.b16 %v1204
      %v1724 = vunpack.c.l.b16 %v1205
      %v1725 = vunpack.c.l.b16 %v1206
      %v1726 = vunpack.c.l.b16 %v1207
      %v1727 = vunpack.c.l.b16 %v1208
      %v1728 = vunpack.c.l.b16 %v1209
      %v1729 = vunpack.c.l.b16 %v1210
      %v1730 = vunpack.c.l.b16 %v1211
      %v1731 = vunpack.c.l.b16 %v1212
      %v1732 = vunpack.c.l.b16 %v1213
      %v1733 = vunpack.c.l.b16 %v1214
      %v1734 = vunpack.c.l.b16 %v1215
      %v1735 = vunpack.c.l.b16 %v1216
      %v1736 = vunpack.c.l.b16 %v1217
      %v1737 = vunpack.c.l.b16 %v1218
      %v1738 = vunpack.c.l.b16 %v1219
      %v1739 = vunpack.c.l.b16 %v1220
      %v1740 = vunpack.c.l.b16 %v1221
      %v1741 = vunpack.c.l.b16 %v1222
      %v1742 = vunpack.c.l.b16 %v1223
      %v1743 = vunpack.c.l.b16 %v1224
      %v1744 = vunpack.c.l.b16 %v1225
      %v1745 = vunpack.c.l.b16 %v1226
      %v1746 = vunpack.c.l.b16 %v1227
      %v1747 = vunpack.c.l.b16 %v1228
      %v1748 = vunpack.c.l.b16 %v1229
      %v1749 = vunpack.c.l.b16 %v1230
      %v1750 = vunpack.c.l.b16 %v1231
      %v1751 = vunpack.c.l.b16 %v1232
      %v1752 = vunpack.c.l.b16 %v1233
      %v1753 = vunpack.c.l.b16 %v1234
      %v1754 = vunpack.c.l.b16 %v1235
      %v1755 = vunpack.c.l.b16 %v1236
      %v1756 = vunpack.c.l.b16 %v1237
      %v1757 = vunpack.c.l.b16 %v1238
      %v1758 = vunpack.c.l.b16 %v1239
      %v1759 = vunpack.c.l.b16 %v1240
      %v1760 = vunpack.c.l.b16 %v1241
      %v1761 = vunpack.c.l.b16 %v1242
      %v1762 = vunpack.c.l.b16 %v1243
      %v1763 = vunpack.c.l.b16 %v1244
      %v1764 = vunpack.c.l.b16 %v1245
      %v1765 = vunpack.c.l.b16 %v1246
      %v1766 = vunpack.c.l.b16 %v1247
      %v1767 = vunpack.c.l.b16 %v1248
      %v1768 = vunpack.c.l.b16 %v1249
      %v1769 = vunpack.c.l.b16 %v1250
      %v1770 = vunpack.c.l.b16 %v1251
      %v1771 = vunpack.c.l.b16 %v1252
      %v1772 = vunpack.c.l.b16 %v1253
      %v1773 = vunpack.c.l.b16 %v1254
      %v1774 = vunpack.c.l.b16 %v1255
      %v1775 = vunpack.c.l.b16 %v1256
      %v1776 = vunpack.c.l.b16 %v1257
      %v1777 = vunpack.c.l.b16 %v1258
      %v1778 = vunpack.c.l.b16 %v1259
      %v1779 = vunpack.c.l.b16 %v1260
      %v1780 = vunpack.c.l.b16 %v1261
      %v1781 = vunpack.c.l.b16 %v1262
      %v1782 = vunpack.c.l.b16 %v1263
      %v1783 = vunpack.c.l.b16 %v1264
      %v1784 = vunpack.c.l.b16 %v1265
      %v1785 = vunpack.c.l.b16 %v1266
      %v1786 = vunpack.c.l.b16 %v1267
      %v1787 = vunpack.c.l.b16 %v1268
      %v1788 = vunpack.c.l.b16 %v1269
      %v1789 = vunpack.c.l.b16 %v1270
      %v1790 = vunpack.c.l.b16 %v1271
      %v1791 = vunpack.c.l.b16 %v1272
      %v1792 = vunpack.c.l.b16 %v1273
      %v1793 = vunpack.c.l.b16 %v1274
      %v1794 = vunpack.c.l.b16 %v1275
      %v1795 = vunpack.c.l.b16 %v1276
      %v1796 = vunpack.c.l.b16 %v1277
      %v1797 = vunpack.c.l.b16 %v1278
      %v1798 = vunpack.c.l.b16 %v1279
      %v1799 = vunpack.c.l.b16 %v1280
      %v1800 = vunpack.c.l.b16 %v1281
      %v1801 = vunpack.c.l.b16 %v1282
      %v1802 = vunpack.c.l.b16 %v1283
      %v1803 = vunpack.c.l.b16 %v1284
      %v1804 = vunpack.c.l.b16 %v1285
      %v1805 = vunpack.c.l.b16 %v1286
      %v1806 = vunpack.c.l.b16 %v1287
      %v1807 = vunpack.c.l.b16 %v1288
      %v1808 = vunpack.c.l.b16 %v1289
      %v1809 = vunpack.c.l.b16 %v1290
      %v1810 = vunpack.c.l.b16 %v1291
      %v1811 = vunpack.c.l.b16 %v1292
      %v1812 = vunpack.c.l.b16 %v1293
      %v1813 = vunpack.c.l.b16 %v1294
      %v1814 = vunpack.c.l.b16 %v1295
      %v1815 = vunpack.c.l.b16 %v1296
      %v1816 = vunpack.c.l.b16 %v1297
      %v1817 = vunpack.c.l.b16 %v1298
      %v1818 = vunpack.c.l.b16 %v1299
      %v1819 = vunpack.c.l.b16 %v1300
      %v1820 = vunpack.c.l.b16 %v1301
      %v1821 = vunpack.c.l.b16 %v1302
      %v1822 = vunpack.c.l.b16 %v1303
      %v1823 = vunpack.c.l.b16 %v1304
      %v1824 = vunpack.c.l.b16 %v1305
      %v1825 = vunpack.c.l.b16 %v1306
      %v1826 = vunpack.c.l.b16 %v1307
      %v1827 = vunpack.c.l.b16 %v1308
      %v1828 = vunpack.c.l.b16 %v1309
      %v1829 = vunpack.c.l.b16 %v1310
      %v1830 = vunpack.c.l.b16 %v1311
      %v1831 = vunpack.c.l.b16 %v1312
      %v1832 = vunpack.c.l.b16 %v1313
      %v1833 = vunpack.c.l.b16 %v1314
      %v1834 = vunpack.c.l.b16 %v1315
      %v1835 = vunpack.c.l.b16 %v1316
      %v1836 = vunpack.c.l.b16 %v1317
      %v1837 = vunpack.c.l.b16 %v1318
      %v1838 = vunpack.c.l.b16 %v1319
      %v1839 = vunpack.c.l.b16 %v1320
      %v1840 = vunpack.c.l.b16 %v1321
      %v1841 = vunpack.c.l.b16 %v1322
      %v1842 = vunpack.c.l.b16 %v1323
      %v1843 = vunpack.c.l.b16 %v1324
      %v1844 = vunpack.c.l.b16 %v1325
      %v1845 = vunpack.c.l.b16 %v1326
      %v1846 = vunpack.c.l.b16 %v1327
      %v1847 = vunpack.c.l.b16 %v1328
      %v1848 = vunpack.c.l.b16 %v1329
      %v1849 = vunpack.c.l.b16 %v1330
      %v1850 = vunpack.c.l.b16 %v1331
      %v1851 = vunpack.c.l.b16 %v1332
      %v1852 = vunpack.c.l.b16 %v1333
      %v1853 = vunpack.c.l.b16 %v1334
      %v1854 = vunpack.c.l.b16 %v1335
      %v1855 = vunpack.c.l.b16 %v1336
      %v1856 = vunpack.c.l.b16 %v1337
      %v1857 = vunpack.c.l.b16 %v1338
      %v1858 = vunpack.c.l.b16 %v1339
      %v1859 = vunpack.c.l.b16 %v1340
      %v1860 = vunpack.c.l.b16 %v1341
      %v1861 = vunpack.c.l.b16 %v1342
      %v1862 = vunpack.c.l.b16 %v1343
      %v1863 = vunpack.c.l.b16 %v1344
      %v1864 = vunpack.c.l.b16 %v1345
      %v1865 = vunpack.c.l.b16 %v1346
      %v1866 = vunpack.c.l.b16 %v1347
      %v1867 = vunpack.c.l.b16 %v1348
      %v1868 = vunpack.c.l.b16 %v1349
      %v1869 = vunpack.c.l.b16 %v1350
      %v1870 = vunpack.c.l.b16 %v1351
      %v1871 = vunpack.c.l.b16 %v1352
      %v1872 = vunpack.c.l.b16 %v1353
      %v1873 = vunpack.c.l.b16 %v1354
      %v1874 = vunpack.c.l.b16 %v1355
      %v1875 = vunpack.c.l.b16 %v1356
      %v1876 = vunpack.c.l.b16 %v1357
      %v1877 = vunpack.c.l.b16 %v1358
      %v1878 = vunpack.c.l.b16 %v1359
      %v1879 = vunpack.c.l.b16 %v1360
      %v1880 = vunpack.c.l.b16 %v1361
      %v1881 = vunpack.c.l.b16 %v1362
      %v1882 = vunpack.c.l.b16 %v1363
      %v1883 = vunpack.c.l.b16 %v1364
      %v1884 = vunpack.c.l.b16 %v1365
      %v1885 = vunpack.c.l.b16 %v1366
      %v1886 = vunpack.c.l.b16 %v1367
      %v1887 = vunpack.c.l.b16 %v1368
      %v1888 = vunpack.c.l.b16 %v1369
      %v1889 = vunpack.c.l.b16 %v1370
      %v1890 = vunpack.c.l.b16 %v1371
      %v1891 = vunpack.c.l.b16 %v1372
      %v1892 = vpack.c.b16 %v1637, %v1636
      %v1893 = vpack.c.b16 %v1639, %v1638
      %v1894 = vpack.c.b16 %v1641, %v1640
      %v1895 = vpack.c.b16 %v1643, %v1642
      %v1896 = vpack.c.b16 %v1645, %v1644
      %v1897 = vpack.c.b16 %v1647, %v1646
      %v1898 = vpack.c.b16 %v1649, %v1648
      %v1899 = vpack.c.b16 %v1651, %v1650
      %v1900 = vpack.c.b16 %v1653, %v1652
      %v1901 = vpack.c.b16 %v1655, %v1654
      %v1902 = vpack.c.b16 %v1657, %v1656
      %v1903 = vpack.c.b16 %v1659, %v1658
      %v1904 = vpack.c.b16 %v1661, %v1660
      %v1905 = vpack.c.b16 %v1663, %v1662
      %v1906 = vpack.c.b16 %v1665, %v1664
      %v1907 = vpack.c.b16 %v1667, %v1666
      %v1908 = vpack.c.b16 %v1669, %v1668
      %v1909 = vpack.c.b16 %v1671, %v1670
      %v1910 = vpack.c.b16 %v1673, %v1672
      %v1911 = vpack.c.b16 %v1675, %v1674
      %v1912 = vpack.c.b16 %v1677, %v1676
      %v1913 = vpack.c.b16 %v1679, %v1678
      %v1914 = vpack.c.b16 %v1681, %v1680
      %v1915 = vpack.c.b16 %v1683, %v1682
      %v1916 = vpack.c.b16 %v1685, %v1684
      %v1917 = vpack.c.b16 %v1687, %v1686
      %v1918 = vpack.c.b16 %v1689, %v1688
      %v1919 = vpack.c.b16 %v1691, %v1690
      %v1920 = vpack.c.b16 %v1693, %v1692
      %v1921 = vpack.c.b16 %v1695, %v1694
      %v1922 = vpack.c.b16 %v1697, %v1696
      %v1923 = vpack.c.b16 %v1699, %v1698
      %v1924 = vpack.c.b16 %v1701, %v1700
      %v1925 = vpack.c.b16 %v1703, %v1702
      %v1926 = vpack.c.b16 %v1705, %v1704
      %v1927 = vpack.c.b16 %v1707, %v1706
      %v1928 = vpack.c.b16 %v1709, %v1708
      %v1929 = vpack.c.b16 %v1711, %v1710
      %v1930 = vpack.c.b16 %v1713, %v1712
      %v1931 = vpack.c.b16 %v1715, %v1714
      %v1932 = vpack.c.b16 %v1717, %v1716
      %v1933 = vpack.c.b16 %v1719, %v1718
      %v1934 = vpack.c.b16 %v1721, %v1720
      %v1935 = vpack.c.b16 %v1723, %v1722
      %v1936 = vpack.c.b16 %v1725, %v1724
      %v1937 = vpack.c.b16 %v1727, %v1726
      %v1938 = vpack.c.b16 %v1729, %v1728
      %v1939 = vpack.c.b16 %v1731, %v1730
      %v1940 = vpack.c.b16 %v1733, %v1732
      %v1941 = vpack.c.b16 %v1735, %v1734
      %v1942 = vpack.c.b16 %v1737, %v1736
      %v1943 = vpack.c.b16 %v1739, %v1738
      %v1944 = vpack.c.b16 %v1741, %v1740
      %v1945 = vpack.c.b16 %v1743, %v1742
      %v1946 = vpack.c.b16 %v1745, %v1744
      %v1947 = vpack.c.b16 %v1747, %v1746
      %v1948 = vpack.c.b16 %v1749, %v1748
      %v1949 = vpack.c.b16 %v1751, %v1750
      %v1950 = vpack.c.b16 %v1753, %v1752
      %v1951 = vpack.c.b16 %v1755, %v1754
      %v1952 = vpack.c.b16 %v1757, %v1756
      %v1953 = vpack.c.b16 %v1759, %v1758
      %v1954 = vpack.c.b16 %v1761, %v1760
      %v1955 = vpack.c.b16 %v1763, %v1762
      %v1956 = vpack.c.b16 %v1765, %v1764
      %v1957 = vpack.c.b16 %v1767, %v1766
      %v1958 = vpack.c.b16 %v1769, %v1768
      %v1959 = vpack.c.b16 %v1771, %v1770
      %v1960 = vpack.c.b16 %v1773, %v1772
      %v1961 = vpack.c.b16 %v1775, %v1774
      %v1962 = vpack.c.b16 %v1777, %v1776
      %v1963 = vpack.c.b16 %v1779, %v1778
      %v1964 = vpack.c.b16 %v1781, %v1780
      %v1965 = vpack.c.b16 %v1783, %v1782
      %v1966 = vpack.c.b16 %v1785, %v1784
      %v1967 = vpack.c.b16 %v1787, %v1786
      %v1968 = vpack.c.b16 %v1789, %v1788
      %v1969 = vpack.c.b16 %v1791, %v1790
      %v1970 = vpack.c.b16 %v1793, %v1792
      %v1971 = vpack.c.b16 %v1795, %v1794
      %v1972 = vpack.c.b16 %v1797, %v1796
      %v1973 = vpack.c.b16 %v1799, %v1798
      %v1974 = vpack.c.b16 %v1801, %v1800
      %v1975 = vpack.c.b16 %v1803, %v1802
      %v1976 = vpack.c.b16 %v1805, %v1804
      %v1977 = vpack.c.b16 %v1807, %v1806
      %v1978 = vpack.c.b16 %v1809, %v1808
      %v1979 = vpack.c.b16 %v1811, %v1810
      %v1980 = vpack.c.b16 %v1813, %v1812
      %v1981 = vpack.c.b16 %v1815, %v1814
      %v1982 = vpack.c.b16 %v1817, %v1816
      %v1983 = vpack.c.b16 %v1819, %v1818
      %v1984 = vpack.c.b16 %v1821, %v1820
      %v1985 = vpack.c.b16 %v1823, %v1822
      %v1986 = vpack.c.b16 %v1825, %v1824
      %v1987 = vpack.c.b16 %v1827, %v1826
      %v1988 = vpack.c.b16 %v1829, %v1828
      %v1989 = vpack.c.b16 %v1831, %v1830
      %v1990 = vpack.c.b16 %v1833, %v1832
      %v1991 = vpack.c.b16 %v1835, %v1834
      %v1992 = vpack.c.b16 %v1837, %v1836
      %v1993 = vpack.c.b16 %v1839, %v1838
      %v1994 = vpack.c.b16 %v1841, %v1840
      %v1995 = vpack.c.b16 %v1843, %v1842
      %v1996 = vpack.c.b16 %v1845, %v1844
      %v1997 = vpack.c.b16 %v1847, %v1846
      %v1998 = vpack.c.b16 %v1849, %v1848
      %v1999 = vpack.c.b16 %v1851, %v1850
      %v2000 = vpack.c.b16 %v1853, %v1852
      %v2001 = vpack.c.b16 %v1855, %v1854
      %v2002 = vpack.c.b16 %v1857, %v1856
      %v2003 = vpack.c.b16 %v1859, %v1858
      %v2004 = vpack.c.b16 %v1861, %v1860
      %v2005 = vpack.c.b16 %v1863, %v1862
      %v2006 = vpack.c.b16 %v1865, %v1864
      %v2007 = vpack.c.b16 %v1867, %v1866
      %v2008 = vpack.c.b16 %v1869, %v1868
      %v2009 = vpack.c.b16 %v1871, %v1870
      %v2010 = vpack.c.b16 %v1873, %v1872
      %v2011 = vpack.c.b16 %v1875, %v1874
      %v2012 = vpack.c.b16 %v1877, %v1876
      %v2013 = vpack.c.b16 %v1879, %v1878
      %v2014 = vpack.c.b16 %v1881, %v1880
      %v2015 = vpack.c.b16 %v1883, %v1882
      %v2016 = vpack.c.b16 %v1885, %v1884
      %v2017 = vpack.c.b16 %v1887, %v1886
      %v2018 = vpack.c.b16 %v1889, %v1888
      %v2019 = vpack.c.b16 %v1891, %v1890
      %2148 = vmatprep.subr.bf16.mxu0 0
      %2149 = vmatpush1.bf16.msra.mxu0 %v1892
      %2150 = vmatprep.subr.bf16.mxu0 0
      %2151 = vmatpush1.bf16.msra.mxu0 %v1893
      %2152 = vmatprep.subr.bf16.mxu0 0
      %2153 = vmatpush1.bf16.msra.mxu0 %v1894
      %2154 = vmatprep.subr.bf16.mxu0 0
      %2155 = vmatpush1.bf16.msra.mxu0 %v1895
      %2156 = vmatprep.subr.bf16.mxu0 0
      %2157 = vmatpush1.bf16.msra.mxu0 %v1896
      %2158 = vmatprep.subr.bf16.mxu0 0
      %2159 = vmatpush1.bf16.msra.mxu0 %v1897
      %2160 = vmatprep.subr.bf16.mxu0 0
      %2161 = vmatpush1.bf16.msra.mxu0 %v1898
      %2162 = vmatprep.subr.bf16.mxu0 0
      %2163 = vmatpush1.bf16.msra.mxu0 %v1899
      %2164 = vmatprep.subr.bf16.mxu0 0
      %2165 = vmatpush1.bf16.msra.mxu0 %v1900
      %2166 = vmatprep.subr.bf16.mxu0 0
      %2167 = vmatpush1.bf16.msra.mxu0 %v1901
      %2168 = vmatprep.subr.bf16.mxu0 0
      %2169 = vmatpush1.bf16.msra.mxu0 %v1902
      %2170 = vmatprep.subr.bf16.mxu0 0
      %2171 = vmatpush1.bf16.msra.mxu0 %v1903
      %2172 = vmatprep.subr.bf16.mxu0 0
      %2173 = vmatpush1.bf16.msra.mxu0 %v1904
      %2174 = vmatprep.subr.bf16.mxu0 0
      %2175 = vmatpush1.bf16.msra.mxu0 %v1905
      %2176 = vmatprep.subr.bf16.mxu0 0
      %2177 = vmatpush1.bf16.msra.mxu0 %v1906
      %2178 = vmatprep.subr.bf16.mxu0 0
      %2179 = vmatpush1.bf16.msra.mxu0 %v1907
      %2180 = vmatprep.mubr.bf16.mxu0 %v1086
      %2181 = vmatmul.mubr.bf16.gmra.mrb[0].mxu0 %v1085
      %v2182 = vpop.f32.mrb[0].mxu0
      %v2183 = vadd.f32 %v1378, %v2182
      %v2184 = vpop.f32.mrb[0].mxu0
      %v2185 = vpop.f32.mrb[0].mxu0
      %v2186 = vadd.f32 %v1378, %v2185
      %v2187 = vpop.f32.mrb[0].mxu0
      %2188 = vmatprep.mubr.bf16.mxu0 %v1102
      %2189 = vmatmul.mubr.bf16.gmra.mrb[0].mxu0 %v1101
      %v2190 = vpop.f32.mrb[0].mxu0
      %v2191 = vadd.f32 %v1378, %v2190
      %v2192 = vpop.f32.mrb[0].mxu0
      %v2193 = vpop.f32.mrb[0].mxu0
      %v2194 = vpop.f32.mrb[0].mxu0
      %2195 = vdwg.mxu0
      %2196 = vmatprep.subr.bf16.mxu0 0
      %2197 = vmatpush1.bf16.msra.mxu0 %v1908
      %2198 = vmatprep.subr.bf16.mxu0 0
      %2199 = vmatpush1.bf16.msra.mxu0 %v1909
      %2200 = vmatprep.subr.bf16.mxu0 0
      %2201 = vmatpush1.bf16.msra.mxu0 %v1910
      %2202 = vmatprep.subr.bf16.mxu0 0
      %2203 = vmatpush1.bf16.msra.mxu0 %v1911
      %2204 = vmatprep.subr.bf16.mxu0 0
      %2205 = vmatpush1.bf16.msra.mxu0 %v1912
      %2206 = vmatprep.subr.bf16.mxu0 0
      %2207 = vmatpush1.bf16.msra.mxu0 %v1913
      %2208 = vmatprep.subr.bf16.mxu0 0
      %2209 = vmatpush1.bf16.msra.mxu0 %v1914
      %2210 = vmatprep.subr.bf16.mxu0 0
      %2211 = vmatpush1.bf16.msra.mxu0 %v1915
      %2212 = vmatprep.subr.bf16.mxu0 0
      %2213 = vmatpush1.bf16.msra.mxu0 %v1916
      %2214 = vmatprep.subr.bf16.mxu0 0
      %2215 = vmatpush1.bf16.msra.mxu0 %v1917
      %2216 = vmatprep.subr.bf16.mxu0 0
      %2217 = vmatpush1.bf16.msra.mxu0 %v1918
      %2218 = vmatprep.subr.bf16.mxu0 0
      %2219 = vmatpush1.bf16.msra.mxu0 %v1919
      %2220 = vmatprep.subr.bf16.mxu0 0
      %2221 = vmatpush1.bf16.msra.mxu0 %v1920
      %2222 = vmatprep.subr.bf16.mxu0 0
      %2223 = vmatpush1.bf16.msra.mxu0 %v1921
      %2224 = vmatprep.subr.bf16.mxu0 0
      %2225 = vmatpush1.bf16.msra.mxu0 %v1922
      %2226 = vmatprep.subr.bf16.mxu0 0
      %2227 = vmatpush1.bf16.msra.mxu0 %v1923
      %2228 = vmatprep.mubr.bf16.mxu0 %v1088
      %2229 = vmatmul.mubr.bf16.gmra.mrb[0].mxu0 %v1087
      %v2230 = vpop.f32.mrb[0].mxu0
      %v2231 = vadd.f32 %v2183, %v2230
      %v2232 = vpop.f32.mrb[0].mxu0
      %v2233 = vpop.f32.mrb[0].mxu0
      %v2234 = vadd.f32 %v2186, %v2233
      %v2235 = vpop.f32.mrb[0].mxu0
      %2236 = vmatprep.mubr.bf16.mxu0 %v1104
      %2237 = vmatmul.mubr.bf16.gmra.mrb[0].mxu0 %v1103
      %v2238 = vpop.f32.mrb[0].mxu0
      %v2239 = vadd.f32 %v2191, %v2238
      %v2240 = vpop.f32.mrb[0].mxu0
      %v2241 = vpop.f32.mrb[0].mxu0
      %v2242 = vpop.f32.mrb[0].mxu0
      %2243 = vdwg.mxu0
      %2244 = vmatprep.subr.bf16.mxu0 0
      %2245 = vmatpush1.bf16.msra.mxu0 %v1924
      %2246 = vmatprep.subr.bf16.mxu0 0
      %2247 = vmatpush1.bf16.msra.mxu0 %v1925
      %2248 = vmatprep.subr.bf16.mxu0 0
      %2249 = vmatpush1.bf16.msra.mxu0 %v1926
      %2250 = vmatprep.subr.bf16.mxu0 0
      %2251 = vmatpush1.bf16.msra.mxu0 %v1927
      %2252 = vmatprep.subr.bf16.mxu0 0
      %2253 = vmatpush1.bf16.msra.mxu0 %v1928
      %2254 = vmatprep.subr.bf16.mxu0 0
      %2255 = vmatpush1.bf16.msra.mxu0 %v1929
      %2256 = vmatprep.subr.bf16.mxu0 0
      %2257 = vmatpush1.bf16.msra.mxu0 %v1930
      %2258 = vmatprep.subr.bf16.mxu0 0
      %2259 = vmatpush1.bf16.msra.mxu0 %v1931
      %2260 = vmatprep.subr.bf16.mxu0 0
      %2261 = vmatpush1.bf16.msra.mxu0 %v1932
      %2262 = vmatprep.subr.bf16.mxu0 0
      %2263 = vmatpush1.bf16.msra.mxu0 %v1933
      %2264 = vmatprep.subr.bf16.mxu0 0
      %2265 = vmatpush1.bf16.msra.mxu0 %v1934
      %2266 = vmatprep.subr.bf16.mxu0 0
      %2267 = vmatpush1.bf16.msra.mxu0 %v1935
      %2268 = vmatprep.subr.bf16.mxu0 0
      %2269 = vmatpush1.bf16.msra.mxu0 %v1936
      %2270 = vmatprep.subr.bf16.mxu0 0
      %2271 = vmatpush1.bf16.msra.mxu0 %v1937
      %2272 = vmatprep.subr.bf16.mxu0 0
      %2273 = vmatpush1.bf16.msra.mxu0 %v1938
      %2274 = vmatprep.subr.bf16.mxu0 0
      %2275 = vmatpush1.bf16.msra.mxu0 %v1939
      %2276 = vmatprep.mubr.bf16.mxu0 %v1090
      %2277 = vmatmul.mubr.bf16.gmra.mrb[0].mxu0 %v1089
      %v2278 = vpop.f32.mrb[0].mxu0
      %v2279 = vadd.f32 %v2231, %v2278
      %v2280 = vpop.f32.mrb[0].mxu0
      %v2281 = vpop.f32.mrb[0].mxu0
      %v2282 = vadd.f32 %v2234, %v2281
      %v2283 = vpop.f32.mrb[0].mxu0
      %2284 = vmatprep.mubr.bf16.mxu0 %v1106
      %2285 = vmatmul.mubr.bf16.gmra.mrb[0].mxu0 %v1105
      %v2286 = vpop.f32.mrb[0].mxu0
      %v2287 = vadd.f32 %v2239, %v2286
      %v2288 = vpop.f32.mrb[0].mxu0
      %v2289 = vpop.f32.mrb[0].mxu0
      %v2290 = vpop.f32.mrb[0].mxu0
      %2291 = vdwg.mxu0
      %2292 = vmatprep.subr.bf16.mxu0 0
      %2293 = vmatpush1.bf16.msra.mxu0 %v1940
      %2294 = vmatprep.subr.bf16.mxu0 0
      %2295 = vmatpush1.bf16.msra.mxu0 %v1941
      %2296 = vmatprep.subr.bf16.mxu0 0
      %2297 = vmatpush1.bf16.msra.mxu0 %v1942
      %2298 = vmatprep.subr.bf16.mxu0 0
      %2299 = vmatpush1.bf16.msra.mxu0 %v1943
      %2300 = vmatprep.subr.bf16.mxu0 0
      %2301 = vmatpush1.bf16.msra.mxu0 %v1944
      %2302 = vmatprep.subr.bf16.mxu0 0
      %2303 = vmatpush1.bf16.msra.mxu0 %v1945
      %2304 = vmatprep.subr.bf16.mxu0 0
      %2305 = vmatpush1.bf16.msra.mxu0 %v1946
      %2306 = vmatprep.subr.bf16.mxu0 0
      %2307 = vmatpush1.bf16.msra.mxu0 %v1947
      %2308 = vmatprep.subr.bf16.mxu0 0
      %2309 = vmatpush1.bf16.msra.mxu0 %v1948
      %2310 = vmatprep.subr.bf16.mxu0 0
      %2311 = vmatpush1.bf16.msra.mxu0 %v1949
      %2312 = vmatprep.subr.bf16.mxu0 0
      %2313 = vmatpush1.bf16.msra.mxu0 %v1950
      %2314 = vmatprep.subr.bf16.mxu0 0
      %2315 = vmatpush1.bf16.msra.mxu0 %v1951
      %2316 = vmatprep.subr.bf16.mxu0 0
      %2317 = vmatpush1.bf16.msra.mxu0 %v1952
      %2318 = vmatprep.subr.bf16.mxu0 0
      %2319 = vmatpush1.bf16.msra.mxu0 %v1953
      %2320 = vmatprep.subr.bf16.mxu0 0
      %2321 = vmatpush1.bf16.msra.mxu0 %v1954
      %2322 = vmatprep.subr.bf16.mxu0 0
      %2323 = vmatpush1.bf16.msra.mxu0 %v1955
      %2324 = vmatprep.mubr.bf16.mxu0 %v1092
      %2325 = vmatmul.mubr.bf16.gmra.mrb[0].mxu0 %v1091
      %v2326 = vpop.f32.mrb[0].mxu0
      %v2327 = vadd.f32 %v2279, %v2326
      %v2328 = vpop.f32.mrb[0].mxu0
      %v2329 = vpop.f32.mrb[0].mxu0
      %v2330 = vadd.f32 %v2282, %v2329
      %v2331 = vpop.f32.mrb[0].mxu0
      %2332 = vmatprep.mubr.bf16.mxu0 %v1108
      %2333 = vmatmul.mubr.bf16.gmra.mrb[0].mxu0 %v1107
      %v2334 = vpop.f32.mrb[0].mxu0
      %v2335 = vadd.f32 %v2287, %v2334
      %v2336 = vpop.f32.mrb[0].mxu0
      %v2337 = vpop.f32.mrb[0].mxu0
      %v2338 = vpop.f32.mrb[0].mxu0
      %2339 = vdwg.mxu0
      %2340 = vmatprep.subr.bf16.mxu0 0
      %2341 = vmatpush1.bf16.msra.mxu0 %v1956
      %2342 = vmatprep.subr.bf16.mxu0 0
      %2343 = vmatpush1.bf16.msra.mxu0 %v1957
      %2344 = vmatprep.subr.bf16.mxu0 0
      %2345 = vmatpush1.bf16.msra.mxu0 %v1958
      %2346 = vmatprep.subr.bf16.mxu0 0
      %2347 = vmatpush1.bf16.msra.mxu0 %v1959
      %2348 = vmatprep.subr.bf16.mxu0 0
      %2349 = vmatpush1.bf16.msra.mxu0 %v1960
      %2350 = vmatprep.subr.bf16.mxu0 0
      %2351 = vmatpush1.bf16.msra.mxu0 %v1961
      %2352 = vmatprep.subr.bf16.mxu0 0
      %2353 = vmatpush1.bf16.msra.mxu0 %v1962
      %2354 = vmatprep.subr.bf16.mxu0 0
      %2355 = vmatpush1.bf16.msra.mxu0 %v1963
      %2356 = vmatprep.subr.bf16.mxu0 0
      %2357 = vmatpush1.bf16.msra.mxu0 %v1964
      %2358 = vmatprep.subr.bf16.mxu0 0
      %2359 = vmatpush1.bf16.msra.mxu0 %v1965
      %2360 = vmatprep.subr.bf16.mxu0 0
      %2361 = vmatpush1.bf16.msra.mxu0 %v1966
      %2362 = vmatprep.subr.bf16.mxu0 0
      %2363 = vmatpush1.bf16.msra.mxu0 %v1967
      %2364 = vmatprep.subr.bf16.mxu0 0
      %2365 = vmatpush1.bf16.msra.mxu0 %v1968
      %2366 = vmatprep.subr.bf16.mxu0 0
      %2367 = vmatpush1.bf16.msra.mxu0 %v1969
      %2368 = vmatprep.subr.bf16.mxu0 0
      %2369 = vmatpush1.bf16.msra.mxu0 %v1970
      %2370 = vmatprep.subr.bf16.mxu0 0
      %2371 = vmatpush1.bf16.msra.mxu0 %v1971
      %2372 = vmatprep.mubr.bf16.mxu0 %v1094
      %2373 = vmatmul.mubr.bf16.gmra.mrb[0].mxu0 %v1093
      %v2374 = vpop.f32.mrb[0].mxu0
      %v2375 = vadd.f32 %v2327, %v2374
      %v2376 = vpop.f32.mrb[0].mxu0
      %v2377 = vpop.f32.mrb[0].mxu0
      %v2378 = vadd.f32 %v2330, %v2377
      %v2379 = vpop.f32.mrb[0].mxu0
      %2380 = vmatprep.mubr.bf16.mxu0 %v1110
      %2381 = vmatmul.mubr.bf16.gmra.mrb[0].mxu0 %v1109
      %v2382 = vpop.f32.mrb[0].mxu0
      %v2383 = vadd.f32 %v2335, %v2382
      %v2384 = vpop.f32.mrb[0].mxu0
      %v2385 = vpop.f32.mrb[0].mxu0
      %v2386 = vpop.f32.mrb[0].mxu0
      %2387 = vdwg.mxu0
      %2388 = vmatprep.subr.bf16.mxu0 0
      %2389 = vmatpush1.bf16.msra.mxu0 %v1972
      %2390 = vmatprep.subr.bf16.mxu0 0
      %2391 = vmatpush1.bf16.msra.mxu0 %v1973
      %2392 = vmatprep.subr.bf16.mxu0 0
      %2393 = vmatpush1.bf16.msra.mxu0 %v1974
      %2394 = vmatprep.subr.bf16.mxu0 0
      %2395 = vmatpush1.bf16.msra.mxu0 %v1975
      %2396 = vmatprep.subr.bf16.mxu0 0
      %2397 = vmatpush1.bf16.msra.mxu0 %v1976
      %2398 = vmatprep.subr.bf16.mxu0 0
      %2399 = vmatpush1.bf16.msra.mxu0 %v1977
      %2400 = vmatprep.subr.bf16.mxu0 0
      %2401 = vmatpush1.bf16.msra.mxu0 %v1978
      %2402 = vmatprep.subr.bf16.mxu0 0
      %2403 = vmatpush1.bf16.msra.mxu0 %v1979
      %2404 = vmatprep.subr.bf16.mxu0 0
      %2405 = vmatpush1.bf16.msra.mxu0 %v1980
      %2406 = vmatprep.subr.bf16.mxu0 0
      %2407 = vmatpush1.bf16.msra.mxu0 %v1981
      %2408 = vmatprep.subr.bf16.mxu0 0
      %2409 = vmatpush1.bf16.msra.mxu0 %v1982
      %2410 = vmatprep.subr.bf16.mxu0 0
      %2411 = vmatpush1.bf16.msra.mxu0 %v1983
      %2412 = vmatprep.subr.bf16.mxu0 0
      %2413 = vmatpush1.bf16.msra.mxu0 %v1984
      %2414 = vmatprep.subr.bf16.mxu0 0
      %2415 = vmatpush1.bf16.msra.mxu0 %v1985
      %2416 = vmatprep.subr.bf16.mxu0 0
      %2417 = vmatpush1.bf16.msra.mxu0 %v1986
      %2418 = vmatprep.subr.bf16.mxu0 0
      %2419 = vmatpush1.bf16.msra.mxu0 %v1987
      %2420 = vmatprep.mubr.bf16.mxu0 %v1096
      %2421 = vmatmul.mubr.bf16.gmra.mrb[0].mxu0 %v1095
      %v2422 = vpop.f32.mrb[0].mxu0
      %v2423 = vadd.f32 %v2375, %v2422
      %v2424 = vpop.f32.mrb[0].mxu0
      %v2425 = vpop.f32.mrb[0].mxu0
      %v2426 = vadd.f32 %v2378, %v2425
      %v2427 = vpop.f32.mrb[0].mxu0
      %2428 = vmatprep.mubr.bf16.mxu0 %v1112
      %2429 = vmatmul.mubr.bf16.gmra.mrb[0].mxu0 %v1111
      %v2430 = vpop.f32.mrb[0].mxu0
      %v2431 = vadd.f32 %v2383, %v2430
      %v2432 = vpop.f32.mrb[0].mxu0
      %v2433 = vpop.f32.mrb[0].mxu0
      %v2434 = vpop.f32.mrb[0].mxu0
      %2435 = vdwg.mxu0
      %2436 = vmatprep.subr.bf16.mxu0 0
      %2437 = vmatpush1.bf16.msra.mxu0 %v1988
      %2438 = vmatprep.subr.bf16.mxu0 0
      %2439 = vmatpush1.bf16.msra.mxu0 %v1989
      %2440 = vmatprep.subr.bf16.mxu0 0
      %2441 = vmatpush1.bf16.msra.mxu0 %v1990
      %2442 = vmatprep.subr.bf16.mxu0 0
      %2443 = vmatpush1.bf16.msra.mxu0 %v1991
      %2444 = vmatprep.subr.bf16.mxu0 0
      %2445 = vmatpush1.bf16.msra.mxu0 %v1992
      %2446 = vmatprep.subr.bf16.mxu0 0
      %2447 = vmatpush1.bf16.msra.mxu0 %v1993
      %2448 = vmatprep.subr.bf16.mxu0 0
      %2449 = vmatpush1.bf16.msra.mxu0 %v1994
      %2450 = vmatprep.subr.bf16.mxu0 0
      %2451 = vmatpush1.bf16.msra.mxu0 %v1995
      %2452 = vmatprep.subr.bf16.mxu0 0
      %2453 = vmatpush1.bf16.msra.mxu0 %v1996
      %2454 = vmatprep.subr.bf16.mxu0 0
      %2455 = vmatpush1.bf16.msra.mxu0 %v1997
      %2456 = vmatprep.subr.bf16.mxu0 0
      %2457 = vmatpush1.bf16.msra.mxu0 %v1998
      %2458 = vmatprep.subr.bf16.mxu0 0
      %2459 = vmatpush1.bf16.msra.mxu0 %v1999
      %2460 = vmatprep.subr.bf16.mxu0 0
      %2461 = vmatpush1.bf16.msra.mxu0 %v2000
      %2462 = vmatprep.subr.bf16.mxu0 0
      %2463 = vmatpush1.bf16.msra.mxu0 %v2001
      %2464 = vmatprep.subr.bf16.mxu0 0
      %2465 = vmatpush1.bf16.msra.mxu0 %v2002
      %2466 = vmatprep.subr.bf16.mxu0 0
      %2467 = vmatpush1.bf16.msra.mxu0 %v2003
      %2468 = vmatprep.mubr.bf16.mxu0 %v1098
      %2469 = vmatmul.mubr.bf16.gmra.mrb[0].mxu0 %v1097
      %v2470 = vpop.f32.mrb[0].mxu0
      %v2471 = vadd.f32 %v2423, %v2470
      %v2472 = vpop.f32.mrb[0].mxu0
      %v2473 = vpop.f32.mrb[0].mxu0
      %v2474 = vadd.f32 %v2426, %v2473
      %v2475 = vpop.f32.mrb[0].mxu0
      %2476 = vmatprep.mubr.bf16.mxu0 %v1114
      %2477 = vmatmul.mubr.bf16.gmra.mrb[0].mxu0 %v1113
      %v2478 = vpop.f32.mrb[0].mxu0
      %v2479 = vadd.f32 %v2431, %v2478
      %v2480 = vpop.f32.mrb[0].mxu0
      %v2481 = vpop.f32.mrb[0].mxu0
      %v2482 = vpop.f32.mrb[0].mxu0
      %2483 = vdwg.mxu0
      %2484 = vmatprep.subr.bf16.mxu0 0
      %2485 = vmatpush1.bf16.msra.mxu0 %v2004
      %2486 = vmatprep.subr.bf16.mxu0 0
      %2487 = vmatpush1.bf16.msra.mxu0 %v2005
      %2488 = vmatprep.subr.bf16.mxu0 0
      %2489 = vmatpush1.bf16.msra.mxu0 %v2006
      %2490 = vmatprep.subr.bf16.mxu0 0
      %2491 = vmatpush1.bf16.msra.mxu0 %v2007
      %2492 = vmatprep.subr.bf16.mxu0 0
      %2493 = vmatpush1.bf16.msra.mxu0 %v2008
      %2494 = vmatprep.subr.bf16.mxu0 0
      %2495 = vmatpush1.bf16.msra.mxu0 %v2009
      %2496 = vmatprep.subr.bf16.mxu0 0
      %2497 = vmatpush1.bf16.msra.mxu0 %v2010
      %2498 = vmatprep.subr.bf16.mxu0 0
      %2499 = vmatpush1.bf16.msra.mxu0 %v2011
      %2500 = vmatprep.subr.bf16.mxu0 0
      %2501 = vmatpush1.bf16.msra.mxu0 %v2012
      %2502 = vmatprep.subr.bf16.mxu0 0
      %2503 = vmatpush1.bf16.msra.mxu0 %v2013
      %2504 = vmatprep.subr.bf16.mxu0 0
      %2505 = vmatpush1.bf16.msra.mxu0 %v2014
      %2506 = vmatprep.subr.bf16.mxu0 0
      %2507 = vmatpush1.bf16.msra.mxu0 %v2015
      %2508 = vmatprep.subr.bf16.mxu0 0
      %2509 = vmatpush1.bf16.msra.mxu0 %v2016
      %2510 = vmatprep.subr.bf16.mxu0 0
      %2511 = vmatpush1.bf16.msra.mxu0 %v2017
      %2512 = vmatprep.subr.bf16.mxu0 0
      %2513 = vmatpush1.bf16.msra.mxu0 %v2018
      %2514 = vmatprep.subr.bf16.mxu0 0
      %2515 = vmatpush1.bf16.msra.mxu0 %v2019
      %2516 = vmatprep.mubr.bf16.mxu0 %v1100
      %2517 = vmatmul.mubr.bf16.gmra.mrb[0].mxu0 %v1099
      %v2518 = vpop.f32.mrb[0].mxu0
      %v2519 = vadd.f32 %v2471, %v2518
      %v2520 = vpop.f32.mrb[0].mxu0
      %v2521 = vpop.f32.mrb[0].mxu0
      %v2522 = vadd.f32 %v2474, %v2521
      %v2523 = vpop.f32.mrb[0].mxu0
      %2524 = vmatprep.mubr.bf16.mxu0 %v1116
      %2525 = vmatmul.mubr.bf16.gmra.mrb[0].mxu0 %v1115
      %v2526 = vpop.f32.mrb[0].mxu0
      %v2527 = vadd.f32 %v2479, %v2526
      %v2528 = vpop.f32.mrb[0].mxu0
      %v2529 = vpop.f32.mrb[0].mxu0
      %v2530 = vpop.f32.mrb[0].mxu0
      %2531 = vdwg.mxu0
      %v2532 = vadd.f32 %v280, %v2519
      %v2533 = vadd.f32 %v281, %v2522
      %v2534 = vadd.f32 %v282, %v2527
      %2535 = vst.msk [vmem:[%s278] sm:$0xff] %vm285, %v2532
      %2536 = vst.msk [vmem:[%s278 + $0x8] sm:$0xff] %vm285, %v2533
      %2537 = vst.msk [vmem:[%s278 + $0x10] sm:$0x1] %vm292, %v2534
      %p2538 = scmp.lt.s32.totalorder %s18, 1
      %s2539 = scalar_select %p2538, %s18, 1
      %s2540 = smul.addr %s2539, 3
      %s2541 = smul.addr %s2540, 8
      %s2542 = scalar_lea.vmem %s7, %s2541
      // Predicated region
      $region49: #{face_encoder_forward.7} parent=47 // pred_check
        %p2543 = pneg %p188
      $region50: #{face_encoder_forward.7} parent=47 // pred_check_branch
        %2545 = sbr.rel (%p2543) target = $region52
      $region51: #{face_encoder_forward.7} parent=47 // pred_region
        _
      $region52: #{face_encoder_forward.7} parent=47 // pred_fallthru
        _
    $region48: #{face_encoder_forward.7} parent=5 // pred_fallthru
      _
    %p2546 = scmp.le.s32.totalorder 2, %s13
    // Predicated region
    $region53: #{face_encoder_forward.7} parent=5 // pred_check
      %p2547 = pneg %p2546
    $region54: #{face_encoder_forward.7} parent=5 // pred_check_branch
      %2549 = sbr.rel (%p2547) target = $region56
    $region55: #{face_encoder_forward.7} parent=5 // pred_region
      %s2550 = ssub.s32 %s13, 2
      // Predicated region
      $region57: #{face_encoder_forward.7} parent=55 // pred_check
        %p2551 = pneg %p194
      $region58: #{face_encoder_forward.7} parent=55 // pred_check_branch
        %2553 = sbr.rel (%p2551) target = $region60
      $region59: #{face_encoder_forward.7} parent=55 // pred_region
        %p2554 = scmp.lt.s32.totalorder %s19, 1
        %s2555 = scalar_select %p2554, %s19, 1
        %s2556 = smul.addr %s2555, 3
        %s2557 = smul.addr %s2556, 8
        %s2558 = scalar_lea.vmem %s7, %s2557
      $region60: #{face_encoder_forward.7} parent=55 // pred_fallthru
        _
    $region56: #{face_encoder_forward.7} parent=5 // pred_fallthru
      _
  $region6: #{face_encoder_forward.7} parent=0 // loop_footer
    %s17 = sadd.s32 1, %s13
  $region7: #{face_encoder_forward.7} parent=0 // loop_footer_branch
    %12 = sbr.rel target = $region3
  $region8: #{face_encoder_forward.7} parent=0 // loop_exit
    _

</llo_original>
